<compile_context>
chip_gen: v5e
topology: v5e:2x2
jax: 0.10.0
libtpu: 0.0.40
codegen_flags: <defaults>
</compile_context>

<pallas_src>
import math
import numpy as np

import jax
import jax.numpy as jnp
from jax import lax
from jax.experimental import pallas as pl
from jax.experimental.pallas import tpu as pltpu

# ---------------- config (small, consistent with the module) ----------------
D_MODEL = 16
EXPAND = 1
D_INNER = D_MODEL * EXPAND
D_STATE = 8
D_CONV = 3
DT_RANK = math.ceil(D_MODEL / 16)     # 'auto'
K_DIR = 8                             # num_direction (forward_core hardcodes 4 scans + flips)
SIZE = 4                              # H = W = D = SIZE  (scan requires a cube)
BATCH = 2


# ---------------- HSCANS ('scan' order, dim=3) ----------------
def build_scan_indices(size):
    max_num = size ** 3
    indexes = np.arange(max_num).reshape(size, size, size)
    for i in np.arange(1, size, step=2):
        indexes[:, i, :] = np.flip(indexes[:, i, :], axis=1)
    for j in np.arange(1, size, step=2):
        indexes[j, :, :] = np.flip(indexes[j, :, :], axis=(0, 1))
    locs_flat = indexes.reshape(-1).astype(np.int32)
    locs_flat_inv = np.argsort(locs_flat).astype(np.int32)
    # encode(img)[..., j] = img[..., locs_flat[j]] ; decode is the inverse gather.
    return locs_flat, locs_flat_inv


# ---------------- Pallas selective-scan kernel ----------------
def _scan_kernel(u_ref, dt_ref, A_ref, D_ref, db_ref, Bsb_ref, Csb_ref, y_ref,
                 dA_ref, xbar_ref, h_ref):
    # u_ref, dt_ref, y_ref : (L, M)  with M = B*K*C folded onto lanes
    # A_ref                : (N, M)
    # D_ref, db_ref        : (1, M)
    # Bsb_ref, Csb_ref     : (L, N, M)  (B/C pre-broadcast over channels)
    # dA_ref, xbar_ref, h_ref : (L, N, M) VMEM scratch
    L, M = u_ref.shape
    N = A_ref.shape[0]

    u = u_ref[...]                                               # (L, M)
    z = dt_ref[...] + db_ref[...]                                # (L, M)
    zc = jnp.minimum(z, 20.0)
    dl = jnp.where(z > 20.0, z, jnp.log(1.0 + jnp.exp(zc)))      # softplus (delta_softplus)
    dlu = dl * u                                                 # (L, M)

    # --- hoisted, embarrassingly-parallel precompute (off the serial critical path) ---
    dA_ref[...] = jnp.exp(dl[:, None, :] * A_ref[...][None, :, :])   # (L, N, M)
    xbar_ref[...] = dlu[:, None, :] * Bsb_ref[...]                   # (L, N, M)

    # --- serial first-order recurrence: h <- dA[l] * h + xbar[l] ---
    U = 8 if (L % 8 == 0) else (4 if (L % 4 == 0) else 1)        # manual partial unroll

    def chunk(i, h):
        base = i * U
        for j in range(U):                                       # static inner unroll
            l = base + j
            h = dA_ref[l] * h + xbar_ref[l]                      # (N, M) fused update
            h_ref[l] = h                                         # full-width store of trajectory
        return h

    lax.fori_loop(0, L // U, chunk, jnp.zeros((N, M), jnp.float32))

    # --- vectorized output projection after the loop: y = sum_n C_n*h_n + D*u ---
    y = jnp.sum(Csb_ref[...] * h_ref[...], axis=1) + D_ref[...] * u
    y_ref[...] = y                                               # single lane-dense (L, M) store


def selective_scan_pallas(xs, dts, As, Bs, Cs, Ds, delta_bias):
    """xs, dts: (B, K, C, L); As: (K*C, N); Bs, Cs: (B, K, N, L); Ds, delta_bias: (K*C,).
    Returns (B, K, C, L) float32 (mamba selective_scan_fn with delta_softplus=True)."""
    Bq, K, C, L = xs.shape
    N = As.shape[-1]
    M = Bq * K * C                                   # folded lane dimension (256 here)

    # (B, K, C, L) -> (L, M) with column index = b*K*C + k*C + c
    u = jnp.transpose(xs, (3, 0, 1, 2)).reshape(L, M).astype(jnp.float32)
    dt = jnp.transpose(dts, (3, 0, 1, 2)).reshape(L, M).astype(jnp.float32)

    A2 = jnp.transpose(As.reshape(K, C, N).astype(jnp.float32), (2, 0, 1)).reshape(N, K * C)
    A_full = jnp.tile(A2, (1, Bq))                                       # (N, M)
    D_full = jnp.tile(Ds.astype(jnp.float32).reshape(1, K * C), (1, Bq))          # (1, M)
    db_full = jnp.tile(delta_bias.astype(jnp.float32).reshape(1, K * C), (1, Bq))  # (1, M)

    # (B, K, N, L) -> (L, N, M), broadcast over the channel part of the lane dim
    Bsb = jnp.broadcast_to(
        jnp.transpose(Bs.astype(jnp.float32), (3, 2, 0, 1))[..., None],
        (L, N, Bq, K, C)).reshape(L, N, M)
    Csb = jnp.broadcast_to(
        jnp.transpose(Cs.astype(jnp.float32), (3, 2, 0, 1))[..., None],
        (L, N, Bq, K, C)).reshape(L, N, M)

    vspec = pl.BlockSpec(memory_space=pltpu.MemorySpace.VMEM)
    y = pl.pallas_call(
        _scan_kernel,
        out_shape=jax.ShapeDtypeStruct((L, M), jnp.float32),
        in_specs=[vspec] * 7,
        out_specs=vspec,
        scratch_shapes=[
            pltpu.VMEM((L, N, M), jnp.float32),   # dA
            pltpu.VMEM((L, N, M), jnp.float32),   # xbar
            pltpu.VMEM((L, N, M), jnp.float32),   # h trajectory
        ],
    )(u, dt, A_full, D_full, db_full, Bsb, Csb)

    # (L, M) -> (B, K, C, L)
    return jnp.transpose(y.reshape(L, Bq, K, C), (1, 2, 3, 0))


# ---------------- pure-JAX reference for the scan (correctness check) ----------------
def selective_scan_ref(xs, dts, As, Bs, Cs, Ds, delta_bias):
    Bq, K, C, L = xs.shape
    N = As.shape[-1]
    u = xs.astype(jnp.float32)
    z = dts.astype(jnp.float32) + delta_bias.reshape(1, K, C, 1)
    zc = jnp.minimum(z, 20.0)
    delta = jnp.where(z > 20.0, z, jnp.log(1.0 + jnp.exp(zc)))
    A = As.reshape(K, C, N).astype(jnp.float32)
    Bf = Bs.astype(jnp.float32)
    Cf = Cs.astype(jnp.float32)

    def step(h, inp):
        d_l, u_l, b_l, c_l = inp          # (B,K,C),(B,K,C),(B,K,N),(B,K,N)
        dA = jnp.exp(d_l[..., None] * A[None])
        h = dA * h + (d_l * u_l)[..., None] * b_l[:, :, None, :]
        y = jnp.sum(h * c_l[:, :, None, :], axis=-1) + Ds.reshape(1, K, C) * u_l
        return h, y

    h0 = jnp.zeros((Bq, K, C, N), jnp.float32)
    inputs = (jnp.moveaxis(delta, -1, 0), jnp.moveaxis(u, -1, 0),
              jnp.moveaxis(Bf, -1, 0), jnp.moveaxis(Cf, -1, 0))
    _, ys = lax.scan(step, h0, inputs)    # (L, B, K, C)
    return jnp.moveaxis(ys, 0, -1)        # (B, K, C, L)


# ---------------- SS3D_v5 forward (orientation=0) ----------------
def forward_core(x, p):
    B, C, H, W, Dd = x.shape
    L = H * W * Dd
    K = K_DIR
    locs_flat = p['locs_flat']
    locs_inv = p['locs_flat_inv']

    def enc(v):
        return v.reshape(B, C, L)[..., locs_flat]

    x2 = jnp.rot90(jnp.rot90(x, k=1, axes=(3, 4)), k=1, axes=(2, 4))
    x3 = jnp.rot90(x, k=2, axes=(2, 4))
    x4 = jnp.rot90(jnp.rot90(x, k=-1, axes=(2, 4)), k=1, axes=(2, 3))
    xs4 = jnp.stack([enc(x), enc(x2), enc(x3), enc(x4)], axis=1)        # (B, 4, C, L)
    xs = jnp.concatenate([xs4, jnp.flip(xs4, axis=-1)], axis=1)         # (B, 8, C, L)

    x_dbl = jnp.einsum('bkdl,kcd->bkcl', xs, p['x_proj_weight'])
    dts = x_dbl[:, :, :DT_RANK]
    Bsv = x_dbl[:, :, DT_RANK:DT_RANK + D_STATE]
    Csv = x_dbl[:, :, DT_RANK + D_STATE:]
    dts = jnp.einsum('bkrl,kdr->bkdl', dts, p['dt_projs_weight'])

    As = -jnp.exp(p['A_logs'].astype(jnp.float32))                      # (K*C, N)
    out_y = selective_scan_pallas(xs, dts, As, Bsv, Csv,
                                  p['Ds'], p['dt_projs_bias'].reshape(-1))   # (B, K, C, L)

    inv_y = jnp.flip(out_y[:, K // 2:], axis=-1)                        # (B, 4, C, L)

    def dec(v):
        return v[..., locs_inv].reshape(B, C, H, W, Dd)

    def undo23(v):
        return jnp.rot90(jnp.rot90(v, k=-1, axes=(2, 4)), k=-1, axes=(3, 4))

    def undo45(v):
        return jnp.rot90(v, k=2, axes=(2, 4))

    def undo67(v):
        return jnp.rot90(jnp.rot90(v, k=-1, axes=(2, 3)), k=1, axes=(2, 4))

    ys = [
        dec(out_y[:, 0]), dec(inv_y[:, 0]),
        undo23(dec(out_y[:, 1])), undo23(dec(inv_y[:, 1])),
        undo45(dec(out_y[:, 2])), undo45(dec(inv_y[:, 2])),
        undo67(dec(out_y[:, 3])), undo67(dec(inv_y[:, 3])),
    ]
    return sum(v.reshape(B, C, L) for v in ys)


def forward(x, p):
    B, H, W, Dd, C = x.shape
    # in_proj (no bias) — tiny matmul, left to XLA so it fuses with neighbours
    xi = jnp.einsum('bhwdc,ic->bhwdi', x, p['in_proj_w'])
    xi = jnp.transpose(xi, (0, 4, 1, 2, 3))                             # (B, C, H, W, D)
    # depthwise conv3d + bias + SiLU  (plain JAX glue)
    xc = lax.conv_general_dilated(
        xi, p['conv_w'], window_strides=(1, 1, 1), padding='SAME',
        dimension_numbers=('NCDHW', 'OIDHW', 'NCDHW'),
        feature_group_count=D_INNER)
    xc = xc + p['conv_b'][None, :, None, None, None]
    xc = xc * jax.nn.sigmoid(xc)
    # core (selective scan hot path in Pallas)
    y = forward_core(xc, p)                                             # (B, C, L)
    y = jnp.transpose(y, (0, 2, 1)).reshape(B, H, W, Dd, D_INNER)
    # LayerNorm (default weight=1, bias=0)
    mean = jnp.mean(y, axis=-1, keepdims=True)
    var = jnp.mean((y - mean) ** 2, axis=-1, keepdims=True)
    y = (y - mean) / jnp.sqrt(var + 1e-5) * p['ln_w'] + p['ln_b']
    # out_proj (no bias)
    out = jnp.einsum('bhwdi,oi->bhwdo', y, p['out_proj_w'])
    return out


# ---------------- deterministic parameter init ----------------
def init_params(key):
    ks = jax.random.split(key, 8)
    locs_flat, locs_flat_inv = build_scan_indices(SIZE)
    dt_std = DT_RANK ** -0.5
    dt = jnp.exp(jax.random.uniform(ks[5], (K_DIR, D_INNER))
                 * (math.log(0.1) - math.log(0.001)) + math.log(0.001))
    dt = jnp.maximum(dt, 1e-4)
    dt_projs_bias = dt + jnp.log(-jnp.expm1(-dt))
    params = {
        'in_proj_w': jax.random.normal(ks[0], (D_INNER, D_MODEL)) * (D_MODEL ** -0.5),
        'conv_w': jax.random.normal(ks[1], (D_INNER, 1, D_CONV, D_CONV, D_CONV)) * 0.1,
        'conv_b': jax.random.normal(ks[2], (D_INNER,)) * 0.01,
        'x_proj_weight': jax.random.normal(
            ks[3], (K_DIR, DT_RANK + 2 * D_STATE, D_INNER)) * (D_INNER ** -0.5),
        'dt_projs_weight': jax.random.uniform(
            ks[4], (K_DIR, D_INNER, DT_RANK), minval=-dt_std, maxval=dt_std),
        'dt_projs_bias': dt_projs_bias,                                  # (K, C)
        'A_logs': jnp.log(jnp.tile(jnp.arange(1, D_STATE + 1, dtype=jnp.float32)[None, :],
                                   (K_DIR * D_INNER, 1))),               # (K*C, N)
        'Ds': jnp.ones((K_DIR * D_INNER,), jnp.float32),
        'out_proj_w': jax.random.normal(ks[6], (D_MODEL, D_INNER)) * (D_INNER ** -0.5),
        'ln_w': jnp.ones((D_INNER,), jnp.float32),
        'ln_b': jnp.zeros((D_INNER,), jnp.float32),
        'locs_flat': jnp.asarray(locs_flat),
        'locs_flat_inv': jnp.asarray(locs_flat_inv),
    }
    return jax.tree_util.tree_map(lambda a: a.astype(jnp.float32)
                                  if a.dtype == jnp.float64 else a, params)


# ---------------- main ----------------
if __name__ == "__main__":
    key = jax.random.PRNGKey(0)
    kp, kx, k1, k2, k3, k4 = jax.random.split(key, 6)
    params = init_params(kp)

    # 1) standalone correctness check of the Pallas selective-scan against a lax.scan reference
    L = SIZE ** 3
    xs_t = jax.random.normal(k1, (BATCH, K_DIR, D_INNER, L), jnp.float32)
    dts_t = jax.random.normal(k2, (BATCH, K_DIR, D_INNER, L), jnp.float32) * 0.1
    Bs_t = jax.random.normal(k3, (BATCH, K_DIR, D_STATE, L), jnp.float32)
    Cs_t = jax.random.normal(k4, (BATCH, K_DIR, D_STATE, L), jnp.float32)
    As_t = -jnp.exp(params['A_logs'])
    y_pl = jax.jit(selective_scan_pallas)(xs_t, dts_t, As_t, Bs_t, Cs_t,
                                          params['Ds'], params['dt_projs_bias'].reshape(-1))
    y_rf = jax.jit(selective_scan_ref)(xs_t, dts_t, As_t, Bs_t, Cs_t,
                                       params['Ds'], params['dt_projs_bias'].reshape(-1))
    err = float(jnp.max(jnp.abs(y_pl - y_rf)))
    assert err < 2e-3, f"selective scan mismatch: {err}"

    # 2) full SS3D_v5 forward
    x = jax.random.normal(kx, (BATCH, SIZE, SIZE, SIZE, D_MODEL), jnp.float32)
    out = jax.jit(forward)(x, params)
    jax.block_until_ready(out)
    assert out.shape == (BATCH, SIZE, SIZE, SIZE, D_MODEL)
    assert out.dtype == jnp.float32
    print("KERNEL_OK")
</pallas_src>

<mosaic_0001>
module attributes {stable_mosaic.version = 11 : i64} {
  func.func @_scan_kernel(%arg0: memref<64x256xf32, #tpu.memory_space<vmem>>, %arg1: memref<64x256xf32, #tpu.memory_space<vmem>>, %arg2: memref<8x256xf32, #tpu.memory_space<vmem>>, %arg3: memref<1x256xf32, #tpu.memory_space<vmem>>, %arg4: memref<1x256xf32, #tpu.memory_space<vmem>>, %arg5: memref<64x8x256xf32, #tpu.memory_space<vmem>>, %arg6: memref<64x8x256xf32, #tpu.memory_space<vmem>>, %arg7: memref<64x256xf32, #tpu.memory_space<vmem>>, %arg8: memref<64x8x256xf32, #tpu.memory_space<vmem>>, %arg9: memref<64x8x256xf32, #tpu.memory_space<vmem>>, %arg10: memref<64x8x256xf32, #tpu.memory_space<vmem>>) attributes {dimension_semantics = [], scalar_prefetch = 0 : i64, scratch_operands = 3 : i64, tpu.core_type = #tpu.core_type<tc>} {
    %c0 = arith.constant 0 : index
    %c0_0 = arith.constant 0 : index
    %0 = vector.load %arg0[%c0, %c0_0] : memref<64x256xf32, #tpu.memory_space<vmem>>, vector<64x256xf32>
    %c0_1 = arith.constant 0 : index
    %c0_2 = arith.constant 0 : index
    %1 = vector.load %arg1[%c0_1, %c0_2] : memref<64x256xf32, #tpu.memory_space<vmem>>, vector<64x256xf32>
    %c0_3 = arith.constant 0 : index
    %c0_4 = arith.constant 0 : index
    %2 = vector.load %arg4[%c0_3, %c0_4] : memref<1x256xf32, #tpu.memory_space<vmem>>, vector<1x256xf32>
    %3 = vector.broadcast %2 : vector<1x256xf32> to vector<64x256xf32>
    %4 = arith.addf %1, %3 : vector<64x256xf32>
    %cst = arith.constant 2.000000e+01 : f32
    %5 = vector.broadcast %cst : f32 to vector<64x256xf32>
    %6 = arith.minimumf %4, %5 : vector<64x256xf32>
    %cst_5 = arith.constant 2.000000e+01 : f32
    %7 = vector.broadcast %cst_5 : f32 to vector<64x256xf32>
    %8 = arith.cmpf ogt, %4, %7 : vector<64x256xf32>
    %9 = math.exp %6 : vector<64x256xf32>
    %cst_6 = arith.constant 1.000000e+00 : f32
    %10 = vector.broadcast %cst_6 : f32 to vector<64x256xf32>
    %11 = arith.addf %10, %9 : vector<64x256xf32>
    %12 = math.log %11 : vector<64x256xf32>
    %13 = arith.select %8, %4, %12 : vector<64x256xi1>, vector<64x256xf32>
    %14 = arith.mulf %13, %0 : vector<64x256xf32>
    %15 = vector.shape_cast %13 : vector<64x256xf32> to vector<64x1x256xf32>
    %c0_7 = arith.constant 0 : index
    %c0_8 = arith.constant 0 : index
    %16 = vector.load %arg2[%c0_7, %c0_8] : memref<8x256xf32, #tpu.memory_space<vmem>>, vector<8x256xf32>
    %17 = vector.shape_cast %16 : vector<8x256xf32> to vector<1x8x256xf32>
    %18 = vector.broadcast %15 : vector<64x1x256xf32> to vector<64x8x256xf32>
    %19 = vector.broadcast %17 : vector<1x8x256xf32> to vector<64x8x256xf32>
    %20 = arith.mulf %18, %19 : vector<64x8x256xf32>
    %21 = math.exp %20 : vector<64x8x256xf32>
    %c0_9 = arith.constant 0 : index
    %c0_10 = arith.constant 0 : index
    %c0_11 = arith.constant 0 : index
    %22 = vector.load %arg8[%c0_9, %c0_10, %c0_11] : memref<64x8x256xf32, #tpu.memory_space<vmem>>, vector<64x8x256xf32>
    tpu.vector_store %arg8[%c0_9, %c0_10, %c0_11], %21 {strides = array<i32>} : memref<64x8x256xf32, #tpu.memory_space<vmem>>, vector<64x8x256xf32>,
    %23 = vector.shape_cast %14 : vector<64x256xf32> to vector<64x1x256xf32>
    %c0_12 = arith.constant 0 : index
    %c0_13 = arith.constant 0 : index
    %c0_14 = arith.constant 0 : index
    %24 = vector.load %arg5[%c0_12, %c0_13, %c0_14] : memref<64x8x256xf32, #tpu.memory_space<vmem>>, vector<64x8x256xf32>
    %25 = vector.broadcast %23 : vector<64x1x256xf32> to vector<64x8x256xf32>
    %26 = arith.mulf %25, %24 : vector<64x8x256xf32>
    %c0_15 = arith.constant 0 : index
    %c0_16 = arith.constant 0 : index
    %c0_17 = arith.constant 0 : index
    %27 = vector.load %arg9[%c0_15, %c0_16, %c0_17] : memref<64x8x256xf32, #tpu.memory_space<vmem>>, vector<64x8x256xf32>
    tpu.vector_store %arg9[%c0_15, %c0_16, %c0_17], %26 {strides = array<i32>} : memref<64x8x256xf32, #tpu.memory_space<vmem>>, vector<64x8x256xf32>,
    %cst_18 = arith.constant 0.000000e+00 : f32
    %28 = vector.broadcast %cst_18 : f32 to vector<8x256xf32>
    %c0_i32 = arith.constant 0 : i32
    %c8_i32 = arith.constant 8 : i32
    %29 = arith.addi %c0_i32, %c8_i32 : i32
    %c1_i32 = arith.constant 1 : i32
    %30 = scf.for %arg11 = %c0_i32 to %29 step %c1_i32 iter_args(%arg12 = %28) -> (vector<8x256xf32>)  : i32 {
      %c8_i32_31 = arith.constant 8 : i32
      %40 = arith.muli %arg11, %c8_i32_31 : i32
      %c0_i32_32 = arith.constant 0 : i32
      %41 = arith.addi %40, %c0_i32_32 : i32
      %42 = arith.index_cast %41 : i32 to index
      %c0_33 = arith.constant 0 : index
      %c0_34 = arith.constant 0 : index
      %43 = vector.load %arg8[%42, %c0_33, %c0_34] : memref<64x8x256xf32, #tpu.memory_space<vmem>>, vector<1x8x256xf32>
      %44 = vector.shape_cast %43 : vector<1x8x256xf32> to vector<8x256xf32>
      %45 = arith.mulf %44, %arg12 : vector<8x256xf32>
      %46 = arith.index_cast %41 : i32 to index
      %c0_35 = arith.constant 0 : index
      %c0_36 = arith.constant 0 : index
      %47 = vector.load %arg9[%46, %c0_35, %c0_36] : memref<64x8x256xf32, #tpu.memory_space<vmem>>, vector<1x8x256xf32>
      %48 = vector.shape_cast %47 : vector<1x8x256xf32> to vector<8x256xf32>
      %49 = arith.addf %45, %48 : vector<8x256xf32>
      %50 = arith.index_cast %41 : i32 to index
      %c0_37 = arith.constant 0 : index
      %c0_38 = arith.constant 0 : index
      %51 = vector.load %arg10[%50, %c0_37, %c0_38] : memref<64x8x256xf32, #tpu.memory_space<vmem>>, vector<1x8x256xf32>
      %52 = vector.shape_cast %51 : vector<1x8x256xf32> to vector<8x256xf32>
      %53 = vector.shape_cast %49 : vector<8x256xf32> to vector<1x8x256xf32>
      tpu.vector_store %arg10[%50, %c0_37, %c0_38], %53 {strides = array<i32>} : memref<64x8x256xf32, #tpu.memory_space<vmem>>, vector<1x8x256xf32>,
      %c1_i32_39 = arith.constant 1 : i32
      %54 = arith.addi %40, %c1_i32_39 : i32
      %55 = arith.index_cast %54 : i32 to index
      %c0_40 = arith.constant 0 : index
      %c0_41 = arith.constant 0 : index
      %56 = vector.load %arg8[%55, %c0_40, %c0_41] : memref<64x8x256xf32, #tpu.memory_space<vmem>>, vector<1x8x256xf32>
      %57 = vector.shape_cast %56 : vector<1x8x256xf32> to vector<8x256xf32>
      %58 = arith.mulf %57, %49 : vector<8x256xf32>
      %59 = arith.index_cast %54 : i32 to index
      %c0_42 = arith.constant 0 : index
      %c0_43 = arith.constant 0 : index
      %60 = vector.load %arg9[%59, %c0_42, %c0_43] : memref<64x8x256xf32, #tpu.memory_space<vmem>>, vector<1x8x256xf32>
      %61 = vector.shape_cast %60 : vector<1x8x256xf32> to vector<8x256xf32>
      %62 = arith.addf %58, %61 : vector<8x256xf32>
      %63 = arith.index_cast %54 : i32 to index
      %c0_44 = arith.constant 0 : index
      %c0_45 = arith.constant 0 : index
      %64 = vector.load %arg10[%63, %c0_44, %c0_45] : memref<64x8x256xf32, #tpu.memory_space<vmem>>, vector<1x8x256xf32>
      %65 = vector.shape_cast %64 : vector<1x8x256xf32> to vector<8x256xf32>
      %66 = vector.shape_cast %62 : vector<8x256xf32> to vector<1x8x256xf32>
      tpu.vector_store %arg10[%63, %c0_44, %c0_45], %66 {strides = array<i32>} : memref<64x8x256xf32, #tpu.memory_space<vmem>>, vector<1x8x256xf32>,
      %c2_i32 = arith.constant 2 : i32
      %67 = arith.addi %40, %c2_i32 : i32
      %68 = arith.index_cast %67 : i32 to index
      %c0_46 = arith.constant 0 : index
      %c0_47 = arith.constant 0 : index
      %69 = vector.load %arg8[%68, %c0_46, %c0_47] : memref<64x8x256xf32, #tpu.memory_space<vmem>>, vector<1x8x256xf32>
      %70 = vector.shape_cast %69 : vector<1x8x256xf32> to vector<8x256xf32>
      %71 = arith.mulf %70, %62 : vector<8x256xf32>
      %72 = arith.index_cast %67 : i32 to index
      %c0_48 = arith.constant 0 : index
      %c0_49 = arith.constant 0 : index
      %73 = vector.load %arg9[%72, %c0_48, %c0_49] : memref<64x8x256xf32, #tpu.memory_space<vmem>>, vector<1x8x256xf32>
      %74 = vector.shape_cast %73 : vector<1x8x256xf32> to vector<8x256xf32>
      %75 = arith.addf %71, %74 : vector<8x256xf32>
      %76 = arith.index_cast %67 : i32 to index
      %c0_50 = arith.constant 0 : index
      %c0_51 = arith.constant 0 : index
      %77 = vector.load %arg10[%76, %c0_50, %c0_51] : memref<64x8x256xf32, #tpu.memory_space<vmem>>, vector<1x8x256xf32>
      %78 = vector.shape_cast %77 : vector<1x8x256xf32> to vector<8x256xf32>
      %79 = vector.shape_cast %75 : vector<8x256xf32> to vector<1x8x256xf32>
      tpu.vector_store %arg10[%76, %c0_50, %c0_51], %79 {strides = array<i32>} : memref<64x8x256xf32, #tpu.memory_space<vmem>>, vector<1x8x256xf32>,
      %c3_i32 = arith.constant 3 : i32
      %80 = arith.addi %40, %c3_i32 : i32
      %81 = arith.index_cast %80 : i32 to index
      %c0_52 = arith.constant 0 : index
      %c0_53 = arith.constant 0 : index
      %82 = vector.load %arg8[%81, %c0_52, %c0_53] : memref<64x8x256xf32, #tpu.memory_space<vmem>>, vector<1x8x256xf32>
      %83 = vector.shape_cast %82 : vector<1x8x256xf32> to vector<8x256xf32>
      %84 = arith.mulf %83, %75 : vector<8x256xf32>
      %85 = arith.index_cast %80 : i32 to index
      %c0_54 = arith.constant 0 : index
      %c0_55 = arith.constant 0 : index
      %86 = vector.load %arg9[%85, %c0_54, %c0_55] : memref<64x8x256xf32, #tpu.memory_space<vmem>>, vector<1x8x256xf32>
      %87 = vector.shape_cast %86 : vector<1x8x256xf32> to vector<8x256xf32>
      %88 = arith.addf %84, %87 : vector<8x256xf32>
      %89 = arith.index_cast %80 : i32 to index
      %c0_56 = arith.constant 0 : index
      %c0_57 = arith.constant 0 : index
      %90 = vector.load %arg10[%89, %c0_56, %c0_57] : memref<64x8x256xf32, #tpu.memory_space<vmem>>, vector<1x8x256xf32>
      %91 = vector.shape_cast %90 : vector<1x8x256xf32> to vector<8x256xf32>
      %92 = vector.shape_cast %88 : vector<8x256xf32> to vector<1x8x256xf32>
      tpu.vector_store %arg10[%89, %c0_56, %c0_57], %92 {strides = array<i32>} : memref<64x8x256xf32, #tpu.memory_space<vmem>>, vector<1x8x256xf32>,
      %c4_i32 = arith.constant 4 : i32
      %93 = arith.addi %40, %c4_i32 : i32
      %94 = arith.index_cast %93 : i32 to index
      %c0_58 = arith.constant 0 : index
      %c0_59 = arith.constant 0 : index
      %95 = vector.load %arg8[%94, %c0_58, %c0_59] : memref<64x8x256xf32, #tpu.memory_space<vmem>>, vector<1x8x256xf32>
      %96 = vector.shape_cast %95 : vector<1x8x256xf32> to vector<8x256xf32>
      %97 = arith.mulf %96, %88 : vector<8x256xf32>
      %98 = arith.index_cast %93 : i32 to index
      %c0_60 = arith.constant 0 : index
      %c0_61 = arith.constant 0 : index
      %99 = vector.load %arg9[%98, %c0_60, %c0_61] : memref<64x8x256xf32, #tpu.memory_space<vmem>>, vector<1x8x256xf32>
      %100 = vector.shape_cast %99 : vector<1x8x256xf32> to vector<8x256xf32>
      %101 = arith.addf %97, %100 : vector<8x256xf32>
      %102 = arith.index_cast %93 : i32 to index
      %c0_62 = arith.constant 0 : index
      %c0_63 = arith.constant 0 : index
      %103 = vector.load %arg10[%102, %c0_62, %c0_63] : memref<64x8x256xf32, #tpu.memory_space<vmem>>, vector<1x8x256xf32>
      %104 = vector.shape_cast %103 : vector<1x8x256xf32> to vector<8x256xf32>
      %105 = vector.shape_cast %101 : vector<8x256xf32> to vector<1x8x256xf32>
      tpu.vector_store %arg10[%102, %c0_62, %c0_63], %105 {strides = array<i32>} : memref<64x8x256xf32, #tpu.memory_space<vmem>>, vector<1x8x256xf32>,
      %c5_i32 = arith.constant 5 : i32
      %106 = arith.addi %40, %c5_i32 : i32
      %107 = arith.index_cast %106 : i32 to index
      %c0_64 = arith.constant 0 : index
      %c0_65 = arith.constant 0 : index
      %108 = vector.load %arg8[%107, %c0_64, %c0_65] : memref<64x8x256xf32, #tpu.memory_space<vmem>>, vector<1x8x256xf32>
      %109 = vector.shape_cast %108 : vector<1x8x256xf32> to vector<8x256xf32>
      %110 = arith.mulf %109, %101 : vector<8x256xf32>
      %111 = arith.index_cast %106 : i32 to index
      %c0_66 = arith.constant 0 : index
      %c0_67 = arith.constant 0 : index
      %112 = vector.load %arg9[%111, %c0_66, %c0_67] : memref<64x8x256xf32, #tpu.memory_space<vmem>>, vector<1x8x256xf32>
      %113 = vector.shape_cast %112 : vector<1x8x256xf32> to vector<8x256xf32>
      %114 = arith.addf %110, %113 : vector<8x256xf32>
      %115 = arith.index_cast %106 : i32 to index
      %c0_68 = arith.constant 0 : index
      %c0_69 = arith.constant 0 : index
      %116 = vector.load %arg10[%115, %c0_68, %c0_69] : memref<64x8x256xf32, #tpu.memory_space<vmem>>, vector<1x8x256xf32>
      %117 = vector.shape_cast %116 : vector<1x8x256xf32> to vector<8x256xf32>
      %118 = vector.shape_cast %114 : vector<8x256xf32> to vector<1x8x256xf32>
      tpu.vector_store %arg10[%115, %c0_68, %c0_69], %118 {strides = array<i32>} : memref<64x8x256xf32, #tpu.memory_space<vmem>>, vector<1x8x256xf32>,
      %c6_i32 = arith.constant 6 : i32
      %119 = arith.addi %40, %c6_i32 : i32
      %120 = arith.index_cast %119 : i32 to index
      %c0_70 = arith.constant 0 : index
      %c0_71 = arith.constant 0 : index
      %121 = vector.load %arg8[%120, %c0_70, %c0_71] : memref<64x8x256xf32, #tpu.memory_space<vmem>>, vector<1x8x256xf32>
      %122 = vector.shape_cast %121 : vector<1x8x256xf32> to vector<8x256xf32>
      %123 = arith.mulf %122, %114 : vector<8x256xf32>
      %124 = arith.index_cast %119 : i32 to index
      %c0_72 = arith.constant 0 : index
      %c0_73 = arith.constant 0 : index
      %125 = vector.load %arg9[%124, %c0_72, %c0_73] : memref<64x8x256xf32, #tpu.memory_space<vmem>>, vector<1x8x256xf32>
      %126 = vector.shape_cast %125 : vector<1x8x256xf32> to vector<8x256xf32>
      %127 = arith.addf %123, %126 : vector<8x256xf32>
      %128 = arith.index_cast %119 : i32 to index
      %c0_74 = arith.constant 0 : index
      %c0_75 = arith.constant 0 : index
      %129 = vector.load %arg10[%128, %c0_74, %c0_75] : memref<64x8x256xf32, #tpu.memory_space<vmem>>, vector<1x8x256xf32>
      %130 = vector.shape_cast %129 : vector<1x8x256xf32> to vector<8x256xf32>
      %131 = vector.shape_cast %127 : vector<8x256xf32> to vector<1x8x256xf32>
      tpu.vector_store %arg10[%128, %c0_74, %c0_75], %131 {strides = array<i32>} : memref<64x8x256xf32, #tpu.memory_space<vmem>>, vector<1x8x256xf32>,
      %c7_i32 = arith.constant 7 : i32
      %132 = arith.addi %40, %c7_i32 : i32
      %133 = arith.index_cast %132 : i32 to index
      %c0_76 = arith.constant 0 : index
      %c0_77 = arith.constant 0 : index
      %134 = vector.load %arg8[%133, %c0_76, %c0_77] : memref<64x8x256xf32, #tpu.memory_space<vmem>>, vector<1x8x256xf32>
      %135 = vector.shape_cast %134 : vector<1x8x256xf32> to vector<8x256xf32>
      %136 = arith.mulf %135, %127 : vector<8x256xf32>
      %137 = arith.index_cast %132 : i32 to index
      %c0_78 = arith.constant 0 : index
      %c0_79 = arith.constant 0 : index
      %138 = vector.load %arg9[%137, %c0_78, %c0_79] : memref<64x8x256xf32, #tpu.memory_space<vmem>>, vector<1x8x256xf32>
      %139 = vector.shape_cast %138 : vector<1x8x256xf32> to vector<8x256xf32>
      %140 = arith.addf %136, %139 : vector<8x256xf32>
      %141 = arith.index_cast %132 : i32 to index
      %c0_80 = arith.constant 0 : index
      %c0_81 = arith.constant 0 : index
      %142 = vector.load %arg10[%141, %c0_80, %c0_81] : memref<64x8x256xf32, #tpu.memory_space<vmem>>, vector<1x8x256xf32>
      %143 = vector.shape_cast %142 : vector<1x8x256xf32> to vector<8x256xf32>
      %144 = vector.shape_cast %140 : vector<8x256xf32> to vector<1x8x256xf32>
      tpu.vector_store %arg10[%141, %c0_80, %c0_81], %144 {strides = array<i32>} : memref<64x8x256xf32, #tpu.memory_space<vmem>>, vector<1x8x256xf32>,
      scf.yield %140 : vector<8x256xf32>
    }
    %c8_i32_19 = arith.constant 8 : i32
    %c0_20 = arith.constant 0 : index
    %c0_21 = arith.constant 0 : index
    %c0_22 = arith.constant 0 : index
    %31 = vector.load %arg6[%c0_20, %c0_21, %c0_22] : memref<64x8x256xf32, #tpu.memory_space<vmem>>, vector<64x8x256xf32>
    %c0_23 = arith.constant 0 : index
    %c0_24 = arith.constant 0 : index
    %c0_25 = arith.constant 0 : index
    %32 = vector.load %arg10[%c0_23, %c0_24, %c0_25] : memref<64x8x256xf32, #tpu.memory_space<vmem>>, vector<64x8x256xf32>
    %33 = arith.mulf %31, %32 : vector<64x8x256xf32>
    %cst_26 = arith.constant dense<0.000000e+00> : vector<64x256xf32>
    %34 = vector.multi_reduction <add>, %33, %cst_26 [1] : vector<64x8x256xf32> to vector<64x256xf32>
    %c0_27 = arith.constant 0 : index
    %c0_28 = arith.constant 0 : index
    %35 = vector.load %arg3[%c0_27, %c0_28] : memref<1x256xf32, #tpu.memory_space<vmem>>, vector<1x256xf32>
    %36 = vector.broadcast %35 : vector<1x256xf32> to vector<64x256xf32>
    %37 = arith.mulf %36, %0 : vector<64x256xf32>
    %38 = arith.addf %34, %37 : vector<64x256xf32>
    %c0_29 = arith.constant 0 : index
    %c0_30 = arith.constant 0 : index
    %39 = vector.load %arg7[%c0_29, %c0_30] : memref<64x256xf32, #tpu.memory_space<vmem>>, vector<64x256xf32>
    tpu.vector_store %arg7[%c0_29, %c0_30], %38 {strides = array<i32>} : memref<64x256xf32, #tpu.memory_space<vmem>>, vector<64x256xf32>,
    return
  }
}

</mosaic_0001>

<llo_original>
// kernel: selective_scan_pallas.1
$region0: #{selective_scan_pallas.1}
  #allocation0 [shape = 'u32[]', space=smem, size = 0x4, offset = 0x4, fixed_abs, tag = 'smem constant byte address 0x4 - core index']
  #allocation1 [shape = 'u32[72,128]{1,0:T(1,128)}', space=vmem, size = 0x9000, scoped, tag = 'internal scratch']
  #allocation2 [shape = 'f32[64,8,256]{2,1,0:T(8,128)}', space=vmem, size = 0x80000, scoped, tag = 'scratch operand']
  #allocation3 [shape = 'f32[64,8,256]{2,1,0:T(8,128)}', space=vmem, size = 0x80000, scoped, tag = 'scratch operand']
  #allocation4 [shape = 'f32[64,8,256]{2,1,0:T(8,128)}', space=vmem, size = 0x80000, scoped, tag = 'scratch operand']
  %s0 = inlined_call_operand.vmem [shape: f32[64,256], index: 0, kind: input, shape index: {}]
  %s1 = inlined_call_operand.vmem [shape: f32[64,256], index: 1, kind: input, shape index: {}]
  %s2 = inlined_call_operand.vmem [shape: f32[8,256], index: 2, kind: input, shape index: {}]
  %s3 = inlined_call_operand.vmem [shape: f32[1,256], index: 3, kind: input, shape index: {}]
  %s4 = inlined_call_operand.vmem [shape: f32[1,256], index: 4, kind: input, shape index: {}]
  %s5 = inlined_call_operand.vmem [shape: f32[64,8,256], index: 5, kind: input, shape index: {}]
  %s6 = inlined_call_operand.vmem [shape: f32[64,8,256], index: 6, kind: input, shape index: {}]
  %s7 = inlined_call_operand.vmem [shape: f32[64,256], index: 7, kind: output, shape index: {}]
  %s8 = sld [smem:[#allocation0]]
  $region45: #{selective_scan_pallas.1} parent=0
    _
  %s10 = ssub.s32 1, %s8
  %s11 = scalar_select 0, %s10, %s8
  // Predicated region
  $region2: #{selective_scan_pallas.1} parent=0 // pred_check
    _
  $region3: #{selective_scan_pallas.1} parent=0 // pred_check_branch
    %13 = sbr.rel (0) target = $region5
  $region4: #{selective_scan_pallas.1} parent=0 // pred_region
    _
  $region5: #{selective_scan_pallas.1} parent=0 // pred_fallthru
    _
  // Predicated region
  $region6: #{selective_scan_pallas.1} parent=0 // pred_check
    _
  $region7: #{selective_scan_pallas.1} parent=0 // pred_check_branch
    %15 = sbr.rel (0) target = $region9
  $region8: #{selective_scan_pallas.1} parent=0 // pred_region
    _
  $region9: #{selective_scan_pallas.1} parent=0 // pred_fallthru
    _
  // Predicated region
  $region10: #{selective_scan_pallas.1} parent=0 // pred_check
    _
  $region11: #{selective_scan_pallas.1} parent=0 // pred_check_branch
    %17 = sbr.rel (0) target = $region13
  $region12: #{selective_scan_pallas.1} parent=0 // pred_region
    _
  $region13: #{selective_scan_pallas.1} parent=0 // pred_fallthru
    _
  // Predicated region
  $region14: #{selective_scan_pallas.1} parent=0 // pred_check
    _
  $region15: #{selective_scan_pallas.1} parent=0 // pred_check_branch
    %19 = sbr.rel (0) target = $region17
  $region16: #{selective_scan_pallas.1} parent=0 // pred_region
    _
  $region17: #{selective_scan_pallas.1} parent=0 // pred_fallthru
    _
  // Predicated region
  $region18: #{selective_scan_pallas.1} parent=0 // pred_check
    _
  $region19: #{selective_scan_pallas.1} parent=0 // pred_check_branch
    %21 = sbr.rel (0) target = $region21
  $region20: #{selective_scan_pallas.1} parent=0 // pred_region
    _
  $region21: #{selective_scan_pallas.1} parent=0 // pred_fallthru
    _
  // Predicated region
  $region22: #{selective_scan_pallas.1} parent=0 // pred_check
    _
  $region23: #{selective_scan_pallas.1} parent=0 // pred_check_branch
    %23 = sbr.rel (0) target = $region25
  $region24: #{selective_scan_pallas.1} parent=0 // pred_region
    _
  $region25: #{selective_scan_pallas.1} parent=0 // pred_fallthru
    _
  // Predicated region
  $region26: #{selective_scan_pallas.1} parent=0 // pred_check
    _
  $region27: #{selective_scan_pallas.1} parent=0 // pred_check_branch
    %25 = sbr.rel (0) target = $region29
  $region28: #{selective_scan_pallas.1} parent=0 // pred_region
    _
  $region29: #{selective_scan_pallas.1} parent=0 // pred_fallthru
    _
  %v26 = vld [vmem:[%s0] sm:$0xff]
  %v27 = vld [vmem:[%s0 + $0x8] sm:$0xff]
  %v28 = vld [vmem:[%s0 + $0x10] sm:$0xff]
  %v29 = vld [vmem:[%s0 + $0x18] sm:$0xff]
  %v30 = vld [vmem:[%s0 + $0x20] sm:$0xff]
  %v31 = vld [vmem:[%s0 + $0x28] sm:$0xff]
  %v32 = vld [vmem:[%s0 + $0x30] sm:$0xff]
  %v33 = vld [vmem:[%s0 + $0x38] sm:$0xff]
  %v34 = vld [vmem:[%s0 + $0x40] sm:$0xff]
  %v35 = vld [vmem:[%s0 + $0x48] sm:$0xff]
  %v36 = vld [vmem:[%s0 + $0x50] sm:$0xff]
  %v37 = vld [vmem:[%s0 + $0x58] sm:$0xff]
  %v38 = vld [vmem:[%s0 + $0x60] sm:$0xff]
  %v39 = vld [vmem:[%s0 + $0x68] sm:$0xff]
  %v40 = vld [vmem:[%s0 + $0x70] sm:$0xff]
  %v41 = vld [vmem:[%s0 + $0x78] sm:$0xff]
  %v42 = vld [vmem:[%s1] sm:$0xff]
  %v43 = vld [vmem:[%s1 + $0x8] sm:$0xff]
  %v44 = vld [vmem:[%s1 + $0x10] sm:$0xff]
  %v45 = vld [vmem:[%s1 + $0x18] sm:$0xff]
  %v46 = vld [vmem:[%s1 + $0x20] sm:$0xff]
  %v47 = vld [vmem:[%s1 + $0x28] sm:$0xff]
  %v48 = vld [vmem:[%s1 + $0x30] sm:$0xff]
  %v49 = vld [vmem:[%s1 + $0x38] sm:$0xff]
  %v50 = vld [vmem:[%s1 + $0x40] sm:$0xff]
  %v51 = vld [vmem:[%s1 + $0x48] sm:$0xff]
  %v52 = vld [vmem:[%s1 + $0x50] sm:$0xff]
  %v53 = vld [vmem:[%s1 + $0x58] sm:$0xff]
  %v54 = vld [vmem:[%s1 + $0x60] sm:$0xff]
  %v55 = vld [vmem:[%s1 + $0x68] sm:$0xff]
  %v56 = vld [vmem:[%s1 + $0x70] sm:$0xff]
  %v57 = vld [vmem:[%s1 + $0x78] sm:$0xff]
  %v58 = vld [vmem:[%s4] sm:$0x3]
  %v60 = vperm.slane %v58, 0
  %v61 = vperm.slane %v58, 1
  %v64 = vadd.f32 %v42, %v60
  %v65 = vadd.f32 %v43, %v61
  %v66 = vadd.f32 %v44, %v60
  %v67 = vadd.f32 %v45, %v61
  %v68 = vadd.f32 %v46, %v60
  %v69 = vadd.f32 %v47, %v61
  %v70 = vadd.f32 %v48, %v60
  %v71 = vadd.f32 %v49, %v61
  %v72 = vadd.f32 %v50, %v60
  %v73 = vadd.f32 %v51, %v61
  %v74 = vadd.f32 %v52, %v60
  %v75 = vadd.f32 %v53, %v61
  %v76 = vadd.f32 %v54, %v60
  %v77 = vadd.f32 %v55, %v61
  %v78 = vadd.f32 %v56, %v60
  %v79 = vadd.f32 %v57, %v61
  %v80 = vmin.f32 %v64, 20.0
  %v81 = vmin.f32 %v65, 20.0
  %v82 = vmin.f32 %v66, 20.0
  %v83 = vmin.f32 %v67, 20.0
  %v84 = vmin.f32 %v68, 20.0
  %v85 = vmin.f32 %v69, 20.0
  %v86 = vmin.f32 %v70, 20.0
  %v87 = vmin.f32 %v71, 20.0
  %v88 = vmin.f32 %v72, 20.0
  %v89 = vmin.f32 %v73, 20.0
  %v90 = vmin.f32 %v74, 20.0
  %v91 = vmin.f32 %v75, 20.0
  %v92 = vmin.f32 %v76, 20.0
  %v93 = vmin.f32 %v77, 20.0
  %v94 = vmin.f32 %v78, 20.0
  %v95 = vmin.f32 %v79, 20.0
  %vm96 = vcmp.gt.f32.partialorder %v64, 20.0
  %vm97 = vcmp.gt.f32.partialorder %v65, 20.0
  %vm98 = vcmp.gt.f32.partialorder %v66, 20.0
  %vm99 = vcmp.gt.f32.partialorder %v67, 20.0
  %vm100 = vcmp.gt.f32.partialorder %v68, 20.0
  %vm101 = vcmp.gt.f32.partialorder %v69, 20.0
  %vm102 = vcmp.gt.f32.partialorder %v70, 20.0
  %vm103 = vcmp.gt.f32.partialorder %v71, 20.0
  %vm104 = vcmp.gt.f32.partialorder %v72, 20.0
  %vm105 = vcmp.gt.f32.partialorder %v73, 20.0
  %vm106 = vcmp.gt.f32.partialorder %v74, 20.0
  %vm107 = vcmp.gt.f32.partialorder %v75, 20.0
  %vm108 = vcmp.gt.f32.partialorder %v76, 20.0
  %vm109 = vcmp.gt.f32.partialorder %v77, 20.0
  %vm110 = vcmp.gt.f32.partialorder %v78, 20.0
  %vm111 = vcmp.gt.f32.partialorder %v79, 20.0
  %v112 = vmul.f32 %v80, 1.442695
  %v113 = vpow.pop %v112
  %v114 = vmul.f32 %v81, 1.442695
  %v115 = vpow.pop %v114
  %v116 = vmul.f32 %v82, 1.442695
  %v117 = vpow.pop %v116
  %v118 = vmul.f32 %v83, 1.442695
  %v119 = vpow.pop %v118
  %v120 = vmul.f32 %v84, 1.442695
  %v121 = vpow.pop %v120
  %v122 = vmul.f32 %v85, 1.442695
  %v123 = vpow.pop %v122
  %v124 = vmul.f32 %v86, 1.442695
  %v125 = vpow.pop %v124
  %v126 = vmul.f32 %v87, 1.442695
  %v127 = vpow.pop %v126
  %v128 = vmul.f32 %v88, 1.442695
  %v129 = vpow.pop %v128
  %v130 = vmul.f32 %v89, 1.442695
  %v131 = vpow.pop %v130
  %v132 = vmul.f32 %v90, 1.442695
  %v133 = vpow.pop %v132
  %v134 = vmul.f32 %v91, 1.442695
  %v135 = vpow.pop %v134
  %v136 = vmul.f32 %v92, 1.442695
  %v137 = vpow.pop %v136
  %v138 = vmul.f32 %v93, 1.442695
  %v139 = vpow.pop %v138
  %v140 = vmul.f32 %v94, 1.442695
  %v141 = vpow.pop %v140
  %v142 = vmul.f32 %v95, 1.442695
  %v143 = vpow.pop %v142
  %v144 = vadd.f32 %v113, 1.0
  %v145 = vadd.f32 %v115, 1.0
  %v146 = vadd.f32 %v117, 1.0
  %v147 = vadd.f32 %v119, 1.0
  %v148 = vadd.f32 %v121, 1.0
  %v149 = vadd.f32 %v123, 1.0
  %v150 = vadd.f32 %v125, 1.0
  %v151 = vadd.f32 %v127, 1.0
  %v152 = vadd.f32 %v129, 1.0
  %v153 = vadd.f32 %v131, 1.0
  %v154 = vadd.f32 %v133, 1.0
  %v155 = vadd.f32 %v135, 1.0
  %v156 = vadd.f32 %v137, 1.0
  %v157 = vadd.f32 %v139, 1.0
  %v158 = vadd.f32 %v141, 1.0
  %v159 = vadd.f32 %v143, 1.0
  %v160 = vlog2.pop %v144
  %v161 = vmul.f32 %v160, 0.6931472
  %v162 = vlog2.pop %v145
  %v163 = vmul.f32 %v162, 0.6931472
  %v164 = vlog2.pop %v146
  %v165 = vmul.f32 %v164, 0.6931472
  %v166 = vlog2.pop %v147
  %v167 = vmul.f32 %v166, 0.6931472
  %v168 = vlog2.pop %v148
  %v169 = vmul.f32 %v168, 0.6931472
  %v170 = vlog2.pop %v149
  %v171 = vmul.f32 %v170, 0.6931472
  %v172 = vlog2.pop %v150
  %v173 = vmul.f32 %v172, 0.6931472
  %v174 = vlog2.pop %v151
  %v175 = vmul.f32 %v174, 0.6931472
  %v176 = vlog2.pop %v152
  %v177 = vmul.f32 %v176, 0.6931472
  %v178 = vlog2.pop %v153
  %v179 = vmul.f32 %v178, 0.6931472
  %v180 = vlog2.pop %v154
  %v181 = vmul.f32 %v180, 0.6931472
  %v182 = vlog2.pop %v155
  %v183 = vmul.f32 %v182, 0.6931472
  %v184 = vlog2.pop %v156
  %v185 = vmul.f32 %v184, 0.6931472
  %v186 = vlog2.pop %v157
  %v187 = vmul.f32 %v186, 0.6931472
  %v188 = vlog2.pop %v158
  %v189 = vmul.f32 %v188, 0.6931472
  %v190 = vlog2.pop %v159
  %v191 = vmul.f32 %v190, 0.6931472
  %v192 = vsel %vm96, %v64, %v161
  %v193 = vsel %vm97, %v65, %v163
  %v194 = vsel %vm98, %v66, %v165
  %v195 = vsel %vm99, %v67, %v167
  %v196 = vsel %vm100, %v68, %v169
  %v197 = vsel %vm101, %v69, %v171
  %v198 = vsel %vm102, %v70, %v173
  %v199 = vsel %vm103, %v71, %v175
  %v200 = vsel %vm104, %v72, %v177
  %v201 = vsel %vm105, %v73, %v179
  %v202 = vsel %vm106, %v74, %v181
  %v203 = vsel %vm107, %v75, %v183
  %v204 = vsel %vm108, %v76, %v185
  %v205 = vsel %vm109, %v77, %v187
  %v206 = vsel %vm110, %v78, %v189
  %v207 = vsel %vm111, %v79, %v191
  %v208 = vmul.f32 %v192, %v26
  %v209 = vmul.f32 %v193, %v27
  %v210 = vmul.f32 %v194, %v28
  %v211 = vmul.f32 %v195, %v29
  %v212 = vmul.f32 %v196, %v30
  %v213 = vmul.f32 %v197, %v31
  %v214 = vmul.f32 %v198, %v32
  %v215 = vmul.f32 %v199, %v33
  %v216 = vmul.f32 %v200, %v34
  %v217 = vmul.f32 %v201, %v35
  %v218 = vmul.f32 %v202, %v36
  %v219 = vmul.f32 %v203, %v37
  %v220 = vmul.f32 %v204, %v38
  %v221 = vmul.f32 %v205, %v39
  %v222 = vmul.f32 %v206, %v40
  %v223 = vmul.f32 %v207, %v41
  %v240 = vrot.slane %v193, 7
  %v241 = vrot.slane %v195, 7
  %v242 = vrot.slane %v197, 7
  %v243 = vrot.slane %v199, 7
  %v244 = vrot.slane %v201, 7
  %v245 = vrot.slane %v203, 7
  %v246 = vrot.slane %v205, 7
  %v247 = vrot.slane %v207, 7
  %vm248 = vcmask 1040384
  %v249 = vsel %vm248, %v192, %v240
  %vm250 = vcmask 1041409
  %v251 = vsel %vm250, %v192, %v240
  %v252 = vrot.slane %v251, 1
  %vm253 = vcmask 1042434
  %v254 = vsel %vm253, %v192, %v240
  %v255 = vrot.slane %v254, 2
  %vm256 = vcmask 1043459
  %v257 = vsel %vm256, %v192, %v240
  %v258 = vrot.slane %v257, 3
  %vm259 = vcmask 1044484
  %v260 = vsel %vm259, %v192, %v240
  %v261 = vrot.slane %v260, 4
  %vm262 = vcmask 1045509
  %v263 = vsel %vm262, %v192, %v240
  %v264 = vrot.slane %v263, 5
  %vm265 = vcmask 1046534
  %v266 = vsel %vm265, %v192, %v240
  %v267 = vrot.slane %v266, 6
  %vm268 = vcmask 1046528
  %v269 = vsel %vm268, %v240, %v192
  %v270 = vrot.slane %v269, 7
  %v271 = vsel %vm248, %v194, %v241
  %v272 = vsel %vm250, %v194, %v241
  %v273 = vrot.slane %v272, 1
  %v274 = vsel %vm253, %v194, %v241
  %v275 = vrot.slane %v274, 2
  %v276 = vsel %vm256, %v194, %v241
  %v277 = vrot.slane %v276, 3
  %v278 = vsel %vm259, %v194, %v241
  %v279 = vrot.slane %v278, 4
  %v280 = vsel %vm262, %v194, %v241
  %v281 = vrot.slane %v280, 5
  %v282 = vsel %vm265, %v194, %v241
  %v283 = vrot.slane %v282, 6
  %v284 = vsel %vm268, %v241, %v194
  %v285 = vrot.slane %v284, 7
  %v286 = vsel %vm248, %v196, %v242
  %v287 = vsel %vm250, %v196, %v242
  %v288 = vrot.slane %v287, 1
  %v289 = vsel %vm253, %v196, %v242
  %v290 = vrot.slane %v289, 2
  %v291 = vsel %vm256, %v196, %v242
  %v292 = vrot.slane %v291, 3
  %v293 = vsel %vm259, %v196, %v242
  %v294 = vrot.slane %v293, 4
  %v295 = vsel %vm262, %v196, %v242
  %v296 = vrot.slane %v295, 5
  %v297 = vsel %vm265, %v196, %v242
  %v298 = vrot.slane %v297, 6
  %v299 = vsel %vm268, %v242, %v196
  %v300 = vrot.slane %v299, 7
  %v301 = vsel %vm248, %v198, %v243
  %v302 = vsel %vm250, %v198, %v243
  %v303 = vrot.slane %v302, 1
  %v304 = vsel %vm253, %v198, %v243
  %v305 = vrot.slane %v304, 2
  %v306 = vsel %vm256, %v198, %v243
  %v307 = vrot.slane %v306, 3
  %v308 = vsel %vm259, %v198, %v243
  %v309 = vrot.slane %v308, 4
  %v310 = vsel %vm262, %v198, %v243
  %v311 = vrot.slane %v310, 5
  %v312 = vsel %vm265, %v198, %v243
  %v313 = vrot.slane %v312, 6
  %v314 = vsel %vm268, %v243, %v198
  %v315 = vrot.slane %v314, 7
  %v316 = vsel %vm248, %v200, %v244
  %v317 = vsel %vm250, %v200, %v244
  %v318 = vrot.slane %v317, 1
  %v319 = vsel %vm253, %v200, %v244
  %v320 = vrot.slane %v319, 2
  %v321 = vsel %vm256, %v200, %v244
  %v322 = vrot.slane %v321, 3
  %v323 = vsel %vm259, %v200, %v244
  %v324 = vrot.slane %v323, 4
  %v325 = vsel %vm262, %v200, %v244
  %v326 = vrot.slane %v325, 5
  %v327 = vsel %vm265, %v200, %v244
  %v328 = vrot.slane %v327, 6
  %v329 = vsel %vm268, %v244, %v200
  %v330 = vrot.slane %v329, 7
  %v331 = vsel %vm248, %v202, %v245
  %v332 = vsel %vm250, %v202, %v245
  %v333 = vrot.slane %v332, 1
  %v334 = vsel %vm253, %v202, %v245
  %v335 = vrot.slane %v334, 2
  %v336 = vsel %vm256, %v202, %v245
  %v337 = vrot.slane %v336, 3
  %v338 = vsel %vm259, %v202, %v245
  %v339 = vrot.slane %v338, 4
  %v340 = vsel %vm262, %v202, %v245
  %v341 = vrot.slane %v340, 5
  %v342 = vsel %vm265, %v202, %v245
  %v343 = vrot.slane %v342, 6
  %v344 = vsel %vm268, %v245, %v202
  %v345 = vrot.slane %v344, 7
  %v346 = vsel %vm248, %v204, %v246
  %v347 = vsel %vm250, %v204, %v246
  %v348 = vrot.slane %v347, 1
  %v349 = vsel %vm253, %v204, %v246
  %v350 = vrot.slane %v349, 2
  %v351 = vsel %vm256, %v204, %v246
  %v352 = vrot.slane %v351, 3
  %v353 = vsel %vm259, %v204, %v246
  %v354 = vrot.slane %v353, 4
  %v355 = vsel %vm262, %v204, %v246
  %v356 = vrot.slane %v355, 5
  %v357 = vsel %vm265, %v204, %v246
  %v358 = vrot.slane %v357, 6
  %v359 = vsel %vm268, %v246, %v204
  %v360 = vrot.slane %v359, 7
  %v361 = vsel %vm248, %v206, %v247
  %v362 = vsel %vm250, %v206, %v247
  %v363 = vrot.slane %v362, 1
  %v364 = vsel %vm253, %v206, %v247
  %v365 = vrot.slane %v364, 2
  %v366 = vsel %vm256, %v206, %v247
  %v367 = vrot.slane %v366, 3
  %v368 = vsel %vm259, %v206, %v247
  %v369 = vrot.slane %v368, 4
  %v370 = vsel %vm262, %v206, %v247
  %v371 = vrot.slane %v370, 5
  %v372 = vsel %vm265, %v206, %v247
  %v373 = vrot.slane %v372, 6
  %v374 = vsel %vm268, %v247, %v206
  %v375 = vrot.slane %v374, 7
  %v376 = vld [vmem:[%s2] sm:$0xff]
  %v377 = vld [vmem:[%s2 + $0x8] sm:$0xff]
  %v378 = vperm.slane %v249, 0
  %v379 = vperm.slane %v249, 1
  %v380 = vperm.slane %v252, 0
  %v381 = vperm.slane %v252, 1
  %v382 = vperm.slane %v255, 0
  %v383 = vperm.slane %v255, 1
  %v384 = vperm.slane %v258, 0
  %v385 = vperm.slane %v258, 1
  %v386 = vperm.slane %v261, 0
  %v387 = vperm.slane %v261, 1
  %v388 = vperm.slane %v264, 0
  %v389 = vperm.slane %v264, 1
  %v390 = vperm.slane %v267, 0
  %v391 = vperm.slane %v267, 1
  %v392 = vperm.slane %v270, 0
  %v393 = vperm.slane %v270, 1
  %v394 = vperm.slane %v271, 0
  %v395 = vperm.slane %v271, 1
  %v396 = vperm.slane %v273, 0
  %v397 = vperm.slane %v273, 1
  %v398 = vperm.slane %v275, 0
  %v399 = vperm.slane %v275, 1
  %v400 = vperm.slane %v277, 0
  %v401 = vperm.slane %v277, 1
  %v402 = vperm.slane %v279, 0
  %v403 = vperm.slane %v279, 1
  %v404 = vperm.slane %v281, 0
  %v405 = vperm.slane %v281, 1
  %v406 = vperm.slane %v283, 0
  %v407 = vperm.slane %v283, 1
  %v408 = vperm.slane %v285, 0
  %v409 = vperm.slane %v285, 1
  %v410 = vperm.slane %v286, 0
  %v411 = vperm.slane %v286, 1
  %v412 = vperm.slane %v288, 0
  %v413 = vperm.slane %v288, 1
  %v414 = vperm.slane %v290, 0
  %v415 = vperm.slane %v290, 1
  %v416 = vperm.slane %v292, 0
  %v417 = vperm.slane %v292, 1
  %v418 = vperm.slane %v294, 0
  %v419 = vperm.slane %v294, 1
  %v420 = vperm.slane %v296, 0
  %v421 = vperm.slane %v296, 1
  %v422 = vperm.slane %v298, 0
  %v423 = vperm.slane %v298, 1
  %v424 = vperm.slane %v300, 0
  %v425 = vperm.slane %v300, 1
  %v426 = vperm.slane %v301, 0
  %v427 = vperm.slane %v301, 1
  %v428 = vperm.slane %v303, 0
  %v429 = vperm.slane %v303, 1
  %v430 = vperm.slane %v305, 0
  %v431 = vperm.slane %v305, 1
  %v432 = vperm.slane %v307, 0
  %v433 = vperm.slane %v307, 1
  %v434 = vperm.slane %v309, 0
  %v435 = vperm.slane %v309, 1
  %v436 = vperm.slane %v311, 0
  %v437 = vperm.slane %v311, 1
  %v438 = vperm.slane %v313, 0
  %v439 = vperm.slane %v313, 1
  %v440 = vperm.slane %v315, 0
  %v441 = vperm.slane %v315, 1
  %v442 = vperm.slane %v316, 0
  %v443 = vperm.slane %v316, 1
  %v444 = vperm.slane %v318, 0
  %v445 = vperm.slane %v318, 1
  %v446 = vperm.slane %v320, 0
  %v447 = vperm.slane %v320, 1
  %v448 = vperm.slane %v322, 0
  %v449 = vperm.slane %v322, 1
  %v450 = vperm.slane %v324, 0
  %v451 = vperm.slane %v324, 1
  %v452 = vperm.slane %v326, 0
  %v453 = vperm.slane %v326, 1
  %v454 = vperm.slane %v328, 0
  %v455 = vperm.slane %v328, 1
  %v456 = vperm.slane %v330, 0
  %v457 = vperm.slane %v330, 1
  %v458 = vperm.slane %v331, 0
  %v459 = vperm.slane %v331, 1
  %v460 = vperm.slane %v333, 0
  %v461 = vperm.slane %v333, 1
  %v462 = vperm.slane %v335, 0
  %v463 = vperm.slane %v335, 1
  %v464 = vperm.slane %v337, 0
  %v465 = vperm.slane %v337, 1
  %v466 = vperm.slane %v339, 0
  %v467 = vperm.slane %v339, 1
  %v468 = vperm.slane %v341, 0
  %v469 = vperm.slane %v341, 1
  %v470 = vperm.slane %v343, 0
  %v471 = vperm.slane %v343, 1
  %v472 = vperm.slane %v345, 0
  %v473 = vperm.slane %v345, 1
  %v474 = vperm.slane %v346, 0
  %v475 = vperm.slane %v346, 1
  %v476 = vperm.slane %v348, 0
  %v477 = vperm.slane %v348, 1
  %v478 = vperm.slane %v350, 0
  %v479 = vperm.slane %v350, 1
  %v480 = vperm.slane %v352, 0
  %v481 = vperm.slane %v352, 1
  %v482 = vperm.slane %v354, 0
  %v483 = vperm.slane %v354, 1
  %v484 = vperm.slane %v356, 0
  %v485 = vperm.slane %v356, 1
  %v486 = vperm.slane %v358, 0
  %v487 = vperm.slane %v358, 1
  %v488 = vperm.slane %v360, 0
  %v489 = vperm.slane %v360, 1
  %v490 = vperm.slane %v361, 0
  %v491 = vperm.slane %v361, 1
  %v492 = vperm.slane %v363, 0
  %v493 = vperm.slane %v363, 1
  %v494 = vperm.slane %v365, 0
  %v495 = vperm.slane %v365, 1
  %v496 = vperm.slane %v367, 0
  %v497 = vperm.slane %v367, 1
  %v498 = vperm.slane %v369, 0
  %v499 = vperm.slane %v369, 1
  %v500 = vperm.slane %v371, 0
  %v501 = vperm.slane %v371, 1
  %v502 = vperm.slane %v373, 0
  %v503 = vperm.slane %v373, 1
  %v504 = vperm.slane %v375, 0
  %v505 = vperm.slane %v375, 1
  %v634 = vmul.f32 %v378, %v376
  %v635 = vmul.f32 %v379, %v377
  %v636 = vmul.f32 %v380, %v376
  %v637 = vmul.f32 %v381, %v377
  %v638 = vmul.f32 %v382, %v376
  %v639 = vmul.f32 %v383, %v377
  %v640 = vmul.f32 %v384, %v376
  %v641 = vmul.f32 %v385, %v377
  %v642 = vmul.f32 %v386, %v376
  %v643 = vmul.f32 %v387, %v377
  %v644 = vmul.f32 %v388, %v376
  %v645 = vmul.f32 %v389, %v377
  %v646 = vmul.f32 %v390, %v376
  %v647 = vmul.f32 %v391, %v377
  %v648 = vmul.f32 %v392, %v376
  %v649 = vmul.f32 %v393, %v377
  %v650 = vmul.f32 %v394, %v376
  %v651 = vmul.f32 %v395, %v377
  %v652 = vmul.f32 %v396, %v376
  %v653 = vmul.f32 %v397, %v377
  %v654 = vmul.f32 %v398, %v376
  %v655 = vmul.f32 %v399, %v377
  %v656 = vmul.f32 %v400, %v376
  %v657 = vmul.f32 %v401, %v377
  %v658 = vmul.f32 %v402, %v376
  %v659 = vmul.f32 %v403, %v377
  %v660 = vmul.f32 %v404, %v376
  %v661 = vmul.f32 %v405, %v377
  %v662 = vmul.f32 %v406, %v376
  %v663 = vmul.f32 %v407, %v377
  %v664 = vmul.f32 %v408, %v376
  %v665 = vmul.f32 %v409, %v377
  %v666 = vmul.f32 %v410, %v376
  %v667 = vmul.f32 %v411, %v377
  %v668 = vmul.f32 %v412, %v376
  %v669 = vmul.f32 %v413, %v377
  %v670 = vmul.f32 %v414, %v376
  %v671 = vmul.f32 %v415, %v377
  %v672 = vmul.f32 %v416, %v376
  %v673 = vmul.f32 %v417, %v377
  %v674 = vmul.f32 %v418, %v376
  %v675 = vmul.f32 %v419, %v377
  %v676 = vmul.f32 %v420, %v376
  %v677 = vmul.f32 %v421, %v377
  %v678 = vmul.f32 %v422, %v376
  %v679 = vmul.f32 %v423, %v377
  %v680 = vmul.f32 %v424, %v376
  %v681 = vmul.f32 %v425, %v377
  %v682 = vmul.f32 %v426, %v376
  %v683 = vmul.f32 %v427, %v377
  %v684 = vmul.f32 %v428, %v376
  %v685 = vmul.f32 %v429, %v377
  %v686 = vmul.f32 %v430, %v376
  %v687 = vmul.f32 %v431, %v377
  %v688 = vmul.f32 %v432, %v376
  %v689 = vmul.f32 %v433, %v377
  %v690 = vmul.f32 %v434, %v376
  %v691 = vmul.f32 %v435, %v377
  %v692 = vmul.f32 %v436, %v376
  %v693 = vmul.f32 %v437, %v377
  %v694 = vmul.f32 %v438, %v376
  %v695 = vmul.f32 %v439, %v377
  %v696 = vmul.f32 %v440, %v376
  %v697 = vmul.f32 %v441, %v377
  %v698 = vmul.f32 %v442, %v376
  %v699 = vmul.f32 %v443, %v377
  %v700 = vmul.f32 %v444, %v376
  %v701 = vmul.f32 %v445, %v377
  %v702 = vmul.f32 %v446, %v376
  %v703 = vmul.f32 %v447, %v377
  %v704 = vmul.f32 %v448, %v376
  %v705 = vmul.f32 %v449, %v377
  %v706 = vmul.f32 %v450, %v376
  %v707 = vmul.f32 %v451, %v377
  %v708 = vmul.f32 %v452, %v376
  %v709 = vmul.f32 %v453, %v377
  %v710 = vmul.f32 %v454, %v376
  %v711 = vmul.f32 %v455, %v377
  %v712 = vmul.f32 %v456, %v376
  %v713 = vmul.f32 %v457, %v377
  %v714 = vmul.f32 %v458, %v376
  %v715 = vmul.f32 %v459, %v377
  %v716 = vmul.f32 %v460, %v376
  %v717 = vmul.f32 %v461, %v377
  %v718 = vmul.f32 %v462, %v376
  %v719 = vmul.f32 %v463, %v377
  %v720 = vmul.f32 %v464, %v376
  %v721 = vmul.f32 %v465, %v377
  %v722 = vmul.f32 %v466, %v376
  %v723 = vmul.f32 %v467, %v377
  %v724 = vmul.f32 %v468, %v376
  %v725 = vmul.f32 %v469, %v377
  %v726 = vmul.f32 %v470, %v376
  %v727 = vmul.f32 %v471, %v377
  %v728 = vmul.f32 %v472, %v376
  %v729 = vmul.f32 %v473, %v377
  %v730 = vmul.f32 %v474, %v376
  %v731 = vmul.f32 %v475, %v377
  %v732 = vmul.f32 %v476, %v376
  %v733 = vmul.f32 %v477, %v377
  %v734 = vmul.f32 %v478, %v376
  %v735 = vmul.f32 %v479, %v377
  %v736 = vmul.f32 %v480, %v376
  %v737 = vmul.f32 %v481, %v377
  %v738 = vmul.f32 %v482, %v376
  %v739 = vmul.f32 %v483, %v377
  %v740 = vmul.f32 %v484, %v376
  %v741 = vmul.f32 %v485, %v377
  %v742 = vmul.f32 %v486, %v376
  %v743 = vmul.f32 %v487, %v377
  %v744 = vmul.f32 %v488, %v376
  %v745 = vmul.f32 %v489, %v377
  %v746 = vmul.f32 %v490, %v376
  %v747 = vmul.f32 %v491, %v377
  %v748 = vmul.f32 %v492, %v376
  %v749 = vmul.f32 %v493, %v377
  %v750 = vmul.f32 %v494, %v376
  %v751 = vmul.f32 %v495, %v377
  %v752 = vmul.f32 %v496, %v376
  %v753 = vmul.f32 %v497, %v377
  %v754 = vmul.f32 %v498, %v376
  %v755 = vmul.f32 %v499, %v377
  %v756 = vmul.f32 %v500, %v376
  %v757 = vmul.f32 %v501, %v377
  %v758 = vmul.f32 %v502, %v376
  %v759 = vmul.f32 %v503, %v377
  %v760 = vmul.f32 %v504, %v376
  %v761 = vmul.f32 %v505, %v377
  %v762 = vmul.f32 %v634, 1.442695
  %v763 = vpow.pop %v762
  %v764 = vmul.f32 %v635, 1.442695
  %v765 = vpow.pop %v764
  %v766 = vmul.f32 %v636, 1.442695
  %v767 = vpow.pop %v766
  %v768 = vmul.f32 %v637, 1.442695
  %v769 = vpow.pop %v768
  %v770 = vmul.f32 %v638, 1.442695
  %v771 = vpow.pop %v770
  %v772 = vmul.f32 %v639, 1.442695
  %v773 = vpow.pop %v772
  %v774 = vmul.f32 %v640, 1.442695
  %v775 = vpow.pop %v774
  %v776 = vmul.f32 %v641, 1.442695
  %v777 = vpow.pop %v776
  %v778 = vmul.f32 %v642, 1.442695
  %v779 = vpow.pop %v778
  %v780 = vmul.f32 %v643, 1.442695
  %v781 = vpow.pop %v780
  %v782 = vmul.f32 %v644, 1.442695
  %v783 = vpow.pop %v782
  %v784 = vmul.f32 %v645, 1.442695
  %v785 = vpow.pop %v784
  %v786 = vmul.f32 %v646, 1.442695
  %v787 = vpow.pop %v786
  %v788 = vmul.f32 %v647, 1.442695
  %v789 = vpow.pop %v788
  %v790 = vmul.f32 %v648, 1.442695
  %v791 = vpow.pop %v790
  %v792 = vmul.f32 %v649, 1.442695
  %v793 = vpow.pop %v792
  %v794 = vmul.f32 %v650, 1.442695
  %v795 = vpow.pop %v794
  %v796 = vmul.f32 %v651, 1.442695
  %v797 = vpow.pop %v796
  %v798 = vmul.f32 %v652, 1.442695
  %v799 = vpow.pop %v798
  %v800 = vmul.f32 %v653, 1.442695
  %v801 = vpow.pop %v800
  %v802 = vmul.f32 %v654, 1.442695
  %v803 = vpow.pop %v802
  %v804 = vmul.f32 %v655, 1.442695
  %v805 = vpow.pop %v804
  %v806 = vmul.f32 %v656, 1.442695
  %v807 = vpow.pop %v806
  %v808 = vmul.f32 %v657, 1.442695
  %v809 = vpow.pop %v808
  %v810 = vmul.f32 %v658, 1.442695
  %v811 = vpow.pop %v810
  %v812 = vmul.f32 %v659, 1.442695
  %v813 = vpow.pop %v812
  %v814 = vmul.f32 %v660, 1.442695
  %v815 = vpow.pop %v814
  %v816 = vmul.f32 %v661, 1.442695
  %v817 = vpow.pop %v816
  %v818 = vmul.f32 %v662, 1.442695
  %v819 = vpow.pop %v818
  %v820 = vmul.f32 %v663, 1.442695
  %v821 = vpow.pop %v820
  %v822 = vmul.f32 %v664, 1.442695
  %v823 = vpow.pop %v822
  %v824 = vmul.f32 %v665, 1.442695
  %v825 = vpow.pop %v824
  %v826 = vmul.f32 %v666, 1.442695
  %v827 = vpow.pop %v826
  %v828 = vmul.f32 %v667, 1.442695
  %v829 = vpow.pop %v828
  %v830 = vmul.f32 %v668, 1.442695
  %v831 = vpow.pop %v830
  %v832 = vmul.f32 %v669, 1.442695
  %v833 = vpow.pop %v832
  %v834 = vmul.f32 %v670, 1.442695
  %v835 = vpow.pop %v834
  %v836 = vmul.f32 %v671, 1.442695
  %v837 = vpow.pop %v836
  %v838 = vmul.f32 %v672, 1.442695
  %v839 = vpow.pop %v838
  %v840 = vmul.f32 %v673, 1.442695
  %v841 = vpow.pop %v840
  %v842 = vmul.f32 %v674, 1.442695
  %v843 = vpow.pop %v842
  %v844 = vmul.f32 %v675, 1.442695
  %v845 = vpow.pop %v844
  %v846 = vmul.f32 %v676, 1.442695
  %v847 = vpow.pop %v846
  %v848 = vmul.f32 %v677, 1.442695
  %v849 = vpow.pop %v848
  %v850 = vmul.f32 %v678, 1.442695
  %v851 = vpow.pop %v850
  %v852 = vmul.f32 %v679, 1.442695
  %v853 = vpow.pop %v852
  %v854 = vmul.f32 %v680, 1.442695
  %v855 = vpow.pop %v854
  %v856 = vmul.f32 %v681, 1.442695
  %v857 = vpow.pop %v856
  %v858 = vmul.f32 %v682, 1.442695
  %v859 = vpow.pop %v858
  %v860 = vmul.f32 %v683, 1.442695
  %v861 = vpow.pop %v860
  %v862 = vmul.f32 %v684, 1.442695
  %v863 = vpow.pop %v862
  %v864 = vmul.f32 %v685, 1.442695
  %v865 = vpow.pop %v864
  %v866 = vmul.f32 %v686, 1.442695
  %v867 = vpow.pop %v866
  %v868 = vmul.f32 %v687, 1.442695
  %v869 = vpow.pop %v868
  %v870 = vmul.f32 %v688, 1.442695
  %v871 = vpow.pop %v870
  %v872 = vmul.f32 %v689, 1.442695
  %v873 = vpow.pop %v872
  %v874 = vmul.f32 %v690, 1.442695
  %v875 = vpow.pop %v874
  %v876 = vmul.f32 %v691, 1.442695
  %v877 = vpow.pop %v876
  %v878 = vmul.f32 %v692, 1.442695
  %v879 = vpow.pop %v878
  %v880 = vmul.f32 %v693, 1.442695
  %v881 = vpow.pop %v880
  %v882 = vmul.f32 %v694, 1.442695
  %v883 = vpow.pop %v882
  %v884 = vmul.f32 %v695, 1.442695
  %v885 = vpow.pop %v884
  %v886 = vmul.f32 %v696, 1.442695
  %v887 = vpow.pop %v886
  %v888 = vmul.f32 %v697, 1.442695
  %v889 = vpow.pop %v888
  %v890 = vmul.f32 %v698, 1.442695
  %v891 = vpow.pop %v890
  %v892 = vmul.f32 %v699, 1.442695
  %v893 = vpow.pop %v892
  %v894 = vmul.f32 %v700, 1.442695
  %v895 = vpow.pop %v894
  %v896 = vmul.f32 %v701, 1.442695
  %v897 = vpow.pop %v896
  %v898 = vmul.f32 %v702, 1.442695
  %v899 = vpow.pop %v898
  %v900 = vmul.f32 %v703, 1.442695
  %v901 = vpow.pop %v900
  %v902 = vmul.f32 %v704, 1.442695
  %v903 = vpow.pop %v902
  %v904 = vmul.f32 %v705, 1.442695
  %v905 = vpow.pop %v904
  %v906 = vmul.f32 %v706, 1.442695
  %v907 = vpow.pop %v906
  %v908 = vmul.f32 %v707, 1.442695
  %v909 = vpow.pop %v908
  %v910 = vmul.f32 %v708, 1.442695
  %v911 = vpow.pop %v910
  %v912 = vmul.f32 %v709, 1.442695
  %v913 = vpow.pop %v912
  %v914 = vmul.f32 %v710, 1.442695
  %v915 = vpow.pop %v914
  %v916 = vmul.f32 %v711, 1.442695
  %v917 = vpow.pop %v916
  %v918 = vmul.f32 %v712, 1.442695
  %v919 = vpow.pop %v918
  %v920 = vmul.f32 %v713, 1.442695
  %v921 = vpow.pop %v920
  %v922 = vmul.f32 %v714, 1.442695
  %v923 = vpow.pop %v922
  %v924 = vmul.f32 %v715, 1.442695
  %v925 = vpow.pop %v924
  %v926 = vmul.f32 %v716, 1.442695
  %v927 = vpow.pop %v926
  %v928 = vmul.f32 %v717, 1.442695
  %v929 = vpow.pop %v928
  %v930 = vmul.f32 %v718, 1.442695
  %v931 = vpow.pop %v930
  %v932 = vmul.f32 %v719, 1.442695
  %v933 = vpow.pop %v932
  %v934 = vmul.f32 %v720, 1.442695
  %v935 = vpow.pop %v934
  %v936 = vmul.f32 %v721, 1.442695
  %v937 = vpow.pop %v936
  %v938 = vmul.f32 %v722, 1.442695
  %v939 = vpow.pop %v938
  %v940 = vmul.f32 %v723, 1.442695
  %v941 = vpow.pop %v940
  %v942 = vmul.f32 %v724, 1.442695
  %v943 = vpow.pop %v942
  %v944 = vmul.f32 %v725, 1.442695
  %v945 = vpow.pop %v944
  %v946 = vmul.f32 %v726, 1.442695
  %v947 = vpow.pop %v946
  %v948 = vmul.f32 %v727, 1.442695
  %v949 = vpow.pop %v948
  %v950 = vmul.f32 %v728, 1.442695
  %v951 = vpow.pop %v950
  %v952 = vmul.f32 %v729, 1.442695
  %v953 = vpow.pop %v952
  %v954 = vmul.f32 %v730, 1.442695
  %v955 = vpow.pop %v954
  %v956 = vmul.f32 %v731, 1.442695
  %v957 = vpow.pop %v956
  %v958 = vmul.f32 %v732, 1.442695
  %v959 = vpow.pop %v958
  %v960 = vmul.f32 %v733, 1.442695
  %v961 = vpow.pop %v960
  %v962 = vmul.f32 %v734, 1.442695
  %v963 = vpow.pop %v962
  %v964 = vmul.f32 %v735, 1.442695
  %v965 = vpow.pop %v964
  %v966 = vmul.f32 %v736, 1.442695
  %v967 = vpow.pop %v966
  %v968 = vmul.f32 %v737, 1.442695
  %v969 = vpow.pop %v968
  %v970 = vmul.f32 %v738, 1.442695
  %v971 = vpow.pop %v970
  %v972 = vmul.f32 %v739, 1.442695
  %v973 = vpow.pop %v972
  %v974 = vmul.f32 %v740, 1.442695
  %v975 = vpow.pop %v974
  %v976 = vmul.f32 %v741, 1.442695
  %v977 = vpow.pop %v976
  %v978 = vmul.f32 %v742, 1.442695
  %v979 = vpow.pop %v978
  %v980 = vmul.f32 %v743, 1.442695
  %v981 = vpow.pop %v980
  %v982 = vmul.f32 %v744, 1.442695
  %v983 = vpow.pop %v982
  %v984 = vmul.f32 %v745, 1.442695
  %v985 = vpow.pop %v984
  %v986 = vmul.f32 %v746, 1.442695
  %v987 = vpow.pop %v986
  %v988 = vmul.f32 %v747, 1.442695
  %v989 = vpow.pop %v988
  %v990 = vmul.f32 %v748, 1.442695
  %v991 = vpow.pop %v990
  %v992 = vmul.f32 %v749, 1.442695
  %v993 = vpow.pop %v992
  %v994 = vmul.f32 %v750, 1.442695
  %v995 = vpow.pop %v994
  %v996 = vmul.f32 %v751, 1.442695
  %v997 = vpow.pop %v996
  %v998 = vmul.f32 %v752, 1.442695
  %v999 = vpow.pop %v998
  %v1000 = vmul.f32 %v753, 1.442695
  %v1001 = vpow.pop %v1000
  %v1002 = vmul.f32 %v754, 1.442695
  %v1003 = vpow.pop %v1002
  %v1004 = vmul.f32 %v755, 1.442695
  %v1005 = vpow.pop %v1004
  %v1006 = vmul.f32 %v756, 1.442695
  %v1007 = vpow.pop %v1006
  %v1008 = vmul.f32 %v757, 1.442695
  %v1009 = vpow.pop %v1008
  %v1010 = vmul.f32 %v758, 1.442695
  %v1011 = vpow.pop %v1010
  %v1012 = vmul.f32 %v759, 1.442695
  %v1013 = vpow.pop %v1012
  %v1014 = vmul.f32 %v760, 1.442695
  %v1015 = vpow.pop %v1014
  %v1016 = vmul.f32 %v761, 1.442695
  %v1017 = vpow.pop %v1016
  %1018 = vst [vmem:[#allocation2] sm:$0xff] %v763
  %1019 = vst [vmem:[#allocation2 + $0x8] sm:$0xff] %v765
  %1020 = vst [vmem:[#allocation2 + $0x10] sm:$0xff] %v767
  %1021 = vst [vmem:[#allocation2 + $0x18] sm:$0xff] %v769
  %1022 = vst [vmem:[#allocation2 + $0x20] sm:$0xff] %v771
  %1023 = vst [vmem:[#allocation2 + $0x28] sm:$0xff] %v773
  %1024 = vst [vmem:[#allocation2 + $0x30] sm:$0xff] %v775
  %1025 = vst [vmem:[#allocation2 + $0x38] sm:$0xff] %v777
  %1026 = vst [vmem:[#allocation2 + $0x40] sm:$0xff] %v779
  %1027 = vst [vmem:[#allocation2 + $0x48] sm:$0xff] %v781
  %1028 = vst [vmem:[#allocation2 + $0x50] sm:$0xff] %v783
  %1029 = vst [vmem:[#allocation2 + $0x58] sm:$0xff] %v785
  %1030 = vst [vmem:[#allocation2 + $0x60] sm:$0xff] %v787
  %1031 = vst [vmem:[#allocation2 + $0x68] sm:$0xff] %v789
  %1032 = vst [vmem:[#allocation2 + $0x70] sm:$0xff] %v791
  %1033 = vst [vmem:[#allocation2 + $0x78] sm:$0xff] %v793
  %1034 = vst [vmem:[#allocation2 + $0x80] sm:$0xff] %v795
  %1035 = vst [vmem:[#allocation2 + $0x88] sm:$0xff] %v797
  %1036 = vst [vmem:[#allocation2 + $0x90] sm:$0xff] %v799
  %1037 = vst [vmem:[#allocation2 + $0x98] sm:$0xff] %v801
  %1038 = vst [vmem:[#allocation2 + $0xa0] sm:$0xff] %v803
  %1039 = vst [vmem:[#allocation2 + $0xa8] sm:$0xff] %v805
  %1040 = vst [vmem:[#allocation2 + $0xb0] sm:$0xff] %v807
  %1041 = vst [vmem:[#allocation2 + $0xb8] sm:$0xff] %v809
  %1042 = vst [vmem:[#allocation2 + $0xc0] sm:$0xff] %v811
  %1043 = vst [vmem:[#allocation2 + $0xc8] sm:$0xff] %v813
  %1044 = vst [vmem:[#allocation2 + $0xd0] sm:$0xff] %v815
  %1045 = vst [vmem:[#allocation2 + $0xd8] sm:$0xff] %v817
  %1046 = vst [vmem:[#allocation2 + $0xe0] sm:$0xff] %v819
  %1047 = vst [vmem:[#allocation2 + $0xe8] sm:$0xff] %v821
  %1048 = vst [vmem:[#allocation2 + $0xf0] sm:$0xff] %v823
  %1049 = vst [vmem:[#allocation2 + $0xf8] sm:$0xff] %v825
  %1050 = vst [vmem:[#allocation2 + $0x100] sm:$0xff] %v827
  %1051 = vst [vmem:[#allocation2 + $0x108] sm:$0xff] %v829
  %1052 = vst [vmem:[#allocation2 + $0x110] sm:$0xff] %v831
  %1053 = vst [vmem:[#allocation2 + $0x118] sm:$0xff] %v833
  %1054 = vst [vmem:[#allocation2 + $0x120] sm:$0xff] %v835
  %1055 = vst [vmem:[#allocation2 + $0x128] sm:$0xff] %v837
  %1056 = vst [vmem:[#allocation2 + $0x130] sm:$0xff] %v839
  %1057 = vst [vmem:[#allocation2 + $0x138] sm:$0xff] %v841
  %1058 = vst [vmem:[#allocation2 + $0x140] sm:$0xff] %v843
  %1059 = vst [vmem:[#allocation2 + $0x148] sm:$0xff] %v845
  %1060 = vst [vmem:[#allocation2 + $0x150] sm:$0xff] %v847
  %1061 = vst [vmem:[#allocation2 + $0x158] sm:$0xff] %v849
  %1062 = vst [vmem:[#allocation2 + $0x160] sm:$0xff] %v851
  %1063 = vst [vmem:[#allocation2 + $0x168] sm:$0xff] %v853
  %1064 = vst [vmem:[#allocation2 + $0x170] sm:$0xff] %v855
  %1065 = vst [vmem:[#allocation2 + $0x178] sm:$0xff] %v857
  %1066 = vst [vmem:[#allocation2 + $0x180] sm:$0xff] %v859
  %1067 = vst [vmem:[#allocation2 + $0x188] sm:$0xff] %v861
  %1068 = vst [vmem:[#allocation2 + $0x190] sm:$0xff] %v863
  %1069 = vst [vmem:[#allocation2 + $0x198] sm:$0xff] %v865
  %1070 = vst [vmem:[#allocation2 + $0x1a0] sm:$0xff] %v867
  %1071 = vst [vmem:[#allocation2 + $0x1a8] sm:$0xff] %v869
  %1072 = vst [vmem:[#allocation2 + $0x1b0] sm:$0xff] %v871
  %1073 = vst [vmem:[#allocation2 + $0x1b8] sm:$0xff] %v873
  %1074 = vst [vmem:[#allocation2 + $0x1c0] sm:$0xff] %v875
  %1075 = vst [vmem:[#allocation2 + $0x1c8] sm:$0xff] %v877
  %1076 = vst [vmem:[#allocation2 + $0x1d0] sm:$0xff] %v879
  %1077 = vst [vmem:[#allocation2 + $0x1d8] sm:$0xff] %v881
  %1078 = vst [vmem:[#allocation2 + $0x1e0] sm:$0xff] %v883
  %1079 = vst [vmem:[#allocation2 + $0x1e8] sm:$0xff] %v885
  %1080 = vst [vmem:[#allocation2 + $0x1f0] sm:$0xff] %v887
  %1081 = vst [vmem:[#allocation2 + $0x1f8] sm:$0xff] %v889
  %1082 = vst [vmem:[#allocation2 + $0x200] sm:$0xff] %v891
  %1083 = vst [vmem:[#allocation2 + $0x208] sm:$0xff] %v893
  %1084 = vst [vmem:[#allocation2 + $0x210] sm:$0xff] %v895
  %1085 = vst [vmem:[#allocation2 + $0x218] sm:$0xff] %v897
  %1086 = vst [vmem:[#allocation2 + $0x220] sm:$0xff] %v899
  %1087 = vst [vmem:[#allocation2 + $0x228] sm:$0xff] %v901
  %1088 = vst [vmem:[#allocation2 + $0x230] sm:$0xff] %v903
  %1089 = vst [vmem:[#allocation2 + $0x238] sm:$0xff] %v905
  %1090 = vst [vmem:[#allocation2 + $0x240] sm:$0xff] %v907
  %1091 = vst [vmem:[#allocation2 + $0x248] sm:$0xff] %v909
  %1092 = vst [vmem:[#allocation2 + $0x250] sm:$0xff] %v911
  %1093 = vst [vmem:[#allocation2 + $0x258] sm:$0xff] %v913
  %1094 = vst [vmem:[#allocation2 + $0x260] sm:$0xff] %v915
  %1095 = vst [vmem:[#allocation2 + $0x268] sm:$0xff] %v917
  %1096 = vst [vmem:[#allocation2 + $0x270] sm:$0xff] %v919
  %1097 = vst [vmem:[#allocation2 + $0x278] sm:$0xff] %v921
  %1098 = vst [vmem:[#allocation2 + $0x280] sm:$0xff] %v923
  %1099 = vst [vmem:[#allocation2 + $0x288] sm:$0xff] %v925
  %1100 = vst [vmem:[#allocation2 + $0x290] sm:$0xff] %v927
  %1101 = vst [vmem:[#allocation2 + $0x298] sm:$0xff] %v929
  %1102 = vst [vmem:[#allocation2 + $0x2a0] sm:$0xff] %v931
  %1103 = vst [vmem:[#allocation2 + $0x2a8] sm:$0xff] %v933
  %1104 = vst [vmem:[#allocation2 + $0x2b0] sm:$0xff] %v935
  %1105 = vst [vmem:[#allocation2 + $0x2b8] sm:$0xff] %v937
  %1106 = vst [vmem:[#allocation2 + $0x2c0] sm:$0xff] %v939
  %1107 = vst [vmem:[#allocation2 + $0x2c8] sm:$0xff] %v941
  %1108 = vst [vmem:[#allocation2 + $0x2d0] sm:$0xff] %v943
  %1109 = vst [vmem:[#allocation2 + $0x2d8] sm:$0xff] %v945
  %1110 = vst [vmem:[#allocation2 + $0x2e0] sm:$0xff] %v947
  %1111 = vst [vmem:[#allocation2 + $0x2e8] sm:$0xff] %v949
  %1112 = vst [vmem:[#allocation2 + $0x2f0] sm:$0xff] %v951
  %1113 = vst [vmem:[#allocation2 + $0x2f8] sm:$0xff] %v953
  %1114 = vst [vmem:[#allocation2 + $0x300] sm:$0xff] %v955
  %1115 = vst [vmem:[#allocation2 + $0x308] sm:$0xff] %v957
  %1116 = vst [vmem:[#allocation2 + $0x310] sm:$0xff] %v959
  %1117 = vst [vmem:[#allocation2 + $0x318] sm:$0xff] %v961
  %1118 = vst [vmem:[#allocation2 + $0x320] sm:$0xff] %v963
  %1119 = vst [vmem:[#allocation2 + $0x328] sm:$0xff] %v965
  %1120 = vst [vmem:[#allocation2 + $0x330] sm:$0xff] %v967
  %1121 = vst [vmem:[#allocation2 + $0x338] sm:$0xff] %v969
  %1122 = vst [vmem:[#allocation2 + $0x340] sm:$0xff] %v971
  %1123 = vst [vmem:[#allocation2 + $0x348] sm:$0xff] %v973
  %1124 = vst [vmem:[#allocation2 + $0x350] sm:$0xff] %v975
  %1125 = vst [vmem:[#allocation2 + $0x358] sm:$0xff] %v977
  %1126 = vst [vmem:[#allocation2 + $0x360] sm:$0xff] %v979
  %1127 = vst [vmem:[#allocation2 + $0x368] sm:$0xff] %v981
  %1128 = vst [vmem:[#allocation2 + $0x370] sm:$0xff] %v983
  %1129 = vst [vmem:[#allocation2 + $0x378] sm:$0xff] %v985
  %1130 = vst [vmem:[#allocation2 + $0x380] sm:$0xff] %v987
  %1131 = vst [vmem:[#allocation2 + $0x388] sm:$0xff] %v989
  %1132 = vst [vmem:[#allocation2 + $0x390] sm:$0xff] %v991
  %1133 = vst [vmem:[#allocation2 + $0x398] sm:$0xff] %v993
  %1134 = vst [vmem:[#allocation2 + $0x3a0] sm:$0xff] %v995
  %1135 = vst [vmem:[#allocation2 + $0x3a8] sm:$0xff] %v997
  %1136 = vst [vmem:[#allocation2 + $0x3b0] sm:$0xff] %v999
  %1137 = vst [vmem:[#allocation2 + $0x3b8] sm:$0xff] %v1001
  %1138 = vst [vmem:[#allocation2 + $0x3c0] sm:$0xff] %v1003
  %1139 = vst [vmem:[#allocation2 + $0x3c8] sm:$0xff] %v1005
  %1140 = vst [vmem:[#allocation2 + $0x3d0] sm:$0xff] %v1007
  %1141 = vst [vmem:[#allocation2 + $0x3d8] sm:$0xff] %v1009
  %1142 = vst [vmem:[#allocation2 + $0x3e0] sm:$0xff] %v1011
  %1143 = vst [vmem:[#allocation2 + $0x3e8] sm:$0xff] %v1013
  %1144 = vst [vmem:[#allocation2 + $0x3f0] sm:$0xff] %v1015
  %1145 = vst [vmem:[#allocation2 + $0x3f8] sm:$0xff] %v1017
  %v1162 = vrot.slane %v209, 7
  %v1163 = vrot.slane %v211, 7
  %v1164 = vrot.slane %v213, 7
  %v1165 = vrot.slane %v215, 7
  %v1166 = vrot.slane %v217, 7
  %v1167 = vrot.slane %v219, 7
  %v1168 = vrot.slane %v221, 7
  %v1169 = vrot.slane %v223, 7
  %v1170 = vsel %vm248, %v208, %v1162
  %v1171 = vsel %vm250, %v208, %v1162
  %v1172 = vrot.slane %v1171, 1
  %v1173 = vsel %vm253, %v208, %v1162
  %v1174 = vrot.slane %v1173, 2
  %v1175 = vsel %vm256, %v208, %v1162
  %v1176 = vrot.slane %v1175, 3
  %v1177 = vsel %vm259, %v208, %v1162
  %v1178 = vrot.slane %v1177, 4
  %v1179 = vsel %vm262, %v208, %v1162
  %v1180 = vrot.slane %v1179, 5
  %v1181 = vsel %vm265, %v208, %v1162
  %v1182 = vrot.slane %v1181, 6
  %v1183 = vsel %vm268, %v1162, %v208
  %v1184 = vrot.slane %v1183, 7
  %v1185 = vsel %vm248, %v210, %v1163
  %v1186 = vsel %vm250, %v210, %v1163
  %v1187 = vrot.slane %v1186, 1
  %v1188 = vsel %vm253, %v210, %v1163
  %v1189 = vrot.slane %v1188, 2
  %v1190 = vsel %vm256, %v210, %v1163
  %v1191 = vrot.slane %v1190, 3
  %v1192 = vsel %vm259, %v210, %v1163
  %v1193 = vrot.slane %v1192, 4
  %v1194 = vsel %vm262, %v210, %v1163
  %v1195 = vrot.slane %v1194, 5
  %v1196 = vsel %vm265, %v210, %v1163
  %v1197 = vrot.slane %v1196, 6
  %v1198 = vsel %vm268, %v1163, %v210
  %v1199 = vrot.slane %v1198, 7
  %v1200 = vsel %vm248, %v212, %v1164
  %v1201 = vsel %vm250, %v212, %v1164
  %v1202 = vrot.slane %v1201, 1
  %v1203 = vsel %vm253, %v212, %v1164
  %v1204 = vrot.slane %v1203, 2
  %v1205 = vsel %vm256, %v212, %v1164
  %v1206 = vrot.slane %v1205, 3
  %v1207 = vsel %vm259, %v212, %v1164
  %v1208 = vrot.slane %v1207, 4
  %v1209 = vsel %vm262, %v212, %v1164
  %v1210 = vrot.slane %v1209, 5
  %v1211 = vsel %vm265, %v212, %v1164
  %v1212 = vrot.slane %v1211, 6
  %v1213 = vsel %vm268, %v1164, %v212
  %v1214 = vrot.slane %v1213, 7
  %v1215 = vsel %vm248, %v214, %v1165
  %v1216 = vsel %vm250, %v214, %v1165
  %v1217 = vrot.slane %v1216, 1
  %v1218 = vsel %vm253, %v214, %v1165
  %v1219 = vrot.slane %v1218, 2
  %v1220 = vsel %vm256, %v214, %v1165
  %v1221 = vrot.slane %v1220, 3
  %v1222 = vsel %vm259, %v214, %v1165
  %v1223 = vrot.slane %v1222, 4
  %v1224 = vsel %vm262, %v214, %v1165
  %v1225 = vrot.slane %v1224, 5
  %v1226 = vsel %vm265, %v214, %v1165
  %v1227 = vrot.slane %v1226, 6
  %v1228 = vsel %vm268, %v1165, %v214
  %v1229 = vrot.slane %v1228, 7
  %v1230 = vsel %vm248, %v216, %v1166
  %v1231 = vsel %vm250, %v216, %v1166
  %v1232 = vrot.slane %v1231, 1
  %v1233 = vsel %vm253, %v216, %v1166
  %v1234 = vrot.slane %v1233, 2
  %v1235 = vsel %vm256, %v216, %v1166
  %v1236 = vrot.slane %v1235, 3
  %v1237 = vsel %vm259, %v216, %v1166
  %v1238 = vrot.slane %v1237, 4
  %v1239 = vsel %vm262, %v216, %v1166
  %v1240 = vrot.slane %v1239, 5
  %v1241 = vsel %vm265, %v216, %v1166
  %v1242 = vrot.slane %v1241, 6
  %v1243 = vsel %vm268, %v1166, %v216
  %v1244 = vrot.slane %v1243, 7
  %v1245 = vsel %vm248, %v218, %v1167
  %v1246 = vsel %vm250, %v218, %v1167
  %v1247 = vrot.slane %v1246, 1
  %v1248 = vsel %vm253, %v218, %v1167
  %v1249 = vrot.slane %v1248, 2
  %v1250 = vsel %vm256, %v218, %v1167
  %v1251 = vrot.slane %v1250, 3
  %v1252 = vsel %vm259, %v218, %v1167
  %v1253 = vrot.slane %v1252, 4
  %v1254 = vsel %vm262, %v218, %v1167
  %v1255 = vrot.slane %v1254, 5
  %v1256 = vsel %vm265, %v218, %v1167
  %v1257 = vrot.slane %v1256, 6
  %v1258 = vsel %vm268, %v1167, %v218
  %v1259 = vrot.slane %v1258, 7
  %v1260 = vsel %vm248, %v220, %v1168
  %v1261 = vsel %vm250, %v220, %v1168
  %v1262 = vrot.slane %v1261, 1
  %v1263 = vsel %vm253, %v220, %v1168
  %v1264 = vrot.slane %v1263, 2
  %v1265 = vsel %vm256, %v220, %v1168
  %v1266 = vrot.slane %v1265, 3
  %v1267 = vsel %vm259, %v220, %v1168
  %v1268 = vrot.slane %v1267, 4
  %v1269 = vsel %vm262, %v220, %v1168
  %v1270 = vrot.slane %v1269, 5
  %v1271 = vsel %vm265, %v220, %v1168
  %v1272 = vrot.slane %v1271, 6
  %v1273 = vsel %vm268, %v1168, %v220
  %v1274 = vrot.slane %v1273, 7
  %v1275 = vsel %vm248, %v222, %v1169
  %v1276 = vsel %vm250, %v222, %v1169
  %v1277 = vrot.slane %v1276, 1
  %v1278 = vsel %vm253, %v222, %v1169
  %v1279 = vrot.slane %v1278, 2
  %v1280 = vsel %vm256, %v222, %v1169
  %v1281 = vrot.slane %v1280, 3
  %v1282 = vsel %vm259, %v222, %v1169
  %v1283 = vrot.slane %v1282, 4
  %v1284 = vsel %vm262, %v222, %v1169
  %v1285 = vrot.slane %v1284, 5
  %v1286 = vsel %vm265, %v222, %v1169
  %v1287 = vrot.slane %v1286, 6
  %v1288 = vsel %vm268, %v1169, %v222
  %v1289 = vrot.slane %v1288, 7
  %v1290 = vld [vmem:[%s5] sm:$0xff]
  %v1291 = vld [vmem:[%s5 + $0x8] sm:$0xff]
  %v1292 = vld [vmem:[%s5 + $0x10] sm:$0xff]
  %v1293 = vld [vmem:[%s5 + $0x18] sm:$0xff]
  %v1294 = vld [vmem:[%s5 + $0x20] sm:$0xff]
  %v1295 = vld [vmem:[%s5 + $0x28] sm:$0xff]
  %v1296 = vld [vmem:[%s5 + $0x30] sm:$0xff]
  %v1297 = vld [vmem:[%s5 + $0x38] sm:$0xff]
  %v1298 = vld [vmem:[%s5 + $0x40] sm:$0xff]
  %v1299 = vld [vmem:[%s5 + $0x48] sm:$0xff]
  %v1300 = vld [vmem:[%s5 + $0x50] sm:$0xff]
  %v1301 = vld [vmem:[%s5 + $0x58] sm:$0xff]
  %v1302 = vld [vmem:[%s5 + $0x60] sm:$0xff]
  %v1303 = vld [vmem:[%s5 + $0x68] sm:$0xff]
  %v1304 = vld [vmem:[%s5 + $0x70] sm:$0xff]
  %v1305 = vld [vmem:[%s5 + $0x78] sm:$0xff]
  %v1306 = vld [vmem:[%s5 + $0x80] sm:$0xff]
  %v1307 = vld [vmem:[%s5 + $0x88] sm:$0xff]
  %v1308 = vld [vmem:[%s5 + $0x90] sm:$0xff]
  %v1309 = vld [vmem:[%s5 + $0x98] sm:$0xff]
  %v1310 = vld [vmem:[%s5 + $0xa0] sm:$0xff]
  %v1311 = vld [vmem:[%s5 + $0xa8] sm:$0xff]
  %v1312 = vld [vmem:[%s5 + $0xb0] sm:$0xff]
  %v1313 = vld [vmem:[%s5 + $0xb8] sm:$0xff]
  %v1314 = vld [vmem:[%s5 + $0xc0] sm:$0xff]
  %v1315 = vld [vmem:[%s5 + $0xc8] sm:$0xff]
  %v1316 = vld [vmem:[%s5 + $0xd0] sm:$0xff]
  %v1317 = vld [vmem:[%s5 + $0xd8] sm:$0xff]
  %v1318 = vld [vmem:[%s5 + $0xe0] sm:$0xff]
  %v1319 = vld [vmem:[%s5 + $0xe8] sm:$0xff]
  %v1320 = vld [vmem:[%s5 + $0xf0] sm:$0xff]
  %v1321 = vld [vmem:[%s5 + $0xf8] sm:$0xff]
  %v1322 = vld [vmem:[%s5 + $0x100] sm:$0xff]
  %v1323 = vld [vmem:[%s5 + $0x108] sm:$0xff]
  %v1324 = vld [vmem:[%s5 + $0x110] sm:$0xff]
  %v1325 = vld [vmem:[%s5 + $0x118] sm:$0xff]
  %v1326 = vld [vmem:[%s5 + $0x120] sm:$0xff]
  %v1327 = vld [vmem:[%s5 + $0x128] sm:$0xff]
  %v1328 = vld [vmem:[%s5 + $0x130] sm:$0xff]
  %v1329 = vld [vmem:[%s5 + $0x138] sm:$0xff]
  %v1330 = vld [vmem:[%s5 + $0x140] sm:$0xff]
  %v1331 = vld [vmem:[%s5 + $0x148] sm:$0xff]
  %v1332 = vld [vmem:[%s5 + $0x150] sm:$0xff]
  %v1333 = vld [vmem:[%s5 + $0x158] sm:$0xff]
  %v1334 = vld [vmem:[%s5 + $0x160] sm:$0xff]
  %v1335 = vld [vmem:[%s5 + $0x168] sm:$0xff]
  %v1336 = vld [vmem:[%s5 + $0x170] sm:$0xff]
  %v1337 = vld [vmem:[%s5 + $0x178] sm:$0xff]
  %v1338 = vld [vmem:[%s5 + $0x180] sm:$0xff]
  %v1339 = vld [vmem:[%s5 + $0x188] sm:$0xff]
  %v1340 = vld [vmem:[%s5 + $0x190] sm:$0xff]
  %v1341 = vld [vmem:[%s5 + $0x198] sm:$0xff]
  %v1342 = vld [vmem:[%s5 + $0x1a0] sm:$0xff]
  %v1343 = vld [vmem:[%s5 + $0x1a8] sm:$0xff]
  %v1344 = vld [vmem:[%s5 + $0x1b0] sm:$0xff]
  %v1345 = vld [vmem:[%s5 + $0x1b8] sm:$0xff]
  %v1346 = vld [vmem:[%s5 + $0x1c0] sm:$0xff]
  %v1347 = vld [vmem:[%s5 + $0x1c8] sm:$0xff]
  %v1348 = vld [vmem:[%s5 + $0x1d0] sm:$0xff]
  %v1349 = vld [vmem:[%s5 + $0x1d8] sm:$0xff]
  %v1350 = vld [vmem:[%s5 + $0x1e0] sm:$0xff]
  %v1351 = vld [vmem:[%s5 + $0x1e8] sm:$0xff]
  %v1352 = vld [vmem:[%s5 + $0x1f0] sm:$0xff]
  %v1353 = vld [vmem:[%s5 + $0x1f8] sm:$0xff]
  %v1354 = vld [vmem:[%s5 + $0x200] sm:$0xff]
  %v1355 = vld [vmem:[%s5 + $0x208] sm:$0xff]
  %v1356 = vld [vmem:[%s5 + $0x210] sm:$0xff]
  %v1357 = vld [vmem:[%s5 + $0x218] sm:$0xff]
  %v1358 = vld [vmem:[%s5 + $0x220] sm:$0xff]
  %v1359 = vld [vmem:[%s5 + $0x228] sm:$0xff]
  %v1360 = vld [vmem:[%s5 + $0x230] sm:$0xff]
  %v1361 = vld [vmem:[%s5 + $0x238] sm:$0xff]
  %v1362 = vld [vmem:[%s5 + $0x240] sm:$0xff]
  %v1363 = vld [vmem:[%s5 + $0x248] sm:$0xff]
  %v1364 = vld [vmem:[%s5 + $0x250] sm:$0xff]
  %v1365 = vld [vmem:[%s5 + $0x258] sm:$0xff]
  %v1366 = vld [vmem:[%s5 + $0x260] sm:$0xff]
  %v1367 = vld [vmem:[%s5 + $0x268] sm:$0xff]
  %v1368 = vld [vmem:[%s5 + $0x270] sm:$0xff]
  %v1369 = vld [vmem:[%s5 + $0x278] sm:$0xff]
  %v1370 = vld [vmem:[%s5 + $0x280] sm:$0xff]
  %v1371 = vld [vmem:[%s5 + $0x288] sm:$0xff]
  %v1372 = vld [vmem:[%s5 + $0x290] sm:$0xff]
  %v1373 = vld [vmem:[%s5 + $0x298] sm:$0xff]
  %v1374 = vld [vmem:[%s5 + $0x2a0] sm:$0xff]
  %v1375 = vld [vmem:[%s5 + $0x2a8] sm:$0xff]
  %v1376 = vld [vmem:[%s5 + $0x2b0] sm:$0xff]
  %v1377 = vld [vmem:[%s5 + $0x2b8] sm:$0xff]
  %v1378 = vld [vmem:[%s5 + $0x2c0] sm:$0xff]
  %v1379 = vld [vmem:[%s5 + $0x2c8] sm:$0xff]
  %v1380 = vld [vmem:[%s5 + $0x2d0] sm:$0xff]
  %v1381 = vld [vmem:[%s5 + $0x2d8] sm:$0xff]
  %v1382 = vld [vmem:[%s5 + $0x2e0] sm:$0xff]
  %v1383 = vld [vmem:[%s5 + $0x2e8] sm:$0xff]
  %v1384 = vld [vmem:[%s5 + $0x2f0] sm:$0xff]
  %v1385 = vld [vmem:[%s5 + $0x2f8] sm:$0xff]
  %v1386 = vld [vmem:[%s5 + $0x300] sm:$0xff]
  %v1387 = vld [vmem:[%s5 + $0x308] sm:$0xff]
  %v1388 = vld [vmem:[%s5 + $0x310] sm:$0xff]
  %v1389 = vld [vmem:[%s5 + $0x318] sm:$0xff]
  %v1390 = vld [vmem:[%s5 + $0x320] sm:$0xff]
  %v1391 = vld [vmem:[%s5 + $0x328] sm:$0xff]
  %v1392 = vld [vmem:[%s5 + $0x330] sm:$0xff]
  %v1393 = vld [vmem:[%s5 + $0x338] sm:$0xff]
  %v1394 = vld [vmem:[%s5 + $0x340] sm:$0xff]
  %v1395 = vld [vmem:[%s5 + $0x348] sm:$0xff]
  %v1396 = vld [vmem:[%s5 + $0x350] sm:$0xff]
  %v1397 = vld [vmem:[%s5 + $0x358] sm:$0xff]
  %v1398 = vld [vmem:[%s5 + $0x360] sm:$0xff]
  %v1399 = vld [vmem:[%s5 + $0x368] sm:$0xff]
  %v1400 = vld [vmem:[%s5 + $0x370] sm:$0xff]
  %v1401 = vld [vmem:[%s5 + $0x378] sm:$0xff]
  %v1402 = vld [vmem:[%s5 + $0x380] sm:$0xff]
  %v1403 = vld [vmem:[%s5 + $0x388] sm:$0xff]
  %v1404 = vld [vmem:[%s5 + $0x390] sm:$0xff]
  %v1405 = vld [vmem:[%s5 + $0x398] sm:$0xff]
  %v1406 = vld [vmem:[%s5 + $0x3a0] sm:$0xff]
  %v1407 = vld [vmem:[%s5 + $0x3a8] sm:$0xff]
  %v1408 = vld [vmem:[%s5 + $0x3b0] sm:$0xff]
  %v1409 = vld [vmem:[%s5 + $0x3b8] sm:$0xff]
  %v1410 = vld [vmem:[%s5 + $0x3c0] sm:$0xff]
  %v1411 = vld [vmem:[%s5 + $0x3c8] sm:$0xff]
  %v1412 = vld [vmem:[%s5 + $0x3d0] sm:$0xff]
  %v1413 = vld [vmem:[%s5 + $0x3d8] sm:$0xff]
  %v1414 = vld [vmem:[%s5 + $0x3e0] sm:$0xff]
  %v1415 = vld [vmem:[%s5 + $0x3e8] sm:$0xff]
  %v1416 = vld [vmem:[%s5 + $0x3f0] sm:$0xff]
  %v1417 = vld [vmem:[%s5 + $0x3f8] sm:$0xff]
  %v1418 = vperm.slane %v1170, 0
  %v1419 = vperm.slane %v1170, 1
  %v1420 = vperm.slane %v1172, 0
  %v1421 = vperm.slane %v1172, 1
  %v1422 = vperm.slane %v1174, 0
  %v1423 = vperm.slane %v1174, 1
  %v1424 = vperm.slane %v1176, 0
  %v1425 = vperm.slane %v1176, 1
  %v1426 = vperm.slane %v1178, 0
  %v1427 = vperm.slane %v1178, 1
  %v1428 = vperm.slane %v1180, 0
  %v1429 = vperm.slane %v1180, 1
  %v1430 = vperm.slane %v1182, 0
  %v1431 = vperm.slane %v1182, 1
  %v1432 = vperm.slane %v1184, 0
  %v1433 = vperm.slane %v1184, 1
  %v1434 = vperm.slane %v1185, 0
  %v1435 = vperm.slane %v1185, 1
  %v1436 = vperm.slane %v1187, 0
  %v1437 = vperm.slane %v1187, 1
  %v1438 = vperm.slane %v1189, 0
  %v1439 = vperm.slane %v1189, 1
  %v1440 = vperm.slane %v1191, 0
  %v1441 = vperm.slane %v1191, 1
  %v1442 = vperm.slane %v1193, 0
  %v1443 = vperm.slane %v1193, 1
  %v1444 = vperm.slane %v1195, 0
  %v1445 = vperm.slane %v1195, 1
  %v1446 = vperm.slane %v1197, 0
  %v1447 = vperm.slane %v1197, 1
  %v1448 = vperm.slane %v1199, 0
  %v1449 = vperm.slane %v1199, 1
  %v1450 = vperm.slane %v1200, 0
  %v1451 = vperm.slane %v1200, 1
  %v1452 = vperm.slane %v1202, 0
  %v1453 = vperm.slane %v1202, 1
  %v1454 = vperm.slane %v1204, 0
  %v1455 = vperm.slane %v1204, 1
  %v1456 = vperm.slane %v1206, 0
  %v1457 = vperm.slane %v1206, 1
  %v1458 = vperm.slane %v1208, 0
  %v1459 = vperm.slane %v1208, 1
  %v1460 = vperm.slane %v1210, 0
  %v1461 = vperm.slane %v1210, 1
  %v1462 = vperm.slane %v1212, 0
  %v1463 = vperm.slane %v1212, 1
  %v1464 = vperm.slane %v1214, 0
  %v1465 = vperm.slane %v1214, 1
  %v1466 = vperm.slane %v1215, 0
  %v1467 = vperm.slane %v1215, 1
  %v1468 = vperm.slane %v1217, 0
  %v1469 = vperm.slane %v1217, 1
  %v1470 = vperm.slane %v1219, 0
  %v1471 = vperm.slane %v1219, 1
  %v1472 = vperm.slane %v1221, 0
  %v1473 = vperm.slane %v1221, 1
  %v1474 = vperm.slane %v1223, 0
  %v1475 = vperm.slane %v1223, 1
  %v1476 = vperm.slane %v1225, 0
  %v1477 = vperm.slane %v1225, 1
  %v1478 = vperm.slane %v1227, 0
  %v1479 = vperm.slane %v1227, 1
  %v1480 = vperm.slane %v1229, 0
  %v1481 = vperm.slane %v1229, 1
  %v1482 = vperm.slane %v1230, 0
  %v1483 = vperm.slane %v1230, 1
  %v1484 = vperm.slane %v1232, 0
  %v1485 = vperm.slane %v1232, 1
  %v1486 = vperm.slane %v1234, 0
  %v1487 = vperm.slane %v1234, 1
  %v1488 = vperm.slane %v1236, 0
  %v1489 = vperm.slane %v1236, 1
  %v1490 = vperm.slane %v1238, 0
  %v1491 = vperm.slane %v1238, 1
  %v1492 = vperm.slane %v1240, 0
  %v1493 = vperm.slane %v1240, 1
  %v1494 = vperm.slane %v1242, 0
  %v1495 = vperm.slane %v1242, 1
  %v1496 = vperm.slane %v1244, 0
  %v1497 = vperm.slane %v1244, 1
  %v1498 = vperm.slane %v1245, 0
  %v1499 = vperm.slane %v1245, 1
  %v1500 = vperm.slane %v1247, 0
  %v1501 = vperm.slane %v1247, 1
  %v1502 = vperm.slane %v1249, 0
  %v1503 = vperm.slane %v1249, 1
  %v1504 = vperm.slane %v1251, 0
  %v1505 = vperm.slane %v1251, 1
  %v1506 = vperm.slane %v1253, 0
  %v1507 = vperm.slane %v1253, 1
  %v1508 = vperm.slane %v1255, 0
  %v1509 = vperm.slane %v1255, 1
  %v1510 = vperm.slane %v1257, 0
  %v1511 = vperm.slane %v1257, 1
  %v1512 = vperm.slane %v1259, 0
  %v1513 = vperm.slane %v1259, 1
  %v1514 = vperm.slane %v1260, 0
  %v1515 = vperm.slane %v1260, 1
  %v1516 = vperm.slane %v1262, 0
  %v1517 = vperm.slane %v1262, 1
  %v1518 = vperm.slane %v1264, 0
  %v1519 = vperm.slane %v1264, 1
  %v1520 = vperm.slane %v1266, 0
  %v1521 = vperm.slane %v1266, 1
  %v1522 = vperm.slane %v1268, 0
  %v1523 = vperm.slane %v1268, 1
  %v1524 = vperm.slane %v1270, 0
  %v1525 = vperm.slane %v1270, 1
  %v1526 = vperm.slane %v1272, 0
  %v1527 = vperm.slane %v1272, 1
  %v1528 = vperm.slane %v1274, 0
  %v1529 = vperm.slane %v1274, 1
  %v1530 = vperm.slane %v1275, 0
  %v1531 = vperm.slane %v1275, 1
  %v1532 = vperm.slane %v1277, 0
  %v1533 = vperm.slane %v1277, 1
  %v1534 = vperm.slane %v1279, 0
  %v1535 = vperm.slane %v1279, 1
  %v1536 = vperm.slane %v1281, 0
  %v1537 = vperm.slane %v1281, 1
  %v1538 = vperm.slane %v1283, 0
  %v1539 = vperm.slane %v1283, 1
  %v1540 = vperm.slane %v1285, 0
  %v1541 = vperm.slane %v1285, 1
  %v1542 = vperm.slane %v1287, 0
  %v1543 = vperm.slane %v1287, 1
  %v1544 = vperm.slane %v1289, 0
  %v1545 = vperm.slane %v1289, 1
  %v1674 = vmul.f32 %v1418, %v1290
  %v1675 = vmul.f32 %v1419, %v1291
  %v1676 = vmul.f32 %v1420, %v1292
  %v1677 = vmul.f32 %v1421, %v1293
  %v1678 = vmul.f32 %v1422, %v1294
  %v1679 = vmul.f32 %v1423, %v1295
  %v1680 = vmul.f32 %v1424, %v1296
  %v1681 = vmul.f32 %v1425, %v1297
  %v1682 = vmul.f32 %v1426, %v1298
  %v1683 = vmul.f32 %v1427, %v1299
  %v1684 = vmul.f32 %v1428, %v1300
  %v1685 = vmul.f32 %v1429, %v1301
  %v1686 = vmul.f32 %v1430, %v1302
  %v1687 = vmul.f32 %v1431, %v1303
  %v1688 = vmul.f32 %v1432, %v1304
  %v1689 = vmul.f32 %v1433, %v1305
  %v1690 = vmul.f32 %v1434, %v1306
  %v1691 = vmul.f32 %v1435, %v1307
  %v1692 = vmul.f32 %v1436, %v1308
  %v1693 = vmul.f32 %v1437, %v1309
  %v1694 = vmul.f32 %v1438, %v1310
  %v1695 = vmul.f32 %v1439, %v1311
  %v1696 = vmul.f32 %v1440, %v1312
  %v1697 = vmul.f32 %v1441, %v1313
  %v1698 = vmul.f32 %v1442, %v1314
  %v1699 = vmul.f32 %v1443, %v1315
  %v1700 = vmul.f32 %v1444, %v1316
  %v1701 = vmul.f32 %v1445, %v1317
  %v1702 = vmul.f32 %v1446, %v1318
  %v1703 = vmul.f32 %v1447, %v1319
  %v1704 = vmul.f32 %v1448, %v1320
  %v1705 = vmul.f32 %v1449, %v1321
  %v1706 = vmul.f32 %v1450, %v1322
  %v1707 = vmul.f32 %v1451, %v1323
  %v1708 = vmul.f32 %v1452, %v1324
  %v1709 = vmul.f32 %v1453, %v1325
  %v1710 = vmul.f32 %v1454, %v1326
  %v1711 = vmul.f32 %v1455, %v1327
  %v1712 = vmul.f32 %v1456, %v1328
  %v1713 = vmul.f32 %v1457, %v1329
  %v1714 = vmul.f32 %v1458, %v1330
  %v1715 = vmul.f32 %v1459, %v1331
  %v1716 = vmul.f32 %v1460, %v1332
  %v1717 = vmul.f32 %v1461, %v1333
  %v1718 = vmul.f32 %v1462, %v1334
  %v1719 = vmul.f32 %v1463, %v1335
  %v1720 = vmul.f32 %v1464, %v1336
  %v1721 = vmul.f32 %v1465, %v1337
  %v1722 = vmul.f32 %v1466, %v1338
  %v1723 = vmul.f32 %v1467, %v1339
  %v1724 = vmul.f32 %v1468, %v1340
  %v1725 = vmul.f32 %v1469, %v1341
  %v1726 = vmul.f32 %v1470, %v1342
  %v1727 = vmul.f32 %v1471, %v1343
  %v1728 = vmul.f32 %v1472, %v1344
  %v1729 = vmul.f32 %v1473, %v1345
  %v1730 = vmul.f32 %v1474, %v1346
  %v1731 = vmul.f32 %v1475, %v1347
  %v1732 = vmul.f32 %v1476, %v1348
  %v1733 = vmul.f32 %v1477, %v1349
  %v1734 = vmul.f32 %v1478, %v1350
  %v1735 = vmul.f32 %v1479, %v1351
  %v1736 = vmul.f32 %v1480, %v1352
  %v1737 = vmul.f32 %v1481, %v1353
  %v1738 = vmul.f32 %v1482, %v1354
  %v1739 = vmul.f32 %v1483, %v1355
  %v1740 = vmul.f32 %v1484, %v1356
  %v1741 = vmul.f32 %v1485, %v1357
  %v1742 = vmul.f32 %v1486, %v1358
  %v1743 = vmul.f32 %v1487, %v1359
  %v1744 = vmul.f32 %v1488, %v1360
  %v1745 = vmul.f32 %v1489, %v1361
  %v1746 = vmul.f32 %v1490, %v1362
  %v1747 = vmul.f32 %v1491, %v1363
  %v1748 = vmul.f32 %v1492, %v1364
  %v1749 = vmul.f32 %v1493, %v1365
  %v1750 = vmul.f32 %v1494, %v1366
  %v1751 = vmul.f32 %v1495, %v1367
  %v1752 = vmul.f32 %v1496, %v1368
  %v1753 = vmul.f32 %v1497, %v1369
  %v1754 = vmul.f32 %v1498, %v1370
  %v1755 = vmul.f32 %v1499, %v1371
  %v1756 = vmul.f32 %v1500, %v1372
  %v1757 = vmul.f32 %v1501, %v1373
  %v1758 = vmul.f32 %v1502, %v1374
  %v1759 = vmul.f32 %v1503, %v1375
  %v1760 = vmul.f32 %v1504, %v1376
  %v1761 = vmul.f32 %v1505, %v1377
  %v1762 = vmul.f32 %v1506, %v1378
  %v1763 = vmul.f32 %v1507, %v1379
  %v1764 = vmul.f32 %v1508, %v1380
  %v1765 = vmul.f32 %v1509, %v1381
  %v1766 = vmul.f32 %v1510, %v1382
  %v1767 = vmul.f32 %v1511, %v1383
  %v1768 = vmul.f32 %v1512, %v1384
  %v1769 = vmul.f32 %v1513, %v1385
  %v1770 = vmul.f32 %v1514, %v1386
  %v1771 = vmul.f32 %v1515, %v1387
  %v1772 = vmul.f32 %v1516, %v1388
  %v1773 = vmul.f32 %v1517, %v1389
  %v1774 = vmul.f32 %v1518, %v1390
  %v1775 = vmul.f32 %v1519, %v1391
  %v1776 = vmul.f32 %v1520, %v1392
  %v1777 = vmul.f32 %v1521, %v1393
  %v1778 = vmul.f32 %v1522, %v1394
  %v1779 = vmul.f32 %v1523, %v1395
  %v1780 = vmul.f32 %v1524, %v1396
  %v1781 = vmul.f32 %v1525, %v1397
  %v1782 = vmul.f32 %v1526, %v1398
  %v1783 = vmul.f32 %v1527, %v1399
  %v1784 = vmul.f32 %v1528, %v1400
  %v1785 = vmul.f32 %v1529, %v1401
  %v1786 = vmul.f32 %v1530, %v1402
  %v1787 = vmul.f32 %v1531, %v1403
  %v1788 = vmul.f32 %v1532, %v1404
  %v1789 = vmul.f32 %v1533, %v1405
  %v1790 = vmul.f32 %v1534, %v1406
  %v1791 = vmul.f32 %v1535, %v1407
  %v1792 = vmul.f32 %v1536, %v1408
  %v1793 = vmul.f32 %v1537, %v1409
  %v1794 = vmul.f32 %v1538, %v1410
  %v1795 = vmul.f32 %v1539, %v1411
  %v1796 = vmul.f32 %v1540, %v1412
  %v1797 = vmul.f32 %v1541, %v1413
  %v1798 = vmul.f32 %v1542, %v1414
  %v1799 = vmul.f32 %v1543, %v1415
  %v1800 = vmul.f32 %v1544, %v1416
  %v1801 = vmul.f32 %v1545, %v1417
  %1802 = vst [vmem:[#allocation3] sm:$0xff] %v1674
  %1803 = vst [vmem:[#allocation3 + $0x8] sm:$0xff] %v1675
  %1804 = vst [vmem:[#allocation3 + $0x10] sm:$0xff] %v1676
  %1805 = vst [vmem:[#allocation3 + $0x18] sm:$0xff] %v1677
  %1806 = vst [vmem:[#allocation3 + $0x20] sm:$0xff] %v1678
  %1807 = vst [vmem:[#allocation3 + $0x28] sm:$0xff] %v1679
  %1808 = vst [vmem:[#allocation3 + $0x30] sm:$0xff] %v1680
  %1809 = vst [vmem:[#allocation3 + $0x38] sm:$0xff] %v1681
  %1810 = vst [vmem:[#allocation3 + $0x40] sm:$0xff] %v1682
  %1811 = vst [vmem:[#allocation3 + $0x48] sm:$0xff] %v1683
  %1812 = vst [vmem:[#allocation3 + $0x50] sm:$0xff] %v1684
  %1813 = vst [vmem:[#allocation3 + $0x58] sm:$0xff] %v1685
  %1814 = vst [vmem:[#allocation3 + $0x60] sm:$0xff] %v1686
  %1815 = vst [vmem:[#allocation3 + $0x68] sm:$0xff] %v1687
  %1816 = vst [vmem:[#allocation3 + $0x70] sm:$0xff] %v1688
  %1817 = vst [vmem:[#allocation3 + $0x78] sm:$0xff] %v1689
  %1818 = vst [vmem:[#allocation3 + $0x80] sm:$0xff] %v1690
  %1819 = vst [vmem:[#allocation3 + $0x88] sm:$0xff] %v1691
  %1820 = vst [vmem:[#allocation3 + $0x90] sm:$0xff] %v1692
  %1821 = vst [vmem:[#allocation3 + $0x98] sm:$0xff] %v1693
  %1822 = vst [vmem:[#allocation3 + $0xa0] sm:$0xff] %v1694
  %1823 = vst [vmem:[#allocation3 + $0xa8] sm:$0xff] %v1695
  %1824 = vst [vmem:[#allocation3 + $0xb0] sm:$0xff] %v1696
  %1825 = vst [vmem:[#allocation3 + $0xb8] sm:$0xff] %v1697
  %1826 = vst [vmem:[#allocation3 + $0xc0] sm:$0xff] %v1698
  %1827 = vst [vmem:[#allocation3 + $0xc8] sm:$0xff] %v1699
  %1828 = vst [vmem:[#allocation3 + $0xd0] sm:$0xff] %v1700
  %1829 = vst [vmem:[#allocation3 + $0xd8] sm:$0xff] %v1701
  %1830 = vst [vmem:[#allocation3 + $0xe0] sm:$0xff] %v1702
  %1831 = vst [vmem:[#allocation3 + $0xe8] sm:$0xff] %v1703
  %1832 = vst [vmem:[#allocation3 + $0xf0] sm:$0xff] %v1704
  %1833 = vst [vmem:[#allocation3 + $0xf8] sm:$0xff] %v1705
  %1834 = vst [vmem:[#allocation3 + $0x100] sm:$0xff] %v1706
  %1835 = vst [vmem:[#allocation3 + $0x108] sm:$0xff] %v1707
  %1836 = vst [vmem:[#allocation3 + $0x110] sm:$0xff] %v1708
  %1837 = vst [vmem:[#allocation3 + $0x118] sm:$0xff] %v1709
  %1838 = vst [vmem:[#allocation3 + $0x120] sm:$0xff] %v1710
  %1839 = vst [vmem:[#allocation3 + $0x128] sm:$0xff] %v1711
  %1840 = vst [vmem:[#allocation3 + $0x130] sm:$0xff] %v1712
  %1841 = vst [vmem:[#allocation3 + $0x138] sm:$0xff] %v1713
  %1842 = vst [vmem:[#allocation3 + $0x140] sm:$0xff] %v1714
  %1843 = vst [vmem:[#allocation3 + $0x148] sm:$0xff] %v1715
  %1844 = vst [vmem:[#allocation3 + $0x150] sm:$0xff] %v1716
  %1845 = vst [vmem:[#allocation3 + $0x158] sm:$0xff] %v1717
  %1846 = vst [vmem:[#allocation3 + $0x160] sm:$0xff] %v1718
  %1847 = vst [vmem:[#allocation3 + $0x168] sm:$0xff] %v1719
  %1848 = vst [vmem:[#allocation3 + $0x170] sm:$0xff] %v1720
  %1849 = vst [vmem:[#allocation3 + $0x178] sm:$0xff] %v1721
  %1850 = vst [vmem:[#allocation3 + $0x180] sm:$0xff] %v1722
  %1851 = vst [vmem:[#allocation3 + $0x188] sm:$0xff] %v1723
  %1852 = vst [vmem:[#allocation3 + $0x190] sm:$0xff] %v1724
  %1853 = vst [vmem:[#allocation3 + $0x198] sm:$0xff] %v1725
  %1854 = vst [vmem:[#allocation3 + $0x1a0] sm:$0xff] %v1726
  %1855 = vst [vmem:[#allocation3 + $0x1a8] sm:$0xff] %v1727
  %1856 = vst [vmem:[#allocation3 + $0x1b0] sm:$0xff] %v1728
  %1857 = vst [vmem:[#allocation3 + $0x1b8] sm:$0xff] %v1729
  %1858 = vst [vmem:[#allocation3 + $0x1c0] sm:$0xff] %v1730
  %1859 = vst [vmem:[#allocation3 + $0x1c8] sm:$0xff] %v1731
  %1860 = vst [vmem:[#allocation3 + $0x1d0] sm:$0xff] %v1732
  %1861 = vst [vmem:[#allocation3 + $0x1d8] sm:$0xff] %v1733
  %1862 = vst [vmem:[#allocation3 + $0x1e0] sm:$0xff] %v1734
  %1863 = vst [vmem:[#allocation3 + $0x1e8] sm:$0xff] %v1735
  %1864 = vst [vmem:[#allocation3 + $0x1f0] sm:$0xff] %v1736
  %1865 = vst [vmem:[#allocation3 + $0x1f8] sm:$0xff] %v1737
  %1866 = vst [vmem:[#allocation3 + $0x200] sm:$0xff] %v1738
  %1867 = vst [vmem:[#allocation3 + $0x208] sm:$0xff] %v1739
  %1868 = vst [vmem:[#allocation3 + $0x210] sm:$0xff] %v1740
  %1869 = vst [vmem:[#allocation3 + $0x218] sm:$0xff] %v1741
  %1870 = vst [vmem:[#allocation3 + $0x220] sm:$0xff] %v1742
  %1871 = vst [vmem:[#allocation3 + $0x228] sm:$0xff] %v1743
  %1872 = vst [vmem:[#allocation3 + $0x230] sm:$0xff] %v1744
  %1873 = vst [vmem:[#allocation3 + $0x238] sm:$0xff] %v1745
  %1874 = vst [vmem:[#allocation3 + $0x240] sm:$0xff] %v1746
  %1875 = vst [vmem:[#allocation3 + $0x248] sm:$0xff] %v1747
  %1876 = vst [vmem:[#allocation3 + $0x250] sm:$0xff] %v1748
  %1877 = vst [vmem:[#allocation3 + $0x258] sm:$0xff] %v1749
  %1878 = vst [vmem:[#allocation3 + $0x260] sm:$0xff] %v1750
  %1879 = vst [vmem:[#allocation3 + $0x268] sm:$0xff] %v1751
  %1880 = vst [vmem:[#allocation3 + $0x270] sm:$0xff] %v1752
  %1881 = vst [vmem:[#allocation3 + $0x278] sm:$0xff] %v1753
  %1882 = vst [vmem:[#allocation3 + $0x280] sm:$0xff] %v1754
  %1883 = vst [vmem:[#allocation3 + $0x288] sm:$0xff] %v1755
  %1884 = vst [vmem:[#allocation3 + $0x290] sm:$0xff] %v1756
  %1885 = vst [vmem:[#allocation3 + $0x298] sm:$0xff] %v1757
  %1886 = vst [vmem:[#allocation3 + $0x2a0] sm:$0xff] %v1758
  %1887 = vst [vmem:[#allocation3 + $0x2a8] sm:$0xff] %v1759
  %1888 = vst [vmem:[#allocation3 + $0x2b0] sm:$0xff] %v1760
  %1889 = vst [vmem:[#allocation3 + $0x2b8] sm:$0xff] %v1761
  %1890 = vst [vmem:[#allocation3 + $0x2c0] sm:$0xff] %v1762
  %1891 = vst [vmem:[#allocation3 + $0x2c8] sm:$0xff] %v1763
  %1892 = vst [vmem:[#allocation3 + $0x2d0] sm:$0xff] %v1764
  %1893 = vst [vmem:[#allocation3 + $0x2d8] sm:$0xff] %v1765
  %1894 = vst [vmem:[#allocation3 + $0x2e0] sm:$0xff] %v1766
  %1895 = vst [vmem:[#allocation3 + $0x2e8] sm:$0xff] %v1767
  %1896 = vst [vmem:[#allocation3 + $0x2f0] sm:$0xff] %v1768
  %1897 = vst [vmem:[#allocation3 + $0x2f8] sm:$0xff] %v1769
  %1898 = vst [vmem:[#allocation3 + $0x300] sm:$0xff] %v1770
  %1899 = vst [vmem:[#allocation3 + $0x308] sm:$0xff] %v1771
  %1900 = vst [vmem:[#allocation3 + $0x310] sm:$0xff] %v1772
  %1901 = vst [vmem:[#allocation3 + $0x318] sm:$0xff] %v1773
  %1902 = vst [vmem:[#allocation3 + $0x320] sm:$0xff] %v1774
  %1903 = vst [vmem:[#allocation3 + $0x328] sm:$0xff] %v1775
  %1904 = vst [vmem:[#allocation3 + $0x330] sm:$0xff] %v1776
  %1905 = vst [vmem:[#allocation3 + $0x338] sm:$0xff] %v1777
  %1906 = vst [vmem:[#allocation3 + $0x340] sm:$0xff] %v1778
  %1907 = vst [vmem:[#allocation3 + $0x348] sm:$0xff] %v1779
  %1908 = vst [vmem:[#allocation3 + $0x350] sm:$0xff] %v1780
  %1909 = vst [vmem:[#allocation3 + $0x358] sm:$0xff] %v1781
  %1910 = vst [vmem:[#allocation3 + $0x360] sm:$0xff] %v1782
  %1911 = vst [vmem:[#allocation3 + $0x368] sm:$0xff] %v1783
  %1912 = vst [vmem:[#allocation3 + $0x370] sm:$0xff] %v1784
  %1913 = vst [vmem:[#allocation3 + $0x378] sm:$0xff] %v1785
  %1914 = vst [vmem:[#allocation3 + $0x380] sm:$0xff] %v1786
  %1915 = vst [vmem:[#allocation3 + $0x388] sm:$0xff] %v1787
  %1916 = vst [vmem:[#allocation3 + $0x390] sm:$0xff] %v1788
  %1917 = vst [vmem:[#allocation3 + $0x398] sm:$0xff] %v1789
  %1918 = vst [vmem:[#allocation3 + $0x3a0] sm:$0xff] %v1790
  %1919 = vst [vmem:[#allocation3 + $0x3a8] sm:$0xff] %v1791
  %1920 = vst [vmem:[#allocation3 + $0x3b0] sm:$0xff] %v1792
  %1921 = vst [vmem:[#allocation3 + $0x3b8] sm:$0xff] %v1793
  %1922 = vst [vmem:[#allocation3 + $0x3c0] sm:$0xff] %v1794
  %1923 = vst [vmem:[#allocation3 + $0x3c8] sm:$0xff] %v1795
  %1924 = vst [vmem:[#allocation3 + $0x3d0] sm:$0xff] %v1796
  %1925 = vst [vmem:[#allocation3 + $0x3d8] sm:$0xff] %v1797
  %1926 = vst [vmem:[#allocation3 + $0x3e0] sm:$0xff] %v1798
  %1927 = vst [vmem:[#allocation3 + $0x3e8] sm:$0xff] %v1799
  %1928 = vst [vmem:[#allocation3 + $0x3f0] sm:$0xff] %v1800
  %1929 = vst [vmem:[#allocation3 + $0x3f8] sm:$0xff] %v1801
  loop: start=0, step=1, limit=8
  $region30: #{selective_scan_pallas.1} parent=0 // loop_pre_header
    _
  $region31: #{selective_scan_pallas.1} parent=0 // loop_header
    %s1931 = sphi 0, %s1935
    %p1932 = scmp.ge.s32.totalorder %s1931, 8
    %v1936 = vphi 0.0, %v2076
    %v1937 = vphi 0.0, %v2077
  $region32: #{selective_scan_pallas.1} parent=0 // loop_header_branch
    %1934 = sbr.rel (%p1932) target = $region36
  $region33: #{selective_scan_pallas.1} parent=0 // loop_body
    %s1938 = smul.u32 %s1931, 8
    %s1939 = smul.u32 %s1938, 2
    %s1940 = smul.addr %s1939, 8
    %s1941 = scalar_lea.vmem [#allocation2], %s1940
    %v1942 = vld [vmem:[%s1941] sm:$0xff]
    %v1943 = vld [vmem:[%s1941 + $0x8] sm:$0xff]
    %v1944 = vmul.f32 %v1942, %v1936
    %v1945 = vmul.f32 %v1943, %v1937
    %s1946 = smul.addr %s1939, 8
    %s1947 = scalar_lea.vmem [#allocation3], %s1946
    %v1948 = vld [vmem:[%s1947] sm:$0xff]
    %v1949 = vld [vmem:[%s1947 + $0x8] sm:$0xff]
    %v1950 = vadd.f32 %v1944, %v1948
    %v1951 = vadd.f32 %v1945, %v1949
    %s1952 = smul.addr %s1939, 8
    %s1953 = scalar_lea.vmem [#allocation4], %s1952
    %1954 = vst [vmem:[%s1953] sm:$0xff] %v1950
    %1955 = vst [vmem:[%s1953 + $0x8] sm:$0xff] %v1951
    %s1956 = sadd.s32 %s1938, 1
    %s1957 = smul.u32 %s1956, 2
    %s1958 = smul.addr %s1957, 8
    %s1959 = scalar_lea.vmem [#allocation2], %s1958
    %v1960 = vld [vmem:[%s1959] sm:$0xff]
    %v1961 = vld [vmem:[%s1959 + $0x8] sm:$0xff]
    %v1962 = vmul.f32 %v1960, %v1950
    %v1963 = vmul.f32 %v1961, %v1951
    %s1964 = smul.addr %s1957, 8
    %s1965 = scalar_lea.vmem [#allocation3], %s1964
    %v1966 = vld [vmem:[%s1965] sm:$0xff]
    %v1967 = vld [vmem:[%s1965 + $0x8] sm:$0xff]
    %v1968 = vadd.f32 %v1962, %v1966
    %v1969 = vadd.f32 %v1963, %v1967
    %s1970 = smul.addr %s1957, 8
    %s1971 = scalar_lea.vmem [#allocation4], %s1970
    %1972 = vst [vmem:[%s1971] sm:$0xff] %v1968
    %1973 = vst [vmem:[%s1971 + $0x8] sm:$0xff] %v1969
    %s1974 = sadd.s32 %s1938, 2
    %s1975 = smul.u32 %s1974, 2
    %s1976 = smul.addr %s1975, 8
    %s1977 = scalar_lea.vmem [#allocation2], %s1976
    %v1978 = vld [vmem:[%s1977] sm:$0xff]
    %v1979 = vld [vmem:[%s1977 + $0x8] sm:$0xff]
    %v1980 = vmul.f32 %v1978, %v1968
    %v1981 = vmul.f32 %v1979, %v1969
    %s1982 = smul.addr %s1975, 8
    %s1983 = scalar_lea.vmem [#allocation3], %s1982
    %v1984 = vld [vmem:[%s1983] sm:$0xff]
    %v1985 = vld [vmem:[%s1983 + $0x8] sm:$0xff]
    %v1986 = vadd.f32 %v1980, %v1984
    %v1987 = vadd.f32 %v1981, %v1985
    %s1988 = smul.addr %s1975, 8
    %s1989 = scalar_lea.vmem [#allocation4], %s1988
    %1990 = vst [vmem:[%s1989] sm:$0xff] %v1986
    %1991 = vst [vmem:[%s1989 + $0x8] sm:$0xff] %v1987
    %s1992 = sadd.s32 %s1938, 3
    %s1993 = smul.u32 %s1992, 2
    %s1994 = smul.addr %s1993, 8
    %s1995 = scalar_lea.vmem [#allocation2], %s1994
    %v1996 = vld [vmem:[%s1995] sm:$0xff]
    %v1997 = vld [vmem:[%s1995 + $0x8] sm:$0xff]
    %v1998 = vmul.f32 %v1996, %v1986
    %v1999 = vmul.f32 %v1997, %v1987
    %s2000 = smul.addr %s1993, 8
    %s2001 = scalar_lea.vmem [#allocation3], %s2000
    %v2002 = vld [vmem:[%s2001] sm:$0xff]
    %v2003 = vld [vmem:[%s2001 + $0x8] sm:$0xff]
    %v2004 = vadd.f32 %v1998, %v2002
    %v2005 = vadd.f32 %v1999, %v2003
    %s2006 = smul.addr %s1993, 8
    %s2007 = scalar_lea.vmem [#allocation4], %s2006
    %2008 = vst [vmem:[%s2007] sm:$0xff] %v2004
    %2009 = vst [vmem:[%s2007 + $0x8] sm:$0xff] %v2005
    %s2010 = sadd.s32 %s1938, 4
    %s2011 = smul.u32 %s2010, 2
    %s2012 = smul.addr %s2011, 8
    %s2013 = scalar_lea.vmem [#allocation2], %s2012
    %v2014 = vld [vmem:[%s2013] sm:$0xff]
    %v2015 = vld [vmem:[%s2013 + $0x8] sm:$0xff]
    %v2016 = vmul.f32 %v2014, %v2004
    %v2017 = vmul.f32 %v2015, %v2005
    %s2018 = smul.addr %s2011, 8
    %s2019 = scalar_lea.vmem [#allocation3], %s2018
    %v2020 = vld [vmem:[%s2019] sm:$0xff]
    %v2021 = vld [vmem:[%s2019 + $0x8] sm:$0xff]
    %v2022 = vadd.f32 %v2016, %v2020
    %v2023 = vadd.f32 %v2017, %v2021
    %s2024 = smul.addr %s2011, 8
    %s2025 = scalar_lea.vmem [#allocation4], %s2024
    %2026 = vst [vmem:[%s2025] sm:$0xff] %v2022
    %2027 = vst [vmem:[%s2025 + $0x8] sm:$0xff] %v2023
    %s2028 = sadd.s32 %s1938, 5
    %s2029 = smul.u32 %s2028, 2
    %s2030 = smul.addr %s2029, 8
    %s2031 = scalar_lea.vmem [#allocation2], %s2030
    %v2032 = vld [vmem:[%s2031] sm:$0xff]
    %v2033 = vld [vmem:[%s2031 + $0x8] sm:$0xff]
    %v2034 = vmul.f32 %v2032, %v2022
    %v2035 = vmul.f32 %v2033, %v2023
    %s2036 = smul.addr %s2029, 8
    %s2037 = scalar_lea.vmem [#allocation3], %s2036
    %v2038 = vld [vmem:[%s2037] sm:$0xff]
    %v2039 = vld [vmem:[%s2037 + $0x8] sm:$0xff]
    %v2040 = vadd.f32 %v2034, %v2038
    %v2041 = vadd.f32 %v2035, %v2039
    %s2042 = smul.addr %s2029, 8
    %s2043 = scalar_lea.vmem [#allocation4], %s2042
    %2044 = vst [vmem:[%s2043] sm:$0xff] %v2040
    %2045 = vst [vmem:[%s2043 + $0x8] sm:$0xff] %v2041
    %s2046 = sadd.s32 %s1938, 6
    %s2047 = smul.u32 %s2046, 2
    %s2048 = smul.addr %s2047, 8
    %s2049 = scalar_lea.vmem [#allocation2], %s2048
    %v2050 = vld [vmem:[%s2049] sm:$0xff]
    %v2051 = vld [vmem:[%s2049 + $0x8] sm:$0xff]
    %v2052 = vmul.f32 %v2050, %v2040
    %v2053 = vmul.f32 %v2051, %v2041
    %s2054 = smul.addr %s2047, 8
    %s2055 = scalar_lea.vmem [#allocation3], %s2054
    %v2056 = vld [vmem:[%s2055] sm:$0xff]
    %v2057 = vld [vmem:[%s2055 + $0x8] sm:$0xff]
    %v2058 = vadd.f32 %v2052, %v2056
    %v2059 = vadd.f32 %v2053, %v2057
    %s2060 = smul.addr %s2047, 8
    %s2061 = scalar_lea.vmem [#allocation4], %s2060
    %2062 = vst [vmem:[%s2061] sm:$0xff] %v2058
    %2063 = vst [vmem:[%s2061 + $0x8] sm:$0xff] %v2059
    %s2064 = sadd.s32 %s1938, 7
    %s2065 = smul.u32 %s2064, 2
    %s2066 = smul.addr %s2065, 8
    %s2067 = scalar_lea.vmem [#allocation2], %s2066
    %v2068 = vld [vmem:[%s2067] sm:$0xff]
    %v2069 = vld [vmem:[%s2067 + $0x8] sm:$0xff]
    %v2070 = vmul.f32 %v2068, %v2058
    %v2071 = vmul.f32 %v2069, %v2059
    %s2072 = smul.addr %s2065, 8
    %s2073 = scalar_lea.vmem [#allocation3], %s2072
    %v2074 = vld [vmem:[%s2073] sm:$0xff]
    %v2075 = vld [vmem:[%s2073 + $0x8] sm:$0xff]
    %v2076 = vadd.f32 %v2070, %v2074
    %v2077 = vadd.f32 %v2071, %v2075
    %s2078 = smul.addr %s2065, 8
    %s2079 = scalar_lea.vmem [#allocation4], %s2078
    %2080 = vst [vmem:[%s2079] sm:$0xff] %v2076
    %2081 = vst [vmem:[%s2079 + $0x8] sm:$0xff] %v2077
  $region34: #{selective_scan_pallas.1} parent=0 // loop_footer
    %s1935 = sadd.s32 1, %s1931
  $region35: #{selective_scan_pallas.1} parent=0 // loop_footer_branch
    %1930 = sbr.rel target = $region31
  $region36: #{selective_scan_pallas.1} parent=0 // loop_exit
    _
  %v2082 = vld [vmem:[%s6] sm:$0xff]
  %v2083 = vld [vmem:[%s6 + $0x8] sm:$0xff]
  %v2084 = vld [vmem:[%s6 + $0x10] sm:$0xff]
  %v2085 = vld [vmem:[%s6 + $0x18] sm:$0xff]
  %v2086 = vld [vmem:[%s6 + $0x20] sm:$0xff]
  %v2087 = vld [vmem:[%s6 + $0x28] sm:$0xff]
  %v2088 = vld [vmem:[%s6 + $0x30] sm:$0xff]
  %v2089 = vld [vmem:[%s6 + $0x38] sm:$0xff]
  %v2090 = vld [vmem:[%s6 + $0x40] sm:$0xff]
  %v2091 = vld [vmem:[%s6 + $0x48] sm:$0xff]
  %v2092 = vld [vmem:[%s6 + $0x50] sm:$0xff]
  %v2093 = vld [vmem:[%s6 + $0x58] sm:$0xff]
  %v2094 = vld [vmem:[%s6 + $0x60] sm:$0xff]
  %v2095 = vld [vmem:[%s6 + $0x68] sm:$0xff]
  %v2096 = vld [vmem:[%s6 + $0x70] sm:$0xff]
  %v2097 = vld [vmem:[%s6 + $0x78] sm:$0xff]
  %v2098 = vld [vmem:[%s6 + $0x80] sm:$0xff]
  %v2099 = vld [vmem:[%s6 + $0x88] sm:$0xff]
  %v2100 = vld [vmem:[%s6 + $0x90] sm:$0xff]
  %v2101 = vld [vmem:[%s6 + $0x98] sm:$0xff]
  %v2102 = vld [vmem:[%s6 + $0xa0] sm:$0xff]
  %v2103 = vld [vmem:[%s6 + $0xa8] sm:$0xff]
  %v2104 = vld [vmem:[%s6 + $0xb0] sm:$0xff]
  %v2105 = vld [vmem:[%s6 + $0xb8] sm:$0xff]
  %v2106 = vld [vmem:[%s6 + $0xc0] sm:$0xff]
  %v2107 = vld [vmem:[%s6 + $0xc8] sm:$0xff]
  %v2108 = vld [vmem:[%s6 + $0xd0] sm:$0xff]
  %v2109 = vld [vmem:[%s6 + $0xd8] sm:$0xff]
  %v2110 = vld [vmem:[%s6 + $0xe0] sm:$0xff]
  %v2111 = vld [vmem:[%s6 + $0xe8] sm:$0xff]
  %v2112 = vld [vmem:[%s6 + $0xf0] sm:$0xff]
  %v2113 = vld [vmem:[%s6 + $0xf8] sm:$0xff]
  %v2114 = vld [vmem:[%s6 + $0x100] sm:$0xff]
  %v2115 = vld [vmem:[%s6 + $0x108] sm:$0xff]
  %v2116 = vld [vmem:[%s6 + $0x110] sm:$0xff]
  %v2117 = vld [vmem:[%s6 + $0x118] sm:$0xff]
  %v2118 = vld [vmem:[%s6 + $0x120] sm:$0xff]
  %v2119 = vld [vmem:[%s6 + $0x128] sm:$0xff]
  %v2120 = vld [vmem:[%s6 + $0x130] sm:$0xff]
  %v2121 = vld [vmem:[%s6 + $0x138] sm:$0xff]
  %v2122 = vld [vmem:[%s6 + $0x140] sm:$0xff]
  %v2123 = vld [vmem:[%s6 + $0x148] sm:$0xff]
  %v2124 = vld [vmem:[%s6 + $0x150] sm:$0xff]
  %v2125 = vld [vmem:[%s6 + $0x158] sm:$0xff]
  %v2126 = vld [vmem:[%s6 + $0x160] sm:$0xff]
  %v2127 = vld [vmem:[%s6 + $0x168] sm:$0xff]
  %v2128 = vld [vmem:[%s6 + $0x170] sm:$0xff]
  %v2129 = vld [vmem:[%s6 + $0x178] sm:$0xff]
  %v2130 = vld [vmem:[%s6 + $0x180] sm:$0xff]
  %v2131 = vld [vmem:[%s6 + $0x188] sm:$0xff]
  %v2132 = vld [vmem:[%s6 + $0x190] sm:$0xff]
  %v2133 = vld [vmem:[%s6 + $0x198] sm:$0xff]
  %v2134 = vld [vmem:[%s6 + $0x1a0] sm:$0xff]
  %v2135 = vld [vmem:[%s6 + $0x1a8] sm:$0xff]
  %v2136 = vld [vmem:[%s6 + $0x1b0] sm:$0xff]
  %v2137 = vld [vmem:[%s6 + $0x1b8] sm:$0xff]
  %v2138 = vld [vmem:[%s6 + $0x1c0] sm:$0xff]
  %v2139 = vld [vmem:[%s6 + $0x1c8] sm:$0xff]
  %v2140 = vld [vmem:[%s6 + $0x1d0] sm:$0xff]
  %v2141 = vld [vmem:[%s6 + $0x1d8] sm:$0xff]
  %v2142 = vld [vmem:[%s6 + $0x1e0] sm:$0xff]
  %v2143 = vld [vmem:[%s6 + $0x1e8] sm:$0xff]
  %v2144 = vld [vmem:[%s6 + $0x1f0] sm:$0xff]
  %v2145 = vld [vmem:[%s6 + $0x1f8] sm:$0xff]
  %v2146 = vld [vmem:[%s6 + $0x200] sm:$0xff]
  %v2147 = vld [vmem:[%s6 + $0x208] sm:$0xff]
  %v2148 = vld [vmem:[%s6 + $0x210] sm:$0xff]
  %v2149 = vld [vmem:[%s6 + $0x218] sm:$0xff]
  %v2150 = vld [vmem:[%s6 + $0x220] sm:$0xff]
  %v2151 = vld [vmem:[%s6 + $0x228] sm:$0xff]
  %v2152 = vld [vmem:[%s6 + $0x230] sm:$0xff]
  %v2153 = vld [vmem:[%s6 + $0x238] sm:$0xff]
  %v2154 = vld [vmem:[%s6 + $0x240] sm:$0xff]
  %v2155 = vld [vmem:[%s6 + $0x248] sm:$0xff]
  %v2156 = vld [vmem:[%s6 + $0x250] sm:$0xff]
  %v2157 = vld [vmem:[%s6 + $0x258] sm:$0xff]
  %v2158 = vld [vmem:[%s6 + $0x260] sm:$0xff]
  %v2159 = vld [vmem:[%s6 + $0x268] sm:$0xff]
  %v2160 = vld [vmem:[%s6 + $0x270] sm:$0xff]
  %v2161 = vld [vmem:[%s6 + $0x278] sm:$0xff]
  %v2162 = vld [vmem:[%s6 + $0x280] sm:$0xff]
  %v2163 = vld [vmem:[%s6 + $0x288] sm:$0xff]
  %v2164 = vld [vmem:[%s6 + $0x290] sm:$0xff]
  %v2165 = vld [vmem:[%s6 + $0x298] sm:$0xff]
  %v2166 = vld [vmem:[%s6 + $0x2a0] sm:$0xff]
  %v2167 = vld [vmem:[%s6 + $0x2a8] sm:$0xff]
  %v2168 = vld [vmem:[%s6 + $0x2b0] sm:$0xff]
  %v2169 = vld [vmem:[%s6 + $0x2b8] sm:$0xff]
  %v2170 = vld [vmem:[%s6 + $0x2c0] sm:$0xff]
  %v2171 = vld [vmem:[%s6 + $0x2c8] sm:$0xff]
  %v2172 = vld [vmem:[%s6 + $0x2d0] sm:$0xff]
  %v2173 = vld [vmem:[%s6 + $0x2d8] sm:$0xff]
  %v2174 = vld [vmem:[%s6 + $0x2e0] sm:$0xff]
  %v2175 = vld [vmem:[%s6 + $0x2e8] sm:$0xff]
  %v2176 = vld [vmem:[%s6 + $0x2f0] sm:$0xff]
  %v2177 = vld [vmem:[%s6 + $0x2f8] sm:$0xff]
  %v2178 = vld [vmem:[%s6 + $0x300] sm:$0xff]
  %v2179 = vld [vmem:[%s6 + $0x308] sm:$0xff]
  %v2180 = vld [vmem:[%s6 + $0x310] sm:$0xff]
  %v2181 = vld [vmem:[%s6 + $0x318] sm:$0xff]
  %v2182 = vld [vmem:[%s6 + $0x320] sm:$0xff]
  %v2183 = vld [vmem:[%s6 + $0x328] sm:$0xff]
  %v2184 = vld [vmem:[%s6 + $0x330] sm:$0xff]
  %v2185 = vld [vmem:[%s6 + $0x338] sm:$0xff]
  %v2186 = vld [vmem:[%s6 + $0x340] sm:$0xff]
  %v2187 = vld [vmem:[%s6 + $0x348] sm:$0xff]
  %v2188 = vld [vmem:[%s6 + $0x350] sm:$0xff]
  %v2189 = vld [vmem:[%s6 + $0x358] sm:$0xff]
  %v2190 = vld [vmem:[%s6 + $0x360] sm:$0xff]
  %v2191 = vld [vmem:[%s6 + $0x368] sm:$0xff]
  %v2192 = vld [vmem:[%s6 + $0x370] sm:$0xff]
  %v2193 = vld [vmem:[%s6 + $0x378] sm:$0xff]
  %v2194 = vld [vmem:[%s6 + $0x380] sm:$0xff]
  %v2195 = vld [vmem:[%s6 + $0x388] sm:$0xff]
  %v2196 = vld [vmem:[%s6 + $0x390] sm:$0xff]
  %v2197 = vld [vmem:[%s6 + $0x398] sm:$0xff]
  %v2198 = vld [vmem:[%s6 + $0x3a0] sm:$0xff]
  %v2199 = vld [vmem:[%s6 + $0x3a8] sm:$0xff]
  %v2200 = vld [vmem:[%s6 + $0x3b0] sm:$0xff]
  %v2201 = vld [vmem:[%s6 + $0x3b8] sm:$0xff]
  %v2202 = vld [vmem:[%s6 + $0x3c0] sm:$0xff]
  %v2203 = vld [vmem:[%s6 + $0x3c8] sm:$0xff]
  %v2204 = vld [vmem:[%s6 + $0x3d0] sm:$0xff]
  %v2205 = vld [vmem:[%s6 + $0x3d8] sm:$0xff]
  %v2206 = vld [vmem:[%s6 + $0x3e0] sm:$0xff]
  %v2207 = vld [vmem:[%s6 + $0x3e8] sm:$0xff]
  %v2208 = vld [vmem:[%s6 + $0x3f0] sm:$0xff]
  %v2209 = vld [vmem:[%s6 + $0x3f8] sm:$0xff]
  %v2210 = vld [vmem:[#allocation4] sm:$0xff]
  %v2211 = vld [vmem:[#allocation4 + $0x8] sm:$0xff]
  %v2212 = vld [vmem:[#allocation4 + $0x10] sm:$0xff]
  %v2213 = vld [vmem:[#allocation4 + $0x18] sm:$0xff]
  %v2214 = vld [vmem:[#allocation4 + $0x20] sm:$0xff]
  %v2215 = vld [vmem:[#allocation4 + $0x28] sm:$0xff]
  %v2216 = vld [vmem:[#allocation4 + $0x30] sm:$0xff]
  %v2217 = vld [vmem:[#allocation4 + $0x38] sm:$0xff]
  %v2218 = vld [vmem:[#allocation4 + $0x40] sm:$0xff]
  %v2219 = vld [vmem:[#allocation4 + $0x48] sm:$0xff]
  %v2220 = vld [vmem:[#allocation4 + $0x50] sm:$0xff]
  %v2221 = vld [vmem:[#allocation4 + $0x58] sm:$0xff]
  %v2222 = vld [vmem:[#allocation4 + $0x60] sm:$0xff]
  %v2223 = vld [vmem:[#allocation4 + $0x68] sm:$0xff]
  %v2224 = vld [vmem:[#allocation4 + $0x70] sm:$0xff]
  %v2225 = vld [vmem:[#allocation4 + $0x78] sm:$0xff]
  %v2226 = vld [vmem:[#allocation4 + $0x80] sm:$0xff]
  %v2227 = vld [vmem:[#allocation4 + $0x88] sm:$0xff]
  %v2228 = vld [vmem:[#allocation4 + $0x90] sm:$0xff]
  %v2229 = vld [vmem:[#allocation4 + $0x98] sm:$0xff]
  %v2230 = vld [vmem:[#allocation4 + $0xa0] sm:$0xff]
  %v2231 = vld [vmem:[#allocation4 + $0xa8] sm:$0xff]
  %v2232 = vld [vmem:[#allocation4 + $0xb0] sm:$0xff]
  %v2233 = vld [vmem:[#allocation4 + $0xb8] sm:$0xff]
  %v2234 = vld [vmem:[#allocation4 + $0xc0] sm:$0xff]
  %v2235 = vld [vmem:[#allocation4 + $0xc8] sm:$0xff]
  %v2236 = vld [vmem:[#allocation4 + $0xd0] sm:$0xff]
  %v2237 = vld [vmem:[#allocation4 + $0xd8] sm:$0xff]
  %v2238 = vld [vmem:[#allocation4 + $0xe0] sm:$0xff]
  %v2239 = vld [vmem:[#allocation4 + $0xe8] sm:$0xff]
  %v2240 = vld [vmem:[#allocation4 + $0xf0] sm:$0xff]
  %v2241 = vld [vmem:[#allocation4 + $0xf8] sm:$0xff]
  %v2242 = vld [vmem:[#allocation4 + $0x100] sm:$0xff]
  %v2243 = vld [vmem:[#allocation4 + $0x108] sm:$0xff]
  %v2244 = vld [vmem:[#allocation4 + $0x110] sm:$0xff]
  %v2245 = vld [vmem:[#allocation4 + $0x118] sm:$0xff]
  %v2246 = vld [vmem:[#allocation4 + $0x120] sm:$0xff]
  %v2247 = vld [vmem:[#allocation4 + $0x128] sm:$0xff]
  %v2248 = vld [vmem:[#allocation4 + $0x130] sm:$0xff]
  %v2249 = vld [vmem:[#allocation4 + $0x138] sm:$0xff]
  %v2250 = vld [vmem:[#allocation4 + $0x140] sm:$0xff]
  %v2251 = vld [vmem:[#allocation4 + $0x148] sm:$0xff]
  %v2252 = vld [vmem:[#allocation4 + $0x150] sm:$0xff]
  %v2253 = vld [vmem:[#allocation4 + $0x158] sm:$0xff]
  %v2254 = vld [vmem:[#allocation4 + $0x160] sm:$0xff]
  %v2255 = vld [vmem:[#allocation4 + $0x168] sm:$0xff]
  %v2256 = vld [vmem:[#allocation4 + $0x170] sm:$0xff]
  %v2257 = vld [vmem:[#allocation4 + $0x178] sm:$0xff]
  %v2258 = vld [vmem:[#allocation4 + $0x180] sm:$0xff]
  %v2259 = vld [vmem:[#allocation4 + $0x188] sm:$0xff]
  %v2260 = vld [vmem:[#allocation4 + $0x190] sm:$0xff]
  %v2261 = vld [vmem:[#allocation4 + $0x198] sm:$0xff]
  %v2262 = vld [vmem:[#allocation4 + $0x1a0] sm:$0xff]
  %v2263 = vld [vmem:[#allocation4 + $0x1a8] sm:$0xff]
  %v2264 = vld [vmem:[#allocation4 + $0x1b0] sm:$0xff]
  %v2265 = vld [vmem:[#allocation4 + $0x1b8] sm:$0xff]
  %v2266 = vld [vmem:[#allocation4 + $0x1c0] sm:$0xff]
  %v2267 = vld [vmem:[#allocation4 + $0x1c8] sm:$0xff]
  %v2268 = vld [vmem:[#allocation4 + $0x1d0] sm:$0xff]
  %v2269 = vld [vmem:[#allocation4 + $0x1d8] sm:$0xff]
  %v2270 = vld [vmem:[#allocation4 + $0x1e0] sm:$0xff]
  %v2271 = vld [vmem:[#allocation4 + $0x1e8] sm:$0xff]
  %v2272 = vld [vmem:[#allocation4 + $0x1f0] sm:$0xff]
  %v2273 = vld [vmem:[#allocation4 + $0x1f8] sm:$0xff]
  %v2274 = vld [vmem:[#allocation4 + $0x200] sm:$0xff]
  %v2275 = vld [vmem:[#allocation4 + $0x208] sm:$0xff]
  %v2276 = vld [vmem:[#allocation4 + $0x210] sm:$0xff]
  %v2277 = vld [vmem:[#allocation4 + $0x218] sm:$0xff]
  %v2278 = vld [vmem:[#allocation4 + $0x220] sm:$0xff]
  %v2279 = vld [vmem:[#allocation4 + $0x228] sm:$0xff]
  %v2280 = vld [vmem:[#allocation4 + $0x230] sm:$0xff]
  %v2281 = vld [vmem:[#allocation4 + $0x238] sm:$0xff]
  %v2282 = vld [vmem:[#allocation4 + $0x240] sm:$0xff]
  %v2283 = vld [vmem:[#allocation4 + $0x248] sm:$0xff]
  %v2284 = vld [vmem:[#allocation4 + $0x250] sm:$0xff]
  %v2285 = vld [vmem:[#allocation4 + $0x258] sm:$0xff]
  %v2286 = vld [vmem:[#allocation4 + $0x260] sm:$0xff]
  %v2287 = vld [vmem:[#allocation4 + $0x268] sm:$0xff]
  %v2288 = vld [vmem:[#allocation4 + $0x270] sm:$0xff]
  %v2289 = vld [vmem:[#allocation4 + $0x278] sm:$0xff]
  %v2290 = vld [vmem:[#allocation4 + $0x280] sm:$0xff]
  %v2291 = vld [vmem:[#allocation4 + $0x288] sm:$0xff]
  %v2292 = vld [vmem:[#allocation4 + $0x290] sm:$0xff]
  %v2293 = vld [vmem:[#allocation4 + $0x298] sm:$0xff]
  %v2294 = vld [vmem:[#allocation4 + $0x2a0] sm:$0xff]
  %v2295 = vld [vmem:[#allocation4 + $0x2a8] sm:$0xff]
  %v2296 = vld [vmem:[#allocation4 + $0x2b0] sm:$0xff]
  %v2297 = vld [vmem:[#allocation4 + $0x2b8] sm:$0xff]
  %v2298 = vld [vmem:[#allocation4 + $0x2c0] sm:$0xff]
  %v2299 = vld [vmem:[#allocation4 + $0x2c8] sm:$0xff]
  %v2300 = vld [vmem:[#allocation4 + $0x2d0] sm:$0xff]
  %v2301 = vld [vmem:[#allocation4 + $0x2d8] sm:$0xff]
  %v2302 = vld [vmem:[#allocation4 + $0x2e0] sm:$0xff]
  %v2303 = vld [vmem:[#allocation4 + $0x2e8] sm:$0xff]
  %v2304 = vld [vmem:[#allocation4 + $0x2f0] sm:$0xff]
  %v2305 = vld [vmem:[#allocation4 + $0x2f8] sm:$0xff]
  %v2306 = vld [vmem:[#allocation4 + $0x300] sm:$0xff]
  %v2307 = vld [vmem:[#allocation4 + $0x308] sm:$0xff]
  %v2308 = vld [vmem:[#allocation4 + $0x310] sm:$0xff]
  %v2309 = vld [vmem:[#allocation4 + $0x318] sm:$0xff]
  %v2310 = vld [vmem:[#allocation4 + $0x320] sm:$0xff]
  %v2311 = vld [vmem:[#allocation4 + $0x328] sm:$0xff]
  %v2312 = vld [vmem:[#allocation4 + $0x330] sm:$0xff]
  %v2313 = vld [vmem:[#allocation4 + $0x338] sm:$0xff]
  %v2314 = vld [vmem:[#allocation4 + $0x340] sm:$0xff]
  %v2315 = vld [vmem:[#allocation4 + $0x348] sm:$0xff]
  %v2316 = vld [vmem:[#allocation4 + $0x350] sm:$0xff]
  %v2317 = vld [vmem:[#allocation4 + $0x358] sm:$0xff]
  %v2318 = vld [vmem:[#allocation4 + $0x360] sm:$0xff]
  %v2319 = vld [vmem:[#allocation4 + $0x368] sm:$0xff]
  %v2320 = vld [vmem:[#allocation4 + $0x370] sm:$0xff]
  %v2321 = vld [vmem:[#allocation4 + $0x378] sm:$0xff]
  %v2322 = vld [vmem:[#allocation4 + $0x380] sm:$0xff]
  %v2323 = vld [vmem:[#allocation4 + $0x388] sm:$0xff]
  %v2324 = vld [vmem:[#allocation4 + $0x390] sm:$0xff]
  %v2325 = vld [vmem:[#allocation4 + $0x398] sm:$0xff]
  %v2326 = vld [vmem:[#allocation4 + $0x3a0] sm:$0xff]
  %v2327 = vld [vmem:[#allocation4 + $0x3a8] sm:$0xff]
  %v2328 = vld [vmem:[#allocation4 + $0x3b0] sm:$0xff]
  %v2329 = vld [vmem:[#allocation4 + $0x3b8] sm:$0xff]
  %v2330 = vld [vmem:[#allocation4 + $0x3c0] sm:$0xff]
  %v2331 = vld [vmem:[#allocation4 + $0x3c8] sm:$0xff]
  %v2332 = vld [vmem:[#allocation4 + $0x3d0] sm:$0xff]
  %v2333 = vld [vmem:[#allocation4 + $0x3d8] sm:$0xff]
  %v2334 = vld [vmem:[#allocation4 + $0x3e0] sm:$0xff]
  %v2335 = vld [vmem:[#allocation4 + $0x3e8] sm:$0xff]
  %v2336 = vld [vmem:[#allocation4 + $0x3f0] sm:$0xff]
  %v2337 = vld [vmem:[#allocation4 + $0x3f8] sm:$0xff]
  %v2338 = vmul.f32 %v2082, %v2210
  %v2339 = vmul.f32 %v2083, %v2211
  %v2340 = vmul.f32 %v2084, %v2212
  %v2341 = vmul.f32 %v2085, %v2213
  %v2342 = vmul.f32 %v2086, %v2214
  %v2343 = vmul.f32 %v2087, %v2215
  %v2344 = vmul.f32 %v2088, %v2216
  %v2345 = vmul.f32 %v2089, %v2217
  %v2346 = vmul.f32 %v2090, %v2218
  %v2347 = vmul.f32 %v2091, %v2219
  %v2348 = vmul.f32 %v2092, %v2220
  %v2349 = vmul.f32 %v2093, %v2221
  %v2350 = vmul.f32 %v2094, %v2222
  %v2351 = vmul.f32 %v2095, %v2223
  %v2352 = vmul.f32 %v2096, %v2224
  %v2353 = vmul.f32 %v2097, %v2225
  %v2354 = vmul.f32 %v2098, %v2226
  %v2355 = vmul.f32 %v2099, %v2227
  %v2356 = vmul.f32 %v2100, %v2228
  %v2357 = vmul.f32 %v2101, %v2229
  %v2358 = vmul.f32 %v2102, %v2230
  %v2359 = vmul.f32 %v2103, %v2231
  %v2360 = vmul.f32 %v2104, %v2232
  %v2361 = vmul.f32 %v2105, %v2233
  %v2362 = vmul.f32 %v2106, %v2234
  %v2363 = vmul.f32 %v2107, %v2235
  %v2364 = vmul.f32 %v2108, %v2236
  %v2365 = vmul.f32 %v2109, %v2237
  %v2366 = vmul.f32 %v2110, %v2238
  %v2367 = vmul.f32 %v2111, %v2239
  %v2368 = vmul.f32 %v2112, %v2240
  %v2369 = vmul.f32 %v2113, %v2241
  %v2370 = vmul.f32 %v2114, %v2242
  %v2371 = vmul.f32 %v2115, %v2243
  %v2372 = vmul.f32 %v2116, %v2244
  %v2373 = vmul.f32 %v2117, %v2245
  %v2374 = vmul.f32 %v2118, %v2246
  %v2375 = vmul.f32 %v2119, %v2247
  %v2376 = vmul.f32 %v2120, %v2248
  %v2377 = vmul.f32 %v2121, %v2249
  %v2378 = vmul.f32 %v2122, %v2250
  %v2379 = vmul.f32 %v2123, %v2251
  %v2380 = vmul.f32 %v2124, %v2252
  %v2381 = vmul.f32 %v2125, %v2253
  %v2382 = vmul.f32 %v2126, %v2254
  %v2383 = vmul.f32 %v2127, %v2255
  %v2384 = vmul.f32 %v2128, %v2256
  %v2385 = vmul.f32 %v2129, %v2257
  %v2386 = vmul.f32 %v2130, %v2258
  %v2387 = vmul.f32 %v2131, %v2259
  %v2388 = vmul.f32 %v2132, %v2260
  %v2389 = vmul.f32 %v2133, %v2261
  %v2390 = vmul.f32 %v2134, %v2262
  %v2391 = vmul.f32 %v2135, %v2263
  %v2392 = vmul.f32 %v2136, %v2264
  %v2393 = vmul.f32 %v2137, %v2265
  %v2394 = vmul.f32 %v2138, %v2266
  %v2395 = vmul.f32 %v2139, %v2267
  %v2396 = vmul.f32 %v2140, %v2268
  %v2397 = vmul.f32 %v2141, %v2269
  %v2398 = vmul.f32 %v2142, %v2270
  %v2399 = vmul.f32 %v2143, %v2271
  %v2400 = vmul.f32 %v2144, %v2272
  %v2401 = vmul.f32 %v2145, %v2273
  %v2402 = vmul.f32 %v2146, %v2274
  %v2403 = vmul.f32 %v2147, %v2275
  %v2404 = vmul.f32 %v2148, %v2276
  %v2405 = vmul.f32 %v2149, %v2277
  %v2406 = vmul.f32 %v2150, %v2278
  %v2407 = vmul.f32 %v2151, %v2279
  %v2408 = vmul.f32 %v2152, %v2280
  %v2409 = vmul.f32 %v2153, %v2281
  %v2410 = vmul.f32 %v2154, %v2282
  %v2411 = vmul.f32 %v2155, %v2283
  %v2412 = vmul.f32 %v2156, %v2284
  %v2413 = vmul.f32 %v2157, %v2285
  %v2414 = vmul.f32 %v2158, %v2286
  %v2415 = vmul.f32 %v2159, %v2287
  %v2416 = vmul.f32 %v2160, %v2288
  %v2417 = vmul.f32 %v2161, %v2289
  %v2418 = vmul.f32 %v2162, %v2290
  %v2419 = vmul.f32 %v2163, %v2291
  %v2420 = vmul.f32 %v2164, %v2292
  %v2421 = vmul.f32 %v2165, %v2293
  %v2422 = vmul.f32 %v2166, %v2294
  %v2423 = vmul.f32 %v2167, %v2295
  %v2424 = vmul.f32 %v2168, %v2296
  %v2425 = vmul.f32 %v2169, %v2297
  %v2426 = vmul.f32 %v2170, %v2298
  %v2427 = vmul.f32 %v2171, %v2299
  %v2428 = vmul.f32 %v2172, %v2300
  %v2429 = vmul.f32 %v2173, %v2301
  %v2430 = vmul.f32 %v2174, %v2302
  %v2431 = vmul.f32 %v2175, %v2303
  %v2432 = vmul.f32 %v2176, %v2304
  %v2433 = vmul.f32 %v2177, %v2305
  %v2434 = vmul.f32 %v2178, %v2306
  %v2435 = vmul.f32 %v2179, %v2307
  %v2436 = vmul.f32 %v2180, %v2308
  %v2437 = vmul.f32 %v2181, %v2309
  %v2438 = vmul.f32 %v2182, %v2310
  %v2439 = vmul.f32 %v2183, %v2311
  %v2440 = vmul.f32 %v2184, %v2312
  %v2441 = vmul.f32 %v2185, %v2313
  %v2442 = vmul.f32 %v2186, %v2314
  %v2443 = vmul.f32 %v2187, %v2315
  %v2444 = vmul.f32 %v2188, %v2316
  %v2445 = vmul.f32 %v2189, %v2317
  %v2446 = vmul.f32 %v2190, %v2318
  %v2447 = vmul.f32 %v2191, %v2319
  %v2448 = vmul.f32 %v2192, %v2320
  %v2449 = vmul.f32 %v2193, %v2321
  %v2450 = vmul.f32 %v2194, %v2322
  %v2451 = vmul.f32 %v2195, %v2323
  %v2452 = vmul.f32 %v2196, %v2324
  %v2453 = vmul.f32 %v2197, %v2325
  %v2454 = vmul.f32 %v2198, %v2326
  %v2455 = vmul.f32 %v2199, %v2327
  %v2456 = vmul.f32 %v2200, %v2328
  %v2457 = vmul.f32 %v2201, %v2329
  %v2458 = vmul.f32 %v2202, %v2330
  %v2459 = vmul.f32 %v2203, %v2331
  %v2460 = vmul.f32 %v2204, %v2332
  %v2461 = vmul.f32 %v2205, %v2333
  %v2462 = vmul.f32 %v2206, %v2334
  %v2463 = vmul.f32 %v2207, %v2335
  %v2464 = vmul.f32 %v2208, %v2336
  %v2465 = vmul.f32 %v2209, %v2337
  %v2466 = vrot.slane %v2338, 4
  %v2467 = vadd.f32 %v2338, %v2466
  %v2468 = vrot.slane %v2467, 2
  %v2469 = vadd.f32 %v2467, %v2468
  %v2470 = vrot.slane %v2469, 1
  %v2471 = vadd.f32 %v2469, %v2470
  %v2472 = vrot.slane %v2339, 4
  %v2473 = vadd.f32 %v2339, %v2472
  %v2474 = vrot.slane %v2473, 2
  %v2475 = vadd.f32 %v2473, %v2474
  %v2476 = vrot.slane %v2475, 1
  %v2477 = vadd.f32 %v2475, %v2476
  %v2478 = vrot.slane %v2340, 4
  %v2479 = vadd.f32 %v2340, %v2478
  %v2480 = vrot.slane %v2479, 2
  %v2481 = vadd.f32 %v2479, %v2480
  %v2482 = vrot.slane %v2481, 1
  %v2483 = vadd.f32 %v2481, %v2482
  %v2484 = vrot.slane %v2341, 4
  %v2485 = vadd.f32 %v2341, %v2484
  %v2486 = vrot.slane %v2485, 2
  %v2487 = vadd.f32 %v2485, %v2486
  %v2488 = vrot.slane %v2487, 1
  %v2489 = vadd.f32 %v2487, %v2488
  %v2490 = vrot.slane %v2342, 4
  %v2491 = vadd.f32 %v2342, %v2490
  %v2492 = vrot.slane %v2491, 2
  %v2493 = vadd.f32 %v2491, %v2492
  %v2494 = vrot.slane %v2493, 1
  %v2495 = vadd.f32 %v2493, %v2494
  %v2496 = vrot.slane %v2343, 4
  %v2497 = vadd.f32 %v2343, %v2496
  %v2498 = vrot.slane %v2497, 2
  %v2499 = vadd.f32 %v2497, %v2498
  %v2500 = vrot.slane %v2499, 1
  %v2501 = vadd.f32 %v2499, %v2500
  %v2502 = vrot.slane %v2344, 4
  %v2503 = vadd.f32 %v2344, %v2502
  %v2504 = vrot.slane %v2503, 2
  %v2505 = vadd.f32 %v2503, %v2504
  %v2506 = vrot.slane %v2505, 1
  %v2507 = vadd.f32 %v2505, %v2506
  %v2508 = vrot.slane %v2345, 4
  %v2509 = vadd.f32 %v2345, %v2508
  %v2510 = vrot.slane %v2509, 2
  %v2511 = vadd.f32 %v2509, %v2510
  %v2512 = vrot.slane %v2511, 1
  %v2513 = vadd.f32 %v2511, %v2512
  %v2514 = vrot.slane %v2346, 4
  %v2515 = vadd.f32 %v2346, %v2514
  %v2516 = vrot.slane %v2515, 2
  %v2517 = vadd.f32 %v2515, %v2516
  %v2518 = vrot.slane %v2517, 1
  %v2519 = vadd.f32 %v2517, %v2518
  %v2520 = vrot.slane %v2347, 4
  %v2521 = vadd.f32 %v2347, %v2520
  %v2522 = vrot.slane %v2521, 2
  %v2523 = vadd.f32 %v2521, %v2522
  %v2524 = vrot.slane %v2523, 1
  %v2525 = vadd.f32 %v2523, %v2524
  %v2526 = vrot.slane %v2348, 4
  %v2527 = vadd.f32 %v2348, %v2526
  %v2528 = vrot.slane %v2527, 2
  %v2529 = vadd.f32 %v2527, %v2528
  %v2530 = vrot.slane %v2529, 1
  %v2531 = vadd.f32 %v2529, %v2530
  %v2532 = vrot.slane %v2349, 4
  %v2533 = vadd.f32 %v2349, %v2532
  %v2534 = vrot.slane %v2533, 2
  %v2535 = vadd.f32 %v2533, %v2534
  %v2536 = vrot.slane %v2535, 1
  %v2537 = vadd.f32 %v2535, %v2536
  %v2538 = vrot.slane %v2350, 4
  %v2539 = vadd.f32 %v2350, %v2538
  %v2540 = vrot.slane %v2539, 2
  %v2541 = vadd.f32 %v2539, %v2540
  %v2542 = vrot.slane %v2541, 1
  %v2543 = vadd.f32 %v2541, %v2542
  %v2544 = vrot.slane %v2351, 4
  %v2545 = vadd.f32 %v2351, %v2544
  %v2546 = vrot.slane %v2545, 2
  %v2547 = vadd.f32 %v2545, %v2546
  %v2548 = vrot.slane %v2547, 1
  %v2549 = vadd.f32 %v2547, %v2548
  %v2550 = vrot.slane %v2352, 4
  %v2551 = vadd.f32 %v2352, %v2550
  %v2552 = vrot.slane %v2551, 2
  %v2553 = vadd.f32 %v2551, %v2552
  %v2554 = vrot.slane %v2553, 1
  %v2555 = vadd.f32 %v2553, %v2554
  %v2556 = vrot.slane %v2353, 4
  %v2557 = vadd.f32 %v2353, %v2556
  %v2558 = vrot.slane %v2557, 2
  %v2559 = vadd.f32 %v2557, %v2558
  %v2560 = vrot.slane %v2559, 1
  %v2561 = vadd.f32 %v2559, %v2560
  %v2562 = vrot.slane %v2354, 4
  %v2563 = vadd.f32 %v2354, %v2562
  %v2564 = vrot.slane %v2563, 2
  %v2565 = vadd.f32 %v2563, %v2564
  %v2566 = vrot.slane %v2565, 1
  %v2567 = vadd.f32 %v2565, %v2566
  %v2568 = vrot.slane %v2355, 4
  %v2569 = vadd.f32 %v2355, %v2568
  %v2570 = vrot.slane %v2569, 2
  %v2571 = vadd.f32 %v2569, %v2570
  %v2572 = vrot.slane %v2571, 1
  %v2573 = vadd.f32 %v2571, %v2572
  %v2574 = vrot.slane %v2356, 4
  %v2575 = vadd.f32 %v2356, %v2574
  %v2576 = vrot.slane %v2575, 2
  %v2577 = vadd.f32 %v2575, %v2576
  %v2578 = vrot.slane %v2577, 1
  %v2579 = vadd.f32 %v2577, %v2578
  %v2580 = vrot.slane %v2357, 4
  %v2581 = vadd.f32 %v2357, %v2580
  %v2582 = vrot.slane %v2581, 2
  %v2583 = vadd.f32 %v2581, %v2582
  %v2584 = vrot.slane %v2583, 1
  %v2585 = vadd.f32 %v2583, %v2584
  %v2586 = vrot.slane %v2358, 4
  %v2587 = vadd.f32 %v2358, %v2586
  %v2588 = vrot.slane %v2587, 2
  %v2589 = vadd.f32 %v2587, %v2588
  %v2590 = vrot.slane %v2589, 1
  %v2591 = vadd.f32 %v2589, %v2590
  %v2592 = vrot.slane %v2359, 4
  %v2593 = vadd.f32 %v2359, %v2592
  %v2594 = vrot.slane %v2593, 2
  %v2595 = vadd.f32 %v2593, %v2594
  %v2596 = vrot.slane %v2595, 1
  %v2597 = vadd.f32 %v2595, %v2596
  %v2598 = vrot.slane %v2360, 4
  %v2599 = vadd.f32 %v2360, %v2598
  %v2600 = vrot.slane %v2599, 2
  %v2601 = vadd.f32 %v2599, %v2600
  %v2602 = vrot.slane %v2601, 1
  %v2603 = vadd.f32 %v2601, %v2602
  %v2604 = vrot.slane %v2361, 4
  %v2605 = vadd.f32 %v2361, %v2604
  %v2606 = vrot.slane %v2605, 2
  %v2607 = vadd.f32 %v2605, %v2606
  %v2608 = vrot.slane %v2607, 1
  %v2609 = vadd.f32 %v2607, %v2608
  %v2610 = vrot.slane %v2362, 4
  %v2611 = vadd.f32 %v2362, %v2610
  %v2612 = vrot.slane %v2611, 2
  %v2613 = vadd.f32 %v2611, %v2612
  %v2614 = vrot.slane %v2613, 1
  %v2615 = vadd.f32 %v2613, %v2614
  %v2616 = vrot.slane %v2363, 4
  %v2617 = vadd.f32 %v2363, %v2616
  %v2618 = vrot.slane %v2617, 2
  %v2619 = vadd.f32 %v2617, %v2618
  %v2620 = vrot.slane %v2619, 1
  %v2621 = vadd.f32 %v2619, %v2620
  %v2622 = vrot.slane %v2364, 4
  %v2623 = vadd.f32 %v2364, %v2622
  %v2624 = vrot.slane %v2623, 2
  %v2625 = vadd.f32 %v2623, %v2624
  %v2626 = vrot.slane %v2625, 1
  %v2627 = vadd.f32 %v2625, %v2626
  %v2628 = vrot.slane %v2365, 4
  %v2629 = vadd.f32 %v2365, %v2628
  %v2630 = vrot.slane %v2629, 2
  %v2631 = vadd.f32 %v2629, %v2630
  %v2632 = vrot.slane %v2631, 1
  %v2633 = vadd.f32 %v2631, %v2632
  %v2634 = vrot.slane %v2366, 4
  %v2635 = vadd.f32 %v2366, %v2634
  %v2636 = vrot.slane %v2635, 2
  %v2637 = vadd.f32 %v2635, %v2636
  %v2638 = vrot.slane %v2637, 1
  %v2639 = vadd.f32 %v2637, %v2638
  %v2640 = vrot.slane %v2367, 4
  %v2641 = vadd.f32 %v2367, %v2640
  %v2642 = vrot.slane %v2641, 2
  %v2643 = vadd.f32 %v2641, %v2642
  %v2644 = vrot.slane %v2643, 1
  %v2645 = vadd.f32 %v2643, %v2644
  %v2646 = vrot.slane %v2368, 4
  %v2647 = vadd.f32 %v2368, %v2646
  %v2648 = vrot.slane %v2647, 2
  %v2649 = vadd.f32 %v2647, %v2648
  %v2650 = vrot.slane %v2649, 1
  %v2651 = vadd.f32 %v2649, %v2650
  %v2652 = vrot.slane %v2369, 4
  %v2653 = vadd.f32 %v2369, %v2652
  %v2654 = vrot.slane %v2653, 2
  %v2655 = vadd.f32 %v2653, %v2654
  %v2656 = vrot.slane %v2655, 1
  %v2657 = vadd.f32 %v2655, %v2656
  %v2658 = vrot.slane %v2370, 4
  %v2659 = vadd.f32 %v2370, %v2658
  %v2660 = vrot.slane %v2659, 2
  %v2661 = vadd.f32 %v2659, %v2660
  %v2662 = vrot.slane %v2661, 1
  %v2663 = vadd.f32 %v2661, %v2662
  %v2664 = vrot.slane %v2371, 4
  %v2665 = vadd.f32 %v2371, %v2664
  %v2666 = vrot.slane %v2665, 2
  %v2667 = vadd.f32 %v2665, %v2666
  %v2668 = vrot.slane %v2667, 1
  %v2669 = vadd.f32 %v2667, %v2668
  %v2670 = vrot.slane %v2372, 4
  %v2671 = vadd.f32 %v2372, %v2670
  %v2672 = vrot.slane %v2671, 2
  %v2673 = vadd.f32 %v2671, %v2672
  %v2674 = vrot.slane %v2673, 1
  %v2675 = vadd.f32 %v2673, %v2674
  %v2676 = vrot.slane %v2373, 4
  %v2677 = vadd.f32 %v2373, %v2676
  %v2678 = vrot.slane %v2677, 2
  %v2679 = vadd.f32 %v2677, %v2678
  %v2680 = vrot.slane %v2679, 1
  %v2681 = vadd.f32 %v2679, %v2680
  %v2682 = vrot.slane %v2374, 4
  %v2683 = vadd.f32 %v2374, %v2682
  %v2684 = vrot.slane %v2683, 2
  %v2685 = vadd.f32 %v2683, %v2684
  %v2686 = vrot.slane %v2685, 1
  %v2687 = vadd.f32 %v2685, %v2686
  %v2688 = vrot.slane %v2375, 4
  %v2689 = vadd.f32 %v2375, %v2688
  %v2690 = vrot.slane %v2689, 2
  %v2691 = vadd.f32 %v2689, %v2690
  %v2692 = vrot.slane %v2691, 1
  %v2693 = vadd.f32 %v2691, %v2692
  %v2694 = vrot.slane %v2376, 4
  %v2695 = vadd.f32 %v2376, %v2694
  %v2696 = vrot.slane %v2695, 2
  %v2697 = vadd.f32 %v2695, %v2696
  %v2698 = vrot.slane %v2697, 1
  %v2699 = vadd.f32 %v2697, %v2698
  %v2700 = vrot.slane %v2377, 4
  %v2701 = vadd.f32 %v2377, %v2700
  %v2702 = vrot.slane %v2701, 2
  %v2703 = vadd.f32 %v2701, %v2702
  %v2704 = vrot.slane %v2703, 1
  %v2705 = vadd.f32 %v2703, %v2704
  %v2706 = vrot.slane %v2378, 4
  %v2707 = vadd.f32 %v2378, %v2706
  %v2708 = vrot.slane %v2707, 2
  %v2709 = vadd.f32 %v2707, %v2708
  %v2710 = vrot.slane %v2709, 1
  %v2711 = vadd.f32 %v2709, %v2710
  %v2712 = vrot.slane %v2379, 4
  %v2713 = vadd.f32 %v2379, %v2712
  %v2714 = vrot.slane %v2713, 2
  %v2715 = vadd.f32 %v2713, %v2714
  %v2716 = vrot.slane %v2715, 1
  %v2717 = vadd.f32 %v2715, %v2716
  %v2718 = vrot.slane %v2380, 4
  %v2719 = vadd.f32 %v2380, %v2718
  %v2720 = vrot.slane %v2719, 2
  %v2721 = vadd.f32 %v2719, %v2720
  %v2722 = vrot.slane %v2721, 1
  %v2723 = vadd.f32 %v2721, %v2722
  %v2724 = vrot.slane %v2381, 4
  %v2725 = vadd.f32 %v2381, %v2724
  %v2726 = vrot.slane %v2725, 2
  %v2727 = vadd.f32 %v2725, %v2726
  %v2728 = vrot.slane %v2727, 1
  %v2729 = vadd.f32 %v2727, %v2728
  %v2730 = vrot.slane %v2382, 4
  %v2731 = vadd.f32 %v2382, %v2730
  %v2732 = vrot.slane %v2731, 2
  %v2733 = vadd.f32 %v2731, %v2732
  %v2734 = vrot.slane %v2733, 1
  %v2735 = vadd.f32 %v2733, %v2734
  %v2736 = vrot.slane %v2383, 4
  %v2737 = vadd.f32 %v2383, %v2736
  %v2738 = vrot.slane %v2737, 2
  %v2739 = vadd.f32 %v2737, %v2738
  %v2740 = vrot.slane %v2739, 1
  %v2741 = vadd.f32 %v2739, %v2740
  %v2742 = vrot.slane %v2384, 4
  %v2743 = vadd.f32 %v2384, %v2742
  %v2744 = vrot.slane %v2743, 2
  %v2745 = vadd.f32 %v2743, %v2744
  %v2746 = vrot.slane %v2745, 1
  %v2747 = vadd.f32 %v2745, %v2746
  %v2748 = vrot.slane %v2385, 4
  %v2749 = vadd.f32 %v2385, %v2748
  %v2750 = vrot.slane %v2749, 2
  %v2751 = vadd.f32 %v2749, %v2750
  %v2752 = vrot.slane %v2751, 1
  %v2753 = vadd.f32 %v2751, %v2752
  %v2754 = vrot.slane %v2386, 4
  %v2755 = vadd.f32 %v2386, %v2754
  %v2756 = vrot.slane %v2755, 2
  %v2757 = vadd.f32 %v2755, %v2756
  %v2758 = vrot.slane %v2757, 1
  %v2759 = vadd.f32 %v2757, %v2758
  %v2760 = vrot.slane %v2387, 4
  %v2761 = vadd.f32 %v2387, %v2760
  %v2762 = vrot.slane %v2761, 2
  %v2763 = vadd.f32 %v2761, %v2762
  %v2764 = vrot.slane %v2763, 1
  %v2765 = vadd.f32 %v2763, %v2764
  %v2766 = vrot.slane %v2388, 4
  %v2767 = vadd.f32 %v2388, %v2766
  %v2768 = vrot.slane %v2767, 2
  %v2769 = vadd.f32 %v2767, %v2768
  %v2770 = vrot.slane %v2769, 1
  %v2771 = vadd.f32 %v2769, %v2770
  %v2772 = vrot.slane %v2389, 4
  %v2773 = vadd.f32 %v2389, %v2772
  %v2774 = vrot.slane %v2773, 2
  %v2775 = vadd.f32 %v2773, %v2774
  %v2776 = vrot.slane %v2775, 1
  %v2777 = vadd.f32 %v2775, %v2776
  %v2778 = vrot.slane %v2390, 4
  %v2779 = vadd.f32 %v2390, %v2778
  %v2780 = vrot.slane %v2779, 2
  %v2781 = vadd.f32 %v2779, %v2780
  %v2782 = vrot.slane %v2781, 1
  %v2783 = vadd.f32 %v2781, %v2782
  %v2784 = vrot.slane %v2391, 4
  %v2785 = vadd.f32 %v2391, %v2784
  %v2786 = vrot.slane %v2785, 2
  %v2787 = vadd.f32 %v2785, %v2786
  %v2788 = vrot.slane %v2787, 1
  %v2789 = vadd.f32 %v2787, %v2788
  %v2790 = vrot.slane %v2392, 4
  %v2791 = vadd.f32 %v2392, %v2790
  %v2792 = vrot.slane %v2791, 2
  %v2793 = vadd.f32 %v2791, %v2792
  %v2794 = vrot.slane %v2793, 1
  %v2795 = vadd.f32 %v2793, %v2794
  %v2796 = vrot.slane %v2393, 4
  %v2797 = vadd.f32 %v2393, %v2796
  %v2798 = vrot.slane %v2797, 2
  %v2799 = vadd.f32 %v2797, %v2798
  %v2800 = vrot.slane %v2799, 1
  %v2801 = vadd.f32 %v2799, %v2800
  %v2802 = vrot.slane %v2394, 4
  %v2803 = vadd.f32 %v2394, %v2802
  %v2804 = vrot.slane %v2803, 2
  %v2805 = vadd.f32 %v2803, %v2804
  %v2806 = vrot.slane %v2805, 1
  %v2807 = vadd.f32 %v2805, %v2806
  %v2808 = vrot.slane %v2395, 4
  %v2809 = vadd.f32 %v2395, %v2808
  %v2810 = vrot.slane %v2809, 2
  %v2811 = vadd.f32 %v2809, %v2810
  %v2812 = vrot.slane %v2811, 1
  %v2813 = vadd.f32 %v2811, %v2812
  %v2814 = vrot.slane %v2396, 4
  %v2815 = vadd.f32 %v2396, %v2814
  %v2816 = vrot.slane %v2815, 2
  %v2817 = vadd.f32 %v2815, %v2816
  %v2818 = vrot.slane %v2817, 1
  %v2819 = vadd.f32 %v2817, %v2818
  %v2820 = vrot.slane %v2397, 4
  %v2821 = vadd.f32 %v2397, %v2820
  %v2822 = vrot.slane %v2821, 2
  %v2823 = vadd.f32 %v2821, %v2822
  %v2824 = vrot.slane %v2823, 1
  %v2825 = vadd.f32 %v2823, %v2824
  %v2826 = vrot.slane %v2398, 4
  %v2827 = vadd.f32 %v2398, %v2826
  %v2828 = vrot.slane %v2827, 2
  %v2829 = vadd.f32 %v2827, %v2828
  %v2830 = vrot.slane %v2829, 1
  %v2831 = vadd.f32 %v2829, %v2830
  %v2832 = vrot.slane %v2399, 4
  %v2833 = vadd.f32 %v2399, %v2832
  %v2834 = vrot.slane %v2833, 2
  %v2835 = vadd.f32 %v2833, %v2834
  %v2836 = vrot.slane %v2835, 1
  %v2837 = vadd.f32 %v2835, %v2836
  %v2838 = vrot.slane %v2400, 4
  %v2839 = vadd.f32 %v2400, %v2838
  %v2840 = vrot.slane %v2839, 2
  %v2841 = vadd.f32 %v2839, %v2840
  %v2842 = vrot.slane %v2841, 1
  %v2843 = vadd.f32 %v2841, %v2842
  %v2844 = vrot.slane %v2401, 4
  %v2845 = vadd.f32 %v2401, %v2844
  %v2846 = vrot.slane %v2845, 2
  %v2847 = vadd.f32 %v2845, %v2846
  %v2848 = vrot.slane %v2847, 1
  %v2849 = vadd.f32 %v2847, %v2848
  %v2850 = vrot.slane %v2402, 4
  %v2851 = vadd.f32 %v2402, %v2850
  %v2852 = vrot.slane %v2851, 2
  %v2853 = vadd.f32 %v2851, %v2852
  %v2854 = vrot.slane %v2853, 1
  %v2855 = vadd.f32 %v2853, %v2854
  %v2856 = vrot.slane %v2403, 4
  %v2857 = vadd.f32 %v2403, %v2856
  %v2858 = vrot.slane %v2857, 2
  %v2859 = vadd.f32 %v2857, %v2858
  %v2860 = vrot.slane %v2859, 1
  %v2861 = vadd.f32 %v2859, %v2860
  %v2862 = vrot.slane %v2404, 4
  %v2863 = vadd.f32 %v2404, %v2862
  %v2864 = vrot.slane %v2863, 2
  %v2865 = vadd.f32 %v2863, %v2864
  %v2866 = vrot.slane %v2865, 1
  %v2867 = vadd.f32 %v2865, %v2866
  %v2868 = vrot.slane %v2405, 4
  %v2869 = vadd.f32 %v2405, %v2868
  %v2870 = vrot.slane %v2869, 2
  %v2871 = vadd.f32 %v2869, %v2870
  %v2872 = vrot.slane %v2871, 1
  %v2873 = vadd.f32 %v2871, %v2872
  %v2874 = vrot.slane %v2406, 4
  %v2875 = vadd.f32 %v2406, %v2874
  %v2876 = vrot.slane %v2875, 2
  %v2877 = vadd.f32 %v2875, %v2876
  %v2878 = vrot.slane %v2877, 1
  %v2879 = vadd.f32 %v2877, %v2878
  %v2880 = vrot.slane %v2407, 4
  %v2881 = vadd.f32 %v2407, %v2880
  %v2882 = vrot.slane %v2881, 2
  %v2883 = vadd.f32 %v2881, %v2882
  %v2884 = vrot.slane %v2883, 1
  %v2885 = vadd.f32 %v2883, %v2884
  %v2886 = vrot.slane %v2408, 4
  %v2887 = vadd.f32 %v2408, %v2886
  %v2888 = vrot.slane %v2887, 2
  %v2889 = vadd.f32 %v2887, %v2888
  %v2890 = vrot.slane %v2889, 1
  %v2891 = vadd.f32 %v2889, %v2890
  %v2892 = vrot.slane %v2409, 4
  %v2893 = vadd.f32 %v2409, %v2892
  %v2894 = vrot.slane %v2893, 2
  %v2895 = vadd.f32 %v2893, %v2894
  %v2896 = vrot.slane %v2895, 1
  %v2897 = vadd.f32 %v2895, %v2896
  %v2898 = vrot.slane %v2410, 4
  %v2899 = vadd.f32 %v2410, %v2898
  %v2900 = vrot.slane %v2899, 2
  %v2901 = vadd.f32 %v2899, %v2900
  %v2902 = vrot.slane %v2901, 1
  %v2903 = vadd.f32 %v2901, %v2902
  %v2904 = vrot.slane %v2411, 4
  %v2905 = vadd.f32 %v2411, %v2904
  %v2906 = vrot.slane %v2905, 2
  %v2907 = vadd.f32 %v2905, %v2906
  %v2908 = vrot.slane %v2907, 1
  %v2909 = vadd.f32 %v2907, %v2908
  %v2910 = vrot.slane %v2412, 4
  %v2911 = vadd.f32 %v2412, %v2910
  %v2912 = vrot.slane %v2911, 2
  %v2913 = vadd.f32 %v2911, %v2912
  %v2914 = vrot.slane %v2913, 1
  %v2915 = vadd.f32 %v2913, %v2914
  %v2916 = vrot.slane %v2413, 4
  %v2917 = vadd.f32 %v2413, %v2916
  %v2918 = vrot.slane %v2917, 2
  %v2919 = vadd.f32 %v2917, %v2918
  %v2920 = vrot.slane %v2919, 1
  %v2921 = vadd.f32 %v2919, %v2920
  %v2922 = vrot.slane %v2414, 4
  %v2923 = vadd.f32 %v2414, %v2922
  %v2924 = vrot.slane %v2923, 2
  %v2925 = vadd.f32 %v2923, %v2924
  %v2926 = vrot.slane %v2925, 1
  %v2927 = vadd.f32 %v2925, %v2926
  %v2928 = vrot.slane %v2415, 4
  %v2929 = vadd.f32 %v2415, %v2928
  %v2930 = vrot.slane %v2929, 2
  %v2931 = vadd.f32 %v2929, %v2930
  %v2932 = vrot.slane %v2931, 1
  %v2933 = vadd.f32 %v2931, %v2932
  %v2934 = vrot.slane %v2416, 4
  %v2935 = vadd.f32 %v2416, %v2934
  %v2936 = vrot.slane %v2935, 2
  %v2937 = vadd.f32 %v2935, %v2936
  %v2938 = vrot.slane %v2937, 1
  %v2939 = vadd.f32 %v2937, %v2938
  %v2940 = vrot.slane %v2417, 4
  %v2941 = vadd.f32 %v2417, %v2940
  %v2942 = vrot.slane %v2941, 2
  %v2943 = vadd.f32 %v2941, %v2942
  %v2944 = vrot.slane %v2943, 1
  %v2945 = vadd.f32 %v2943, %v2944
  %v2946 = vrot.slane %v2418, 4
  %v2947 = vadd.f32 %v2418, %v2946
  %v2948 = vrot.slane %v2947, 2
  %v2949 = vadd.f32 %v2947, %v2948
  %v2950 = vrot.slane %v2949, 1
  %v2951 = vadd.f32 %v2949, %v2950
  %v2952 = vrot.slane %v2419, 4
  %v2953 = vadd.f32 %v2419, %v2952
  %v2954 = vrot.slane %v2953, 2
  %v2955 = vadd.f32 %v2953, %v2954
  %v2956 = vrot.slane %v2955, 1
  %v2957 = vadd.f32 %v2955, %v2956
  %v2958 = vrot.slane %v2420, 4
  %v2959 = vadd.f32 %v2420, %v2958
  %v2960 = vrot.slane %v2959, 2
  %v2961 = vadd.f32 %v2959, %v2960
  %v2962 = vrot.slane %v2961, 1
  %v2963 = vadd.f32 %v2961, %v2962
  %v2964 = vrot.slane %v2421, 4
  %v2965 = vadd.f32 %v2421, %v2964
  %v2966 = vrot.slane %v2965, 2
  %v2967 = vadd.f32 %v2965, %v2966
  %v2968 = vrot.slane %v2967, 1
  %v2969 = vadd.f32 %v2967, %v2968
  %v2970 = vrot.slane %v2422, 4
  %v2971 = vadd.f32 %v2422, %v2970
  %v2972 = vrot.slane %v2971, 2
  %v2973 = vadd.f32 %v2971, %v2972
  %v2974 = vrot.slane %v2973, 1
  %v2975 = vadd.f32 %v2973, %v2974
  %v2976 = vrot.slane %v2423, 4
  %v2977 = vadd.f32 %v2423, %v2976
  %v2978 = vrot.slane %v2977, 2
  %v2979 = vadd.f32 %v2977, %v2978
  %v2980 = vrot.slane %v2979, 1
  %v2981 = vadd.f32 %v2979, %v2980
  %v2982 = vrot.slane %v2424, 4
  %v2983 = vadd.f32 %v2424, %v2982
  %v2984 = vrot.slane %v2983, 2
  %v2985 = vadd.f32 %v2983, %v2984
  %v2986 = vrot.slane %v2985, 1
  %v2987 = vadd.f32 %v2985, %v2986
  %v2988 = vrot.slane %v2425, 4
  %v2989 = vadd.f32 %v2425, %v2988
  %v2990 = vrot.slane %v2989, 2
  %v2991 = vadd.f32 %v2989, %v2990
  %v2992 = vrot.slane %v2991, 1
  %v2993 = vadd.f32 %v2991, %v2992
  %v2994 = vrot.slane %v2426, 4
  %v2995 = vadd.f32 %v2426, %v2994
  %v2996 = vrot.slane %v2995, 2
  %v2997 = vadd.f32 %v2995, %v2996
  %v2998 = vrot.slane %v2997, 1
  %v2999 = vadd.f32 %v2997, %v2998
  %v3000 = vrot.slane %v2427, 4
  %v3001 = vadd.f32 %v2427, %v3000
  %v3002 = vrot.slane %v3001, 2
  %v3003 = vadd.f32 %v3001, %v3002
  %v3004 = vrot.slane %v3003, 1
  %v3005 = vadd.f32 %v3003, %v3004
  %v3006 = vrot.slane %v2428, 4
  %v3007 = vadd.f32 %v2428, %v3006
  %v3008 = vrot.slane %v3007, 2
  %v3009 = vadd.f32 %v3007, %v3008
  %v3010 = vrot.slane %v3009, 1
  %v3011 = vadd.f32 %v3009, %v3010
  %v3012 = vrot.slane %v2429, 4
  %v3013 = vadd.f32 %v2429, %v3012
  %v3014 = vrot.slane %v3013, 2
  %v3015 = vadd.f32 %v3013, %v3014
  %v3016 = vrot.slane %v3015, 1
  %v3017 = vadd.f32 %v3015, %v3016
  %v3018 = vrot.slane %v2430, 4
  %v3019 = vadd.f32 %v2430, %v3018
  %v3020 = vrot.slane %v3019, 2
  %v3021 = vadd.f32 %v3019, %v3020
  %v3022 = vrot.slane %v3021, 1
  %v3023 = vadd.f32 %v3021, %v3022
  %v3024 = vrot.slane %v2431, 4
  %v3025 = vadd.f32 %v2431, %v3024
  %v3026 = vrot.slane %v3025, 2
  %v3027 = vadd.f32 %v3025, %v3026
  %v3028 = vrot.slane %v3027, 1
  %v3029 = vadd.f32 %v3027, %v3028
  %v3030 = vrot.slane %v2432, 4
  %v3031 = vadd.f32 %v2432, %v3030
  %v3032 = vrot.slane %v3031, 2
  %v3033 = vadd.f32 %v3031, %v3032
  %v3034 = vrot.slane %v3033, 1
  %v3035 = vadd.f32 %v3033, %v3034
  %v3036 = vrot.slane %v2433, 4
  %v3037 = vadd.f32 %v2433, %v3036
  %v3038 = vrot.slane %v3037, 2
  %v3039 = vadd.f32 %v3037, %v3038
  %v3040 = vrot.slane %v3039, 1
  %v3041 = vadd.f32 %v3039, %v3040
  %v3042 = vrot.slane %v2434, 4
  %v3043 = vadd.f32 %v2434, %v3042
  %v3044 = vrot.slane %v3043, 2
  %v3045 = vadd.f32 %v3043, %v3044
  %v3046 = vrot.slane %v3045, 1
  %v3047 = vadd.f32 %v3045, %v3046
  %v3048 = vrot.slane %v2435, 4
  %v3049 = vadd.f32 %v2435, %v3048
  %v3050 = vrot.slane %v3049, 2
  %v3051 = vadd.f32 %v3049, %v3050
  %v3052 = vrot.slane %v3051, 1
  %v3053 = vadd.f32 %v3051, %v3052
  %v3054 = vrot.slane %v2436, 4
  %v3055 = vadd.f32 %v2436, %v3054
  %v3056 = vrot.slane %v3055, 2
  %v3057 = vadd.f32 %v3055, %v3056
  %v3058 = vrot.slane %v3057, 1
  %v3059 = vadd.f32 %v3057, %v3058
  %v3060 = vrot.slane %v2437, 4
  %v3061 = vadd.f32 %v2437, %v3060
  %v3062 = vrot.slane %v3061, 2
  %v3063 = vadd.f32 %v3061, %v3062
  %v3064 = vrot.slane %v3063, 1
  %v3065 = vadd.f32 %v3063, %v3064
  %v3066 = vrot.slane %v2438, 4
  %v3067 = vadd.f32 %v2438, %v3066
  %v3068 = vrot.slane %v3067, 2
  %v3069 = vadd.f32 %v3067, %v3068
  %v3070 = vrot.slane %v3069, 1
  %v3071 = vadd.f32 %v3069, %v3070
  %v3072 = vrot.slane %v2439, 4
  %v3073 = vadd.f32 %v2439, %v3072
  %v3074 = vrot.slane %v3073, 2
  %v3075 = vadd.f32 %v3073, %v3074
  %v3076 = vrot.slane %v3075, 1
  %v3077 = vadd.f32 %v3075, %v3076
  %v3078 = vrot.slane %v2440, 4
  %v3079 = vadd.f32 %v2440, %v3078
  %v3080 = vrot.slane %v3079, 2
  %v3081 = vadd.f32 %v3079, %v3080
  %v3082 = vrot.slane %v3081, 1
  %v3083 = vadd.f32 %v3081, %v3082
  %v3084 = vrot.slane %v2441, 4
  %v3085 = vadd.f32 %v2441, %v3084
  %v3086 = vrot.slane %v3085, 2
  %v3087 = vadd.f32 %v3085, %v3086
  %v3088 = vrot.slane %v3087, 1
  %v3089 = vadd.f32 %v3087, %v3088
  %v3090 = vrot.slane %v2442, 4
  %v3091 = vadd.f32 %v2442, %v3090
  %v3092 = vrot.slane %v3091, 2
  %v3093 = vadd.f32 %v3091, %v3092
  %v3094 = vrot.slane %v3093, 1
  %v3095 = vadd.f32 %v3093, %v3094
  %v3096 = vrot.slane %v2443, 4
  %v3097 = vadd.f32 %v2443, %v3096
  %v3098 = vrot.slane %v3097, 2
  %v3099 = vadd.f32 %v3097, %v3098
  %v3100 = vrot.slane %v3099, 1
  %v3101 = vadd.f32 %v3099, %v3100
  %v3102 = vrot.slane %v2444, 4
  %v3103 = vadd.f32 %v2444, %v3102
  %v3104 = vrot.slane %v3103, 2
  %v3105 = vadd.f32 %v3103, %v3104
  %v3106 = vrot.slane %v3105, 1
  %v3107 = vadd.f32 %v3105, %v3106
  %v3108 = vrot.slane %v2445, 4
  %v3109 = vadd.f32 %v2445, %v3108
  %v3110 = vrot.slane %v3109, 2
  %v3111 = vadd.f32 %v3109, %v3110
  %v3112 = vrot.slane %v3111, 1
  %v3113 = vadd.f32 %v3111, %v3112
  %v3114 = vrot.slane %v2446, 4
  %v3115 = vadd.f32 %v2446, %v3114
  %v3116 = vrot.slane %v3115, 2
  %v3117 = vadd.f32 %v3115, %v3116
  %v3118 = vrot.slane %v3117, 1
  %v3119 = vadd.f32 %v3117, %v3118
  %v3120 = vrot.slane %v2447, 4
  %v3121 = vadd.f32 %v2447, %v3120
  %v3122 = vrot.slane %v3121, 2
  %v3123 = vadd.f32 %v3121, %v3122
  %v3124 = vrot.slane %v3123, 1
  %v3125 = vadd.f32 %v3123, %v3124
  %v3126 = vrot.slane %v2448, 4
  %v3127 = vadd.f32 %v2448, %v3126
  %v3128 = vrot.slane %v3127, 2
  %v3129 = vadd.f32 %v3127, %v3128
  %v3130 = vrot.slane %v3129, 1
  %v3131 = vadd.f32 %v3129, %v3130
  %v3132 = vrot.slane %v2449, 4
  %v3133 = vadd.f32 %v2449, %v3132
  %v3134 = vrot.slane %v3133, 2
  %v3135 = vadd.f32 %v3133, %v3134
  %v3136 = vrot.slane %v3135, 1
  %v3137 = vadd.f32 %v3135, %v3136
  %v3138 = vrot.slane %v2450, 4
  %v3139 = vadd.f32 %v2450, %v3138
  %v3140 = vrot.slane %v3139, 2
  %v3141 = vadd.f32 %v3139, %v3140
  %v3142 = vrot.slane %v3141, 1
  %v3143 = vadd.f32 %v3141, %v3142
  %v3144 = vrot.slane %v2451, 4
  %v3145 = vadd.f32 %v2451, %v3144
  %v3146 = vrot.slane %v3145, 2
  %v3147 = vadd.f32 %v3145, %v3146
  %v3148 = vrot.slane %v3147, 1
  %v3149 = vadd.f32 %v3147, %v3148
  %v3150 = vrot.slane %v2452, 4
  %v3151 = vadd.f32 %v2452, %v3150
  %v3152 = vrot.slane %v3151, 2
  %v3153 = vadd.f32 %v3151, %v3152
  %v3154 = vrot.slane %v3153, 1
  %v3155 = vadd.f32 %v3153, %v3154
  %v3156 = vrot.slane %v2453, 4
  %v3157 = vadd.f32 %v2453, %v3156
  %v3158 = vrot.slane %v3157, 2
  %v3159 = vadd.f32 %v3157, %v3158
  %v3160 = vrot.slane %v3159, 1
  %v3161 = vadd.f32 %v3159, %v3160
  %v3162 = vrot.slane %v2454, 4
  %v3163 = vadd.f32 %v2454, %v3162
  %v3164 = vrot.slane %v3163, 2
  %v3165 = vadd.f32 %v3163, %v3164
  %v3166 = vrot.slane %v3165, 1
  %v3167 = vadd.f32 %v3165, %v3166
  %v3168 = vrot.slane %v2455, 4
  %v3169 = vadd.f32 %v2455, %v3168
  %v3170 = vrot.slane %v3169, 2
  %v3171 = vadd.f32 %v3169, %v3170
  %v3172 = vrot.slane %v3171, 1
  %v3173 = vadd.f32 %v3171, %v3172
  %v3174 = vrot.slane %v2456, 4
  %v3175 = vadd.f32 %v2456, %v3174
  %v3176 = vrot.slane %v3175, 2
  %v3177 = vadd.f32 %v3175, %v3176
  %v3178 = vrot.slane %v3177, 1
  %v3179 = vadd.f32 %v3177, %v3178
  %v3180 = vrot.slane %v2457, 4
  %v3181 = vadd.f32 %v2457, %v3180
  %v3182 = vrot.slane %v3181, 2
  %v3183 = vadd.f32 %v3181, %v3182
  %v3184 = vrot.slane %v3183, 1
  %v3185 = vadd.f32 %v3183, %v3184
  %v3186 = vrot.slane %v2458, 4
  %v3187 = vadd.f32 %v2458, %v3186
  %v3188 = vrot.slane %v3187, 2
  %v3189 = vadd.f32 %v3187, %v3188
  %v3190 = vrot.slane %v3189, 1
  %v3191 = vadd.f32 %v3189, %v3190
  %v3192 = vrot.slane %v2459, 4
  %v3193 = vadd.f32 %v2459, %v3192
  %v3194 = vrot.slane %v3193, 2
  %v3195 = vadd.f32 %v3193, %v3194
  %v3196 = vrot.slane %v3195, 1
  %v3197 = vadd.f32 %v3195, %v3196
  %v3198 = vrot.slane %v2460, 4
  %v3199 = vadd.f32 %v2460, %v3198
  %v3200 = vrot.slane %v3199, 2
  %v3201 = vadd.f32 %v3199, %v3200
  %v3202 = vrot.slane %v3201, 1
  %v3203 = vadd.f32 %v3201, %v3202
  %v3204 = vrot.slane %v2461, 4
  %v3205 = vadd.f32 %v2461, %v3204
  %v3206 = vrot.slane %v3205, 2
  %v3207 = vadd.f32 %v3205, %v3206
  %v3208 = vrot.slane %v3207, 1
  %v3209 = vadd.f32 %v3207, %v3208
  %v3210 = vrot.slane %v2462, 4
  %v3211 = vadd.f32 %v2462, %v3210
  %v3212 = vrot.slane %v3211, 2
  %v3213 = vadd.f32 %v3211, %v3212
  %v3214 = vrot.slane %v3213, 1
  %v3215 = vadd.f32 %v3213, %v3214
  %v3216 = vrot.slane %v2463, 4
  %v3217 = vadd.f32 %v2463, %v3216
  %v3218 = vrot.slane %v3217, 2
  %v3219 = vadd.f32 %v3217, %v3218
  %v3220 = vrot.slane %v3219, 1
  %v3221 = vadd.f32 %v3219, %v3220
  %v3222 = vrot.slane %v2464, 4
  %v3223 = vadd.f32 %v2464, %v3222
  %v3224 = vrot.slane %v3223, 2
  %v3225 = vadd.f32 %v3223, %v3224
  %v3226 = vrot.slane %v3225, 1
  %v3227 = vadd.f32 %v3225, %v3226
  %v3228 = vrot.slane %v2465, 4
  %v3229 = vadd.f32 %v2465, %v3228
  %v3230 = vrot.slane %v3229, 2
  %v3231 = vadd.f32 %v3229, %v3230
  %v3232 = vrot.slane %v3231, 1
  %v3233 = vadd.f32 %v3231, %v3232
  %v3234 = vld [vmem:[%s3] sm:$0x3]
  %v3236 = vperm.slane %v3234, 0
  %v3237 = vperm.slane %v3234, 1
  %v3240 = vmul.f32 %v3236, %v26
  %v3241 = vmul.f32 %v3237, %v27
  %v3242 = vmul.f32 %v3236, %v28
  %v3243 = vmul.f32 %v3237, %v29
  %v3244 = vmul.f32 %v3236, %v30
  %v3245 = vmul.f32 %v3237, %v31
  %v3246 = vmul.f32 %v3236, %v32
  %v3247 = vmul.f32 %v3237, %v33
  %v3248 = vmul.f32 %v3236, %v34
  %v3249 = vmul.f32 %v3237, %v35
  %v3250 = vmul.f32 %v3236, %v36
  %v3251 = vmul.f32 %v3237, %v37
  %v3252 = vmul.f32 %v3236, %v38
  %v3253 = vmul.f32 %v3237, %v39
  %v3254 = vmul.f32 %v3236, %v40
  %v3255 = vmul.f32 %v3237, %v41
  %v3272 = vrot.slane %v3240, 1
  %v3273 = vrot.slane %v3241, 1
  %v3274 = vrot.slane %v3240, 2
  %v3275 = vrot.slane %v3241, 2
  %v3276 = vrot.slane %v3240, 3
  %v3277 = vrot.slane %v3241, 3
  %v3278 = vrot.slane %v3240, 4
  %v3279 = vrot.slane %v3241, 4
  %v3280 = vrot.slane %v3240, 5
  %v3281 = vrot.slane %v3241, 5
  %v3282 = vrot.slane %v3240, 6
  %v3283 = vrot.slane %v3241, 6
  %v3284 = vrot.slane %v3240, 7
  %v3285 = vrot.slane %v3241, 7
  %v3286 = vrot.slane %v3242, 1
  %v3287 = vrot.slane %v3243, 1
  %v3288 = vrot.slane %v3242, 2
  %v3289 = vrot.slane %v3243, 2
  %v3290 = vrot.slane %v3242, 3
  %v3291 = vrot.slane %v3243, 3
  %v3292 = vrot.slane %v3242, 4
  %v3293 = vrot.slane %v3243, 4
  %v3294 = vrot.slane %v3242, 5
  %v3295 = vrot.slane %v3243, 5
  %v3296 = vrot.slane %v3242, 6
  %v3297 = vrot.slane %v3243, 6
  %v3298 = vrot.slane %v3242, 7
  %v3299 = vrot.slane %v3243, 7
  %v3300 = vrot.slane %v3244, 1
  %v3301 = vrot.slane %v3245, 1
  %v3302 = vrot.slane %v3244, 2
  %v3303 = vrot.slane %v3245, 2
  %v3304 = vrot.slane %v3244, 3
  %v3305 = vrot.slane %v3245, 3
  %v3306 = vrot.slane %v3244, 4
  %v3307 = vrot.slane %v3245, 4
  %v3308 = vrot.slane %v3244, 5
  %v3309 = vrot.slane %v3245, 5
  %v3310 = vrot.slane %v3244, 6
  %v3311 = vrot.slane %v3245, 6
  %v3312 = vrot.slane %v3244, 7
  %v3313 = vrot.slane %v3245, 7
  %v3314 = vrot.slane %v3246, 1
  %v3315 = vrot.slane %v3247, 1
  %v3316 = vrot.slane %v3246, 2
  %v3317 = vrot.slane %v3247, 2
  %v3318 = vrot.slane %v3246, 3
  %v3319 = vrot.slane %v3247, 3
  %v3320 = vrot.slane %v3246, 4
  %v3321 = vrot.slane %v3247, 4
  %v3322 = vrot.slane %v3246, 5
  %v3323 = vrot.slane %v3247, 5
  %v3324 = vrot.slane %v3246, 6
  %v3325 = vrot.slane %v3247, 6
  %v3326 = vrot.slane %v3246, 7
  %v3327 = vrot.slane %v3247, 7
  %v3328 = vrot.slane %v3248, 1
  %v3329 = vrot.slane %v3249, 1
  %v3330 = vrot.slane %v3248, 2
  %v3331 = vrot.slane %v3249, 2
  %v3332 = vrot.slane %v3248, 3
  %v3333 = vrot.slane %v3249, 3
  %v3334 = vrot.slane %v3248, 4
  %v3335 = vrot.slane %v3249, 4
  %v3336 = vrot.slane %v3248, 5
  %v3337 = vrot.slane %v3249, 5
  %v3338 = vrot.slane %v3248, 6
  %v3339 = vrot.slane %v3249, 6
  %v3340 = vrot.slane %v3248, 7
  %v3341 = vrot.slane %v3249, 7
  %v3342 = vrot.slane %v3250, 1
  %v3343 = vrot.slane %v3251, 1
  %v3344 = vrot.slane %v3250, 2
  %v3345 = vrot.slane %v3251, 2
  %v3346 = vrot.slane %v3250, 3
  %v3347 = vrot.slane %v3251, 3
  %v3348 = vrot.slane %v3250, 4
  %v3349 = vrot.slane %v3251, 4
  %v3350 = vrot.slane %v3250, 5
  %v3351 = vrot.slane %v3251, 5
  %v3352 = vrot.slane %v3250, 6
  %v3353 = vrot.slane %v3251, 6
  %v3354 = vrot.slane %v3250, 7
  %v3355 = vrot.slane %v3251, 7
  %v3356 = vrot.slane %v3252, 1
  %v3357 = vrot.slane %v3253, 1
  %v3358 = vrot.slane %v3252, 2
  %v3359 = vrot.slane %v3253, 2
  %v3360 = vrot.slane %v3252, 3
  %v3361 = vrot.slane %v3253, 3
  %v3362 = vrot.slane %v3252, 4
  %v3363 = vrot.slane %v3253, 4
  %v3364 = vrot.slane %v3252, 5
  %v3365 = vrot.slane %v3253, 5
  %v3366 = vrot.slane %v3252, 6
  %v3367 = vrot.slane %v3253, 6
  %v3368 = vrot.slane %v3252, 7
  %v3369 = vrot.slane %v3253, 7
  %v3370 = vrot.slane %v3254, 1
  %v3371 = vrot.slane %v3255, 1
  %v3372 = vrot.slane %v3254, 2
  %v3373 = vrot.slane %v3255, 2
  %v3374 = vrot.slane %v3254, 3
  %v3375 = vrot.slane %v3255, 3
  %v3376 = vrot.slane %v3254, 4
  %v3377 = vrot.slane %v3255, 4
  %v3378 = vrot.slane %v3254, 5
  %v3379 = vrot.slane %v3255, 5
  %v3380 = vrot.slane %v3254, 6
  %v3381 = vrot.slane %v3255, 6
  %v3382 = vrot.slane %v3254, 7
  %v3383 = vrot.slane %v3255, 7
  %v3512 = vadd.f32 %v2471, %v3240
  %v3513 = vadd.f32 %v2477, %v3241
  %v3514 = vadd.f32 %v2483, %v3272
  %v3515 = vadd.f32 %v2489, %v3273
  %v3516 = vadd.f32 %v2495, %v3274
  %v3517 = vadd.f32 %v2501, %v3275
  %v3518 = vadd.f32 %v2507, %v3276
  %v3519 = vadd.f32 %v2513, %v3277
  %v3520 = vadd.f32 %v2519, %v3278
  %v3521 = vadd.f32 %v2525, %v3279
  %v3522 = vadd.f32 %v2531, %v3280
  %v3523 = vadd.f32 %v2537, %v3281
  %v3524 = vadd.f32 %v2543, %v3282
  %v3525 = vadd.f32 %v2549, %v3283
  %v3526 = vadd.f32 %v2555, %v3284
  %v3527 = vadd.f32 %v2561, %v3285
  %v3528 = vadd.f32 %v2567, %v3242
  %v3529 = vadd.f32 %v2573, %v3243
  %v3530 = vadd.f32 %v2579, %v3286
  %v3531 = vadd.f32 %v2585, %v3287
  %v3532 = vadd.f32 %v2591, %v3288
  %v3533 = vadd.f32 %v2597, %v3289
  %v3534 = vadd.f32 %v2603, %v3290
  %v3535 = vadd.f32 %v2609, %v3291
  %v3536 = vadd.f32 %v2615, %v3292
  %v3537 = vadd.f32 %v2621, %v3293
  %v3538 = vadd.f32 %v2627, %v3294
  %v3539 = vadd.f32 %v2633, %v3295
  %v3540 = vadd.f32 %v2639, %v3296
  %v3541 = vadd.f32 %v2645, %v3297
  %v3542 = vadd.f32 %v2651, %v3298
  %v3543 = vadd.f32 %v2657, %v3299
  %v3544 = vadd.f32 %v2663, %v3244
  %v3545 = vadd.f32 %v2669, %v3245
  %v3546 = vadd.f32 %v2675, %v3300
  %v3547 = vadd.f32 %v2681, %v3301
  %v3548 = vadd.f32 %v2687, %v3302
  %v3549 = vadd.f32 %v2693, %v3303
  %v3550 = vadd.f32 %v2699, %v3304
  %v3551 = vadd.f32 %v2705, %v3305
  %v3552 = vadd.f32 %v2711, %v3306
  %v3553 = vadd.f32 %v2717, %v3307
  %v3554 = vadd.f32 %v2723, %v3308
  %v3555 = vadd.f32 %v2729, %v3309
  %v3556 = vadd.f32 %v2735, %v3310
  %v3557 = vadd.f32 %v2741, %v3311
  %v3558 = vadd.f32 %v2747, %v3312
  %v3559 = vadd.f32 %v2753, %v3313
  %v3560 = vadd.f32 %v2759, %v3246
  %v3561 = vadd.f32 %v2765, %v3247
  %v3562 = vadd.f32 %v2771, %v3314
  %v3563 = vadd.f32 %v2777, %v3315
  %v3564 = vadd.f32 %v2783, %v3316
  %v3565 = vadd.f32 %v2789, %v3317
  %v3566 = vadd.f32 %v2795, %v3318
  %v3567 = vadd.f32 %v2801, %v3319
  %v3568 = vadd.f32 %v2807, %v3320
  %v3569 = vadd.f32 %v2813, %v3321
  %v3570 = vadd.f32 %v2819, %v3322
  %v3571 = vadd.f32 %v2825, %v3323
  %v3572 = vadd.f32 %v2831, %v3324
  %v3573 = vadd.f32 %v2837, %v3325
  %v3574 = vadd.f32 %v2843, %v3326
  %v3575 = vadd.f32 %v2849, %v3327
  %v3576 = vadd.f32 %v2855, %v3248
  %v3577 = vadd.f32 %v2861, %v3249
  %v3578 = vadd.f32 %v2867, %v3328
  %v3579 = vadd.f32 %v2873, %v3329
  %v3580 = vadd.f32 %v2879, %v3330
  %v3581 = vadd.f32 %v2885, %v3331
  %v3582 = vadd.f32 %v2891, %v3332
  %v3583 = vadd.f32 %v2897, %v3333
  %v3584 = vadd.f32 %v2903, %v3334
  %v3585 = vadd.f32 %v2909, %v3335
  %v3586 = vadd.f32 %v2915, %v3336
  %v3587 = vadd.f32 %v2921, %v3337
  %v3588 = vadd.f32 %v2927, %v3338
  %v3589 = vadd.f32 %v2933, %v3339
  %v3590 = vadd.f32 %v2939, %v3340
  %v3591 = vadd.f32 %v2945, %v3341
  %v3592 = vadd.f32 %v2951, %v3250
  %v3593 = vadd.f32 %v2957, %v3251
  %v3594 = vadd.f32 %v2963, %v3342
  %v3595 = vadd.f32 %v2969, %v3343
  %v3596 = vadd.f32 %v2975, %v3344
  %v3597 = vadd.f32 %v2981, %v3345
  %v3598 = vadd.f32 %v2987, %v3346
  %v3599 = vadd.f32 %v2993, %v3347
  %v3600 = vadd.f32 %v2999, %v3348
  %v3601 = vadd.f32 %v3005, %v3349
  %v3602 = vadd.f32 %v3011, %v3350
  %v3603 = vadd.f32 %v3017, %v3351
  %v3604 = vadd.f32 %v3023, %v3352
  %v3605 = vadd.f32 %v3029, %v3353
  %v3606 = vadd.f32 %v3035, %v3354
  %v3607 = vadd.f32 %v3041, %v3355
  %v3608 = vadd.f32 %v3047, %v3252
  %v3609 = vadd.f32 %v3053, %v3253
  %v3610 = vadd.f32 %v3059, %v3356
  %v3611 = vadd.f32 %v3065, %v3357
  %v3612 = vadd.f32 %v3071, %v3358
  %v3613 = vadd.f32 %v3077, %v3359
  %v3614 = vadd.f32 %v3083, %v3360
  %v3615 = vadd.f32 %v3089, %v3361
  %v3616 = vadd.f32 %v3095, %v3362
  %v3617 = vadd.f32 %v3101, %v3363
  %v3618 = vadd.f32 %v3107, %v3364
  %v3619 = vadd.f32 %v3113, %v3365
  %v3620 = vadd.f32 %v3119, %v3366
  %v3621 = vadd.f32 %v3125, %v3367
  %v3622 = vadd.f32 %v3131, %v3368
  %v3623 = vadd.f32 %v3137, %v3369
  %v3624 = vadd.f32 %v3143, %v3254
  %v3625 = vadd.f32 %v3149, %v3255
  %v3626 = vadd.f32 %v3155, %v3370
  %v3627 = vadd.f32 %v3161, %v3371
  %v3628 = vadd.f32 %v3167, %v3372
  %v3629 = vadd.f32 %v3173, %v3373
  %v3630 = vadd.f32 %v3179, %v3374
  %v3631 = vadd.f32 %v3185, %v3375
  %v3632 = vadd.f32 %v3191, %v3376
  %v3633 = vadd.f32 %v3197, %v3377
  %v3634 = vadd.f32 %v3203, %v3378
  %v3635 = vadd.f32 %v3209, %v3379
  %v3636 = vadd.f32 %v3215, %v3380
  %v3637 = vadd.f32 %v3221, %v3381
  %v3638 = vadd.f32 %v3227, %v3382
  %v3639 = vadd.f32 %v3233, %v3383
  %v3768 = vrot.slane %v3514, 7
  %v3769 = vsel %vm250, %v3768, %v3512
  %v3770 = vrot.slane %v3516, 6
  %v3771 = vsel %vm253, %v3770, %v3769
  %v3772 = vrot.slane %v3518, 5
  %v3773 = vsel %vm256, %v3772, %v3771
  %v3774 = vrot.slane %v3520, 4
  %v3775 = vsel %vm259, %v3774, %v3773
  %v3776 = vrot.slane %v3522, 3
  %v3777 = vsel %vm262, %v3776, %v3775
  %v3778 = vrot.slane %v3524, 2
  %v3779 = vsel %vm265, %v3778, %v3777
  %v3780 = vrot.slane %v3526, 1
  %vm3781 = vcmask 1047559
  %v3782 = vsel %vm3781, %v3780, %v3779
  %v3783 = vrot.slane %v3515, 7
  %v3784 = vsel %vm250, %v3783, %v3513
  %v3785 = vrot.slane %v3517, 6
  %v3786 = vsel %vm253, %v3785, %v3784
  %v3787 = vrot.slane %v3519, 5
  %v3788 = vsel %vm256, %v3787, %v3786
  %v3789 = vrot.slane %v3521, 4
  %v3790 = vsel %vm259, %v3789, %v3788
  %v3791 = vrot.slane %v3523, 3
  %v3792 = vsel %vm262, %v3791, %v3790
  %v3793 = vrot.slane %v3525, 2
  %v3794 = vsel %vm265, %v3793, %v3792
  %v3795 = vrot.slane %v3527, 1
  %v3796 = vsel %vm3781, %v3795, %v3794
  %v3797 = vrot.slane %v3530, 7
  %v3798 = vsel %vm250, %v3797, %v3528
  %v3799 = vrot.slane %v3532, 6
  %v3800 = vsel %vm253, %v3799, %v3798
  %v3801 = vrot.slane %v3534, 5
  %v3802 = vsel %vm256, %v3801, %v3800
  %v3803 = vrot.slane %v3536, 4
  %v3804 = vsel %vm259, %v3803, %v3802
  %v3805 = vrot.slane %v3538, 3
  %v3806 = vsel %vm262, %v3805, %v3804
  %v3807 = vrot.slane %v3540, 2
  %v3808 = vsel %vm265, %v3807, %v3806
  %v3809 = vrot.slane %v3542, 1
  %v3810 = vsel %vm3781, %v3809, %v3808
  %v3811 = vrot.slane %v3531, 7
  %v3812 = vsel %vm250, %v3811, %v3529
  %v3813 = vrot.slane %v3533, 6
  %v3814 = vsel %vm253, %v3813, %v3812
  %v3815 = vrot.slane %v3535, 5
  %v3816 = vsel %vm256, %v3815, %v3814
  %v3817 = vrot.slane %v3537, 4
  %v3818 = vsel %vm259, %v3817, %v3816
  %v3819 = vrot.slane %v3539, 3
  %v3820 = vsel %vm262, %v3819, %v3818
  %v3821 = vrot.slane %v3541, 2
  %v3822 = vsel %vm265, %v3821, %v3820
  %v3823 = vrot.slane %v3543, 1
  %v3824 = vsel %vm3781, %v3823, %v3822
  %v3825 = vrot.slane %v3546, 7
  %v3826 = vsel %vm250, %v3825, %v3544
  %v3827 = vrot.slane %v3548, 6
  %v3828 = vsel %vm253, %v3827, %v3826
  %v3829 = vrot.slane %v3550, 5
  %v3830 = vsel %vm256, %v3829, %v3828
  %v3831 = vrot.slane %v3552, 4
  %v3832 = vsel %vm259, %v3831, %v3830
  %v3833 = vrot.slane %v3554, 3
  %v3834 = vsel %vm262, %v3833, %v3832
  %v3835 = vrot.slane %v3556, 2
  %v3836 = vsel %vm265, %v3835, %v3834
  %v3837 = vrot.slane %v3558, 1
  %v3838 = vsel %vm3781, %v3837, %v3836
  %v3839 = vrot.slane %v3547, 7
  %v3840 = vsel %vm250, %v3839, %v3545
  %v3841 = vrot.slane %v3549, 6
  %v3842 = vsel %vm253, %v3841, %v3840
  %v3843 = vrot.slane %v3551, 5
  %v3844 = vsel %vm256, %v3843, %v3842
  %v3845 = vrot.slane %v3553, 4
  %v3846 = vsel %vm259, %v3845, %v3844
  %v3847 = vrot.slane %v3555, 3
  %v3848 = vsel %vm262, %v3847, %v3846
  %v3849 = vrot.slane %v3557, 2
  %v3850 = vsel %vm265, %v3849, %v3848
  %v3851 = vrot.slane %v3559, 1
  %v3852 = vsel %vm3781, %v3851, %v3850
  %v3853 = vrot.slane %v3562, 7
  %v3854 = vsel %vm250, %v3853, %v3560
  %v3855 = vrot.slane %v3564, 6
  %v3856 = vsel %vm253, %v3855, %v3854
  %v3857 = vrot.slane %v3566, 5
  %v3858 = vsel %vm256, %v3857, %v3856
  %v3859 = vrot.slane %v3568, 4
  %v3860 = vsel %vm259, %v3859, %v3858
  %v3861 = vrot.slane %v3570, 3
  %v3862 = vsel %vm262, %v3861, %v3860
  %v3863 = vrot.slane %v3572, 2
  %v3864 = vsel %vm265, %v3863, %v3862
  %v3865 = vrot.slane %v3574, 1
  %v3866 = vsel %vm3781, %v3865, %v3864
  %v3867 = vrot.slane %v3563, 7
  %v3868 = vsel %vm250, %v3867, %v3561
  %v3869 = vrot.slane %v3565, 6
  %v3870 = vsel %vm253, %v3869, %v3868
  %v3871 = vrot.slane %v3567, 5
  %v3872 = vsel %vm256, %v3871, %v3870
  %v3873 = vrot.slane %v3569, 4
  %v3874 = vsel %vm259, %v3873, %v3872
  %v3875 = vrot.slane %v3571, 3
  %v3876 = vsel %vm262, %v3875, %v3874
  %v3877 = vrot.slane %v3573, 2
  %v3878 = vsel %vm265, %v3877, %v3876
  %v3879 = vrot.slane %v3575, 1
  %v3880 = vsel %vm3781, %v3879, %v3878
  %v3881 = vrot.slane %v3578, 7
  %v3882 = vsel %vm250, %v3881, %v3576
  %v3883 = vrot.slane %v3580, 6
  %v3884 = vsel %vm253, %v3883, %v3882
  %v3885 = vrot.slane %v3582, 5
  %v3886 = vsel %vm256, %v3885, %v3884
  %v3887 = vrot.slane %v3584, 4
  %v3888 = vsel %vm259, %v3887, %v3886
  %v3889 = vrot.slane %v3586, 3
  %v3890 = vsel %vm262, %v3889, %v3888
  %v3891 = vrot.slane %v3588, 2
  %v3892 = vsel %vm265, %v3891, %v3890
  %v3893 = vrot.slane %v3590, 1
  %v3894 = vsel %vm3781, %v3893, %v3892
  %v3895 = vrot.slane %v3579, 7
  %v3896 = vsel %vm250, %v3895, %v3577
  %v3897 = vrot.slane %v3581, 6
  %v3898 = vsel %vm253, %v3897, %v3896
  %v3899 = vrot.slane %v3583, 5
  %v3900 = vsel %vm256, %v3899, %v3898
  %v3901 = vrot.slane %v3585, 4
  %v3902 = vsel %vm259, %v3901, %v3900
  %v3903 = vrot.slane %v3587, 3
  %v3904 = vsel %vm262, %v3903, %v3902
  %v3905 = vrot.slane %v3589, 2
  %v3906 = vsel %vm265, %v3905, %v3904
  %v3907 = vrot.slane %v3591, 1
  %v3908 = vsel %vm3781, %v3907, %v3906
  %v3909 = vrot.slane %v3594, 7
  %v3910 = vsel %vm250, %v3909, %v3592
  %v3911 = vrot.slane %v3596, 6
  %v3912 = vsel %vm253, %v3911, %v3910
  %v3913 = vrot.slane %v3598, 5
  %v3914 = vsel %vm256, %v3913, %v3912
  %v3915 = vrot.slane %v3600, 4
  %v3916 = vsel %vm259, %v3915, %v3914
  %v3917 = vrot.slane %v3602, 3
  %v3918 = vsel %vm262, %v3917, %v3916
  %v3919 = vrot.slane %v3604, 2
  %v3920 = vsel %vm265, %v3919, %v3918
  %v3921 = vrot.slane %v3606, 1
  %v3922 = vsel %vm3781, %v3921, %v3920
  %v3923 = vrot.slane %v3595, 7
  %v3924 = vsel %vm250, %v3923, %v3593
  %v3925 = vrot.slane %v3597, 6
  %v3926 = vsel %vm253, %v3925, %v3924
  %v3927 = vrot.slane %v3599, 5
  %v3928 = vsel %vm256, %v3927, %v3926
  %v3929 = vrot.slane %v3601, 4
  %v3930 = vsel %vm259, %v3929, %v3928
  %v3931 = vrot.slane %v3603, 3
  %v3932 = vsel %vm262, %v3931, %v3930
  %v3933 = vrot.slane %v3605, 2
  %v3934 = vsel %vm265, %v3933, %v3932
  %v3935 = vrot.slane %v3607, 1
  %v3936 = vsel %vm3781, %v3935, %v3934
  %v3937 = vrot.slane %v3610, 7
  %v3938 = vsel %vm250, %v3937, %v3608
  %v3939 = vrot.slane %v3612, 6
  %v3940 = vsel %vm253, %v3939, %v3938
  %v3941 = vrot.slane %v3614, 5
  %v3942 = vsel %vm256, %v3941, %v3940
  %v3943 = vrot.slane %v3616, 4
  %v3944 = vsel %vm259, %v3943, %v3942
  %v3945 = vrot.slane %v3618, 3
  %v3946 = vsel %vm262, %v3945, %v3944
  %v3947 = vrot.slane %v3620, 2
  %v3948 = vsel %vm265, %v3947, %v3946
  %v3949 = vrot.slane %v3622, 1
  %v3950 = vsel %vm3781, %v3949, %v3948
  %v3951 = vrot.slane %v3611, 7
  %v3952 = vsel %vm250, %v3951, %v3609
  %v3953 = vrot.slane %v3613, 6
  %v3954 = vsel %vm253, %v3953, %v3952
  %v3955 = vrot.slane %v3615, 5
  %v3956 = vsel %vm256, %v3955, %v3954
  %v3957 = vrot.slane %v3617, 4
  %v3958 = vsel %vm259, %v3957, %v3956
  %v3959 = vrot.slane %v3619, 3
  %v3960 = vsel %vm262, %v3959, %v3958
  %v3961 = vrot.slane %v3621, 2
  %v3962 = vsel %vm265, %v3961, %v3960
  %v3963 = vrot.slane %v3623, 1
  %v3964 = vsel %vm3781, %v3963, %v3962
  %v3965 = vrot.slane %v3626, 7
  %v3966 = vsel %vm250, %v3965, %v3624
  %v3967 = vrot.slane %v3628, 6
  %v3968 = vsel %vm253, %v3967, %v3966
  %v3969 = vrot.slane %v3630, 5
  %v3970 = vsel %vm256, %v3969, %v3968
  %v3971 = vrot.slane %v3632, 4
  %v3972 = vsel %vm259, %v3971, %v3970
  %v3973 = vrot.slane %v3634, 3
  %v3974 = vsel %vm262, %v3973, %v3972
  %v3975 = vrot.slane %v3636, 2
  %v3976 = vsel %vm265, %v3975, %v3974
  %v3977 = vrot.slane %v3638, 1
  %v3978 = vsel %vm3781, %v3977, %v3976
  %v3979 = vrot.slane %v3627, 7
  %v3980 = vsel %vm250, %v3979, %v3625
  %v3981 = vrot.slane %v3629, 6
  %v3982 = vsel %vm253, %v3981, %v3980
  %v3983 = vrot.slane %v3631, 5
  %v3984 = vsel %vm256, %v3983, %v3982
  %v3985 = vrot.slane %v3633, 4
  %v3986 = vsel %vm259, %v3985, %v3984
  %v3987 = vrot.slane %v3635, 3
  %v3988 = vsel %vm262, %v3987, %v3986
  %v3989 = vrot.slane %v3637, 2
  %v3990 = vsel %vm265, %v3989, %v3988
  %v3991 = vrot.slane %v3639, 1
  %v3992 = vsel %vm3781, %v3991, %v3990
  %4009 = vst [vmem:[%s7] sm:$0xff] %v3782
  %4010 = vst [vmem:[%s7 + $0x8] sm:$0xff] %v3796
  %4011 = vst [vmem:[%s7 + $0x10] sm:$0xff] %v3810
  %4012 = vst [vmem:[%s7 + $0x18] sm:$0xff] %v3824
  %4013 = vst [vmem:[%s7 + $0x20] sm:$0xff] %v3838
  %4014 = vst [vmem:[%s7 + $0x28] sm:$0xff] %v3852
  %4015 = vst [vmem:[%s7 + $0x30] sm:$0xff] %v3866
  %4016 = vst [vmem:[%s7 + $0x38] sm:$0xff] %v3880
  %4017 = vst [vmem:[%s7 + $0x40] sm:$0xff] %v3894
  %4018 = vst [vmem:[%s7 + $0x48] sm:$0xff] %v3908
  %4019 = vst [vmem:[%s7 + $0x50] sm:$0xff] %v3922
  %4020 = vst [vmem:[%s7 + $0x58] sm:$0xff] %v3936
  %4021 = vst [vmem:[%s7 + $0x60] sm:$0xff] %v3950
  %4022 = vst [vmem:[%s7 + $0x68] sm:$0xff] %v3964
  %4023 = vst [vmem:[%s7 + $0x70] sm:$0xff] %v3978
  %4024 = vst [vmem:[%s7 + $0x78] sm:$0xff] %v3992
  // Predicated region
  $region37: #{selective_scan_pallas.1} parent=0 // pred_check
    _
  $region38: #{selective_scan_pallas.1} parent=0 // pred_check_branch
    %4026 = sbr.rel (0) target = $region40
  $region39: #{selective_scan_pallas.1} parent=0 // pred_region
    _
  $region40: #{selective_scan_pallas.1} parent=0 // pred_fallthru
    _
  // Predicated region
  $region41: #{selective_scan_pallas.1} parent=0 // pred_check
    _
  $region42: #{selective_scan_pallas.1} parent=0 // pred_check_branch
    %4028 = sbr.rel (0) target = $region44
  $region43: #{selective_scan_pallas.1} parent=0 // pred_region
    _
  $region44: #{selective_scan_pallas.1} parent=0 // pred_fallthru
    _

</llo_original>
